<compile_context>
chip_gen: v7x
topology: tpu7x:2x2x1
jax: 0.10.0
libtpu: 0.0.40
codegen_flags: <defaults>
</compile_context>

<pallas_src>
import jax
import jax.numpy as jnp
from jax import lax
from jax.experimental import pallas as pl
from jax.experimental.pallas import tpu as pltpu

# ----------------------------- model dims (small synthetic config) ----------
VOCAB = 100
B = 2          # batch
S = 8          # sequence length
EMB = 32       # EMBEDDING_DIM  (BERT hidden size)
FFN = 128      # BERT feed-forward dim
HID = 32       # HIDDEN_SIZE    (LSTM hidden per direction)
TAGS = 8       # TARGET_SIZE    (number of CRF tags)


def _layer_norm(x, g, b, eps=1e-12):
    mu = jnp.mean(x, axis=-1, keepdims=True)
    var = jnp.mean((x - mu) ** 2, axis=-1, keepdims=True)
    return (x - mu) * lax.rsqrt(var + eps) * g + b


# ----------------------------- fused forward kernel --------------------------
def fused_kernel(mask_ref,                       # SMEM (B, S) int32 (scalar prefetch)
                 x_ref, bias_ref,                # (1,S,EMB), (1,1,S)
                 ln_e_g, ln_e_b,
                 w_qkv, b_qkv, wo, bo,
                 ln1_g, ln1_b, w1, b1, w2, b2, ln2_g, ln2_b,
                 wi_x, wh_h, b_g,                # fused BiLSTM weights
                 wl_f, wl_b, bl,                 # linear (per-direction halves)
                 trans_ref, start_ref, end_ref,  # CRF
                 out_ref,                        # (1,1,S) int32
                 lstm_buf):                      # VMEM (2, S, HID) f32 scratch
    b = pl.program_id(0)

    # ------------------- BERT encoder (1 layer / 1 head approximation) -------
    x = _layer_norm(x_ref[0], ln_e_g[...], ln_e_b[...])                  # (S, EMB)
    qkv = jnp.dot(x, w_qkv[...], preferred_element_type=jnp.float32) + b_qkv[...]
    q = qkv[:, 0:EMB]
    k = qkv[:, EMB:2 * EMB]
    v = qkv[:, 2 * EMB:3 * EMB]
    scores = jnp.einsum('sd,td->st', q, k,
                        preferred_element_type=jnp.float32) * (EMB ** -0.5)
    scores = scores + bias_ref[0]                                        # (S,S)+(1,S)
    m = jnp.max(scores, axis=-1, keepdims=True)
    e = jnp.exp(scores - m)
    attn = e / jnp.sum(e, axis=-1, keepdims=True)
    ctx = jnp.dot(attn, v, preferred_element_type=jnp.float32)
    attn_out = jnp.dot(ctx, wo[...], preferred_element_type=jnp.float32) + bo[...]
    h1 = _layer_norm(x + attn_out, ln1_g[...], ln1_b[...])
    ff = jax.nn.gelu(jnp.dot(h1, w1[...], preferred_element_type=jnp.float32) + b1[...])
    ff = jnp.dot(ff, w2[...], preferred_element_type=jnp.float32) + b2[...]
    seq = _layer_norm(h1 + ff, ln2_g[...], ln2_b[...])                   # (S, EMB)

    # ------------------- fused bidirectional LSTM ----------------------------
    # Input projection for every timestep of BOTH directions in one 256-wide
    # MXU matmul (hoisted off the serial recurrence).
    ix_all = jnp.dot(seq, wi_x[...], preferred_element_type=jnp.float32) + b_g[...]  # (S, 8H)
    wh = wh_h[...]                                                       # (2H, 8H) block-structured
    lane8h = lax.broadcasted_iota(jnp.int32, (1, 8 * HID), 1)
    fwd_cols = (lane8h & HID) == 0                    # forward-direction gate lanes (blocks 0,2,4,6)

    G = 2 * HID
    h_cat = jnp.zeros((1, G), jnp.float32)            # [h_fwd | h_bwd]
    c_cat = jnp.zeros((1, G), jnp.float32)
    for t in range(S):                                # fully unrolled (S = 8)
        # forward direction reads position t, backward reads position S-1-t
        ix_t = jnp.where(fwd_cols, ix_all[t:t + 1, :], ix_all[S - 1 - t:S - t, :])
        gates = ix_t + jnp.dot(h_cat, wh, preferred_element_type=jnp.float32)   # (1, 8H)
        ig = jax.nn.sigmoid(gates[:, 0:G])
        fg = jax.nn.sigmoid(gates[:, G:2 * G])
        gg = jnp.tanh(gates[:, 2 * G:3 * G])
        og = jax.nn.sigmoid(gates[:, 3 * G:4 * G])
        c_cat = fg * c_cat + ig * gg
        h_cat = og * jnp.tanh(c_cat)
        # lane-aligned full-width stores into the per-direction planes
        lstm_buf[0, pl.ds(t, 1), :] = h_cat[:, 0:HID]          # forward  hidden @ pos t
        lstm_buf[1, pl.ds(S - 1 - t, 1), :] = h_cat[:, HID:G]  # backward hidden @ pos S-1-t

    # ------------------- Linear -> emissions ---------------------------------
    emis = (jnp.dot(lstm_buf[0], wl_f[...], preferred_element_type=jnp.float32)
            + jnp.dot(lstm_buf[1], wl_b[...], preferred_element_type=jnp.float32)
            + bl[...])                                                    # (S, TAGS)

    # ------------------- CRF Viterbi decode ----------------------------------
    trans = trans_ref[...]                                    # (TAGS, TAGS) [prev, cur]
    rows_i = lax.broadcasted_iota(jnp.int32, (TAGS, TAGS), 0)
    cols_i = lax.broadcasted_iota(jnp.int32, (TAGS, TAGS), 1)
    eye = rows_i == cols_i
    lane_t = lax.broadcasted_iota(jnp.int32, (1, TAGS), 1)
    lane_s = lax.broadcasted_iota(jnp.int32, (1, S), 1)

    score = start_ref[...] + emis[0:1, :]                     # (1, TAGS)
    hist = []                                                 # hist[t-1]: best prev tag at step t
    for t in range(1, S):                                     # fully unrolled
        # row -> column flip of the running score (diag mask + lane reduce)
        score_col = jnp.sum(jnp.where(eye, jnp.broadcast_to(score, (TAGS, TAGS)), 0.0),
                            axis=1, keepdims=True)            # (TAGS, 1)
        m_mat = score_col + trans                             # [p, c] = score[p] + trans[p, c]
        best = jnp.max(m_mat, axis=0, keepdims=True)          # (1, TAGS)
        arg = jnp.min(jnp.where(m_mat >= best, rows_i, TAGS),
                      axis=0, keepdims=True)                  # (1, TAGS) int32, first argmax
        hist.append(arg)
        keep = mask_ref[b, t] > 0
        score = jnp.where(keep, best + emis[t:t + 1, :], score)
    score = score + end_ref[...]

    length = mask_ref[b, 0]
    for t in range(1, S):
        length = length + mask_ref[b, t]
    seq_end = length - 1                                      # assumes mask[b,0] == 1 (torchcrf req.)

    maxv = jnp.max(score)
    best_last = jnp.min(jnp.where(score >= maxv, lane_t, TAGS))   # scalar int32 (first argmax)
    result = jnp.where(lane_s == seq_end, best_last, 0)           # (1, S) int32, 0-padded
    cur = best_last
    for t in range(S - 2, -1, -1):                            # fully unrolled, static backtrack
        active = t < seq_end
        prev_tag = jnp.sum(jnp.where(lane_t == cur, hist[t], 0))  # hist[t] = argmaxes of step t+1
        cur = jnp.where(active, prev_tag, cur)
        result = jnp.where(jnp.logical_and(lane_s == t, active), cur, result)
    out_ref[0] = result


def fused_forward(params, x_emb, attn_bias, mask_i32):
    weight_names = ['ln_e_g', 'ln_e_b',
                    'w_qkv', 'b_qkv', 'wo', 'bo',
                    'ln1_g', 'ln1_b', 'w1', 'b1', 'w2', 'b2', 'ln2_g', 'ln2_b',
                    'wi_x', 'wh_h', 'b_g',
                    'wl_f', 'wl_b', 'bl',
                    'trans', 'start', 'end']
    weights = [params[n] for n in weight_names]

    def const_spec(a):
        nd = a.ndim
        return pl.BlockSpec(a.shape, lambda b_, m_, _nd=nd: (0,) * _nd)

    grid_spec = pltpu.PrefetchScalarGridSpec(
        num_scalar_prefetch=1,                      # mask lives in SMEM
        grid=(B,),
        in_specs=[pl.BlockSpec((1, S, EMB), lambda b_, m_: (b_, 0, 0)),
                  pl.BlockSpec((1, 1, S), lambda b_, m_: (b_, 0, 0))]
                 + [const_spec(a) for a in weights],
        out_specs=pl.BlockSpec((1, 1, S), lambda b_, m_: (b_, 0, 0)),
        scratch_shapes=[pltpu.VMEM((2, S, HID), jnp.float32)],
    )
    out = pl.pallas_call(
        fused_kernel,
        out_shape=jax.ShapeDtypeStruct((B, 1, S), jnp.int32),
        grid_spec=grid_spec,
        compiler_params=pltpu.CompilerParams(dimension_semantics=("parallel",)),
    )(mask_i32, x_emb, attn_bias, *weights)
    return out[:, 0, :]


# ----------------------------- parameters -----------------------------------
def init_params(key):
    keys = iter(jax.random.split(key, 32))

    def nrm(shape, scale=0.1):
        return jax.random.normal(next(keys), shape, jnp.float32) * scale

    p = {}
    # BERT embeddings
    p['word_emb'] = nrm((VOCAB, EMB))
    p['pos_emb'] = nrm((S, EMB))
    p['ln_e_g'] = jnp.ones((1, EMB), jnp.float32)
    p['ln_e_b'] = jnp.zeros((1, EMB), jnp.float32)
    # BERT encoder layer (single head / single layer approximation); fused QKV
    wq, wk, wv, wo = (nrm((EMB, EMB)) for _ in range(4))
    p['w_qkv'] = jnp.concatenate([wq, wk, wv], axis=1)        # (EMB, 3*EMB)
    p['b_qkv'] = jnp.zeros((1, 3 * EMB), jnp.float32)
    p['wo'] = wo
    p['bo'] = jnp.zeros((1, EMB), jnp.float32)
    p['ln1_g'] = jnp.ones((1, EMB), jnp.float32)
    p['ln1_b'] = jnp.zeros((1, EMB), jnp.float32)
    p['w1'] = nrm((EMB, FFN))
    p['b1'] = jnp.zeros((1, FFN), jnp.float32)
    p['w2'] = nrm((FFN, EMB))
    p['b2'] = jnp.zeros((1, EMB), jnp.float32)
    p['ln2_g'] = jnp.ones((1, EMB), jnp.float32)
    p['ln2_b'] = jnp.zeros((1, EMB), jnp.float32)

    # BiLSTM (PyTorch layout: weight_ih (4H, D), weight_hh (4H, H); gate order i,f,g,o)
    per_dir = {}
    for d in ('f', 'b'):
        w_ih = nrm((4 * HID, EMB))
        w_hh = nrm((4 * HID, HID))
        b_ih = nrm((4 * HID,))
        b_hh = nrm((4 * HID,))
        per_dir[d] = (w_ih.T, w_hh.T, b_ih + b_hh)            # (EMB,4H), (H,4H), (4H,)
    wi_f, wh_f, bias_f = per_dir['f']
    wi_b, wh_b, bias_b = per_dir['b']
    # Fused gate-column order: [i_f|i_b|f_f|f_b|g_f|g_b|o_f|o_b], each HID wide.
    wi_cols, b_cols = [], []
    wh_cat = jnp.zeros((2 * HID, 8 * HID), jnp.float32)       # block-structured (h_f->fwd cols, h_b->bwd cols)
    for g in range(4):
        sl = slice(g * HID, (g + 1) * HID)
        wi_cols += [wi_f[:, sl], wi_b[:, sl]]
        b_cols += [bias_f[sl], bias_b[sl]]
        wh_cat = wh_cat.at[0:HID, (2 * g) * HID:(2 * g + 1) * HID].set(wh_f[:, sl])
        wh_cat = wh_cat.at[HID:, (2 * g + 1) * HID:(2 * g + 2) * HID].set(wh_b[:, sl])
    p['wi_x'] = jnp.concatenate(wi_cols, axis=1)              # (EMB, 8H)
    p['wh_h'] = wh_cat                                        # (2H, 8H)
    p['b_g'] = jnp.concatenate(b_cols)[None, :]               # (1, 8H)

    # Linear(2*HID -> TAGS), torch weight shape (TAGS, 2*HID)
    wl = nrm((TAGS, 2 * HID))
    p['wl_f'] = wl[:, :HID].T                                 # (HID, TAGS)
    p['wl_b'] = wl[:, HID:].T                                 # (HID, TAGS)
    p['bl'] = nrm((TAGS,))[None, :]
    # CRF (stored kernel-ready; no per-call transposes / reshapes)
    p['start'] = nrm((TAGS,))[None, :]
    p['end'] = nrm((TAGS,))[None, :]
    p['trans'] = nrm((TAGS, TAGS))
    return p


# ----------------------------- forward ---------------------------------------
def model_forward(params, input_ids, mask):
    # BERT embedding gather stays in plain JAX (table lookup glue).
    x_emb = params['word_emb'][input_ids] + params['pos_emb'][None, :, :]   # (B,S,EMB)
    attn_bias = ((1.0 - mask.astype(jnp.float32)) * -1e9)[:, None, :]       # (B,1,S)
    return fused_forward(params, x_emb, attn_bias, mask.astype(jnp.int32))  # (B,S) int32


# ----------------------------- main ------------------------------------------
if __name__ == "__main__":
    key = jax.random.PRNGKey(0)
    k_params, k_ids = jax.random.split(key)
    params = init_params(k_params)

    input_ids = jax.random.randint(k_ids, (B, S), 0, VOCAB, dtype=jnp.int32)
    # batch 0: full length 8; batch 1: length 6 (last 2 positions masked)
    mask = jnp.array([[1] * S, [1] * (S - 2) + [0] * 2], dtype=jnp.int32)

    tags = model_forward(params, input_ids, mask)
    tags = jax.block_until_ready(tags)

    assert tags.shape == (B, S) and tags.dtype == jnp.int32
    assert bool(jnp.all((tags >= 0) & (tags < TAGS)))
    print("KERNEL_OK")
</pallas_src>

<mosaic_0001>
module attributes {stable_mosaic.version = 11 : i64} {
  func.func @fused_kernel(%arg0: i32, %arg1: memref<2x8xi32, #tpu.memory_space<smem>>, %arg2: memref<1x8x32xf32, #tpu.memory_space<vmem>>, %arg3: memref<1x1x8xf32, #tpu.memory_space<vmem>>, %arg4: memref<1x32xf32, #tpu.memory_space<vmem>>, %arg5: memref<1x32xf32, #tpu.memory_space<vmem>>, %arg6: memref<32x96xf32, #tpu.memory_space<vmem>>, %arg7: memref<1x96xf32, #tpu.memory_space<vmem>>, %arg8: memref<32x32xf32, #tpu.memory_space<vmem>>, %arg9: memref<1x32xf32, #tpu.memory_space<vmem>>, %arg10: memref<1x32xf32, #tpu.memory_space<vmem>>, %arg11: memref<1x32xf32, #tpu.memory_space<vmem>>, %arg12: memref<32x128xf32, #tpu.memory_space<vmem>>, %arg13: memref<1x128xf32, #tpu.memory_space<vmem>>, %arg14: memref<128x32xf32, #tpu.memory_space<vmem>>, %arg15: memref<1x32xf32, #tpu.memory_space<vmem>>, %arg16: memref<1x32xf32, #tpu.memory_space<vmem>>, %arg17: memref<1x32xf32, #tpu.memory_space<vmem>>, %arg18: memref<32x256xf32, #tpu.memory_space<vmem>>, %arg19: memref<64x256xf32, #tpu.memory_space<vmem>>, %arg20: memref<1x256xf32, #tpu.memory_space<vmem>>, %arg21: memref<32x8xf32, #tpu.memory_space<vmem>>, %arg22: memref<32x8xf32, #tpu.memory_space<vmem>>, %arg23: memref<1x8xf32, #tpu.memory_space<vmem>>, %arg24: memref<8x8xf32, #tpu.memory_space<vmem>>, %arg25: memref<1x8xf32, #tpu.memory_space<vmem>>, %arg26: memref<1x8xf32, #tpu.memory_space<vmem>>, %arg27: memref<1x1x8xi32, #tpu.memory_space<vmem>>, %arg28: memref<2x8x32xf32, #tpu.memory_space<vmem>>) attributes {dimension_semantics = [#tpu.dimension_semantics<parallel>], iteration_bounds = array<i64: 2>, scalar_prefetch = 1 : i64, scratch_operands = 1 : i64, tpu.core_type = #tpu.core_type<tc>, window_params = [{transform_indices = @transform_0, window_bounds = array<i64: 1, 8, 32>}, {transform_indices = @transform_1, window_bounds = array<i64: 1, 1, 8>}, {pipeline_mode = #tpu.pipeline_mode<synchronous>, transform_indices = @transform_2, window_bounds = array<i64: 1, 32>}, {pipeline_mode = #tpu.pipeline_mode<synchronous>, transform_indices = @transform_3, window_bounds = array<i64: 1, 32>}, {pipeline_mode = #tpu.pipeline_mode<synchronous>, transform_indices = @transform_4, window_bounds = array<i64: 32, 96>}, {pipeline_mode = #tpu.pipeline_mode<synchronous>, transform_indices = @transform_5, window_bounds = array<i64: 1, 96>}, {pipeline_mode = #tpu.pipeline_mode<synchronous>, transform_indices = @transform_6, window_bounds = array<i64: 32, 32>}, {pipeline_mode = #tpu.pipeline_mode<synchronous>, transform_indices = @transform_7, window_bounds = array<i64: 1, 32>}, {pipeline_mode = #tpu.pipeline_mode<synchronous>, transform_indices = @transform_8, window_bounds = array<i64: 1, 32>}, {pipeline_mode = #tpu.pipeline_mode<synchronous>, transform_indices = @transform_9, window_bounds = array<i64: 1, 32>}, {pipeline_mode = #tpu.pipeline_mode<synchronous>, transform_indices = @transform_10, window_bounds = array<i64: 32, 128>}, {pipeline_mode = #tpu.pipeline_mode<synchronous>, transform_indices = @transform_11, window_bounds = array<i64: 1, 128>}, {pipeline_mode = #tpu.pipeline_mode<synchronous>, transform_indices = @transform_12, window_bounds = array<i64: 128, 32>}, {pipeline_mode = #tpu.pipeline_mode<synchronous>, transform_indices = @transform_13, window_bounds = array<i64: 1, 32>}, {pipeline_mode = #tpu.pipeline_mode<synchronous>, transform_indices = @transform_14, window_bounds = array<i64: 1, 32>}, {pipeline_mode = #tpu.pipeline_mode<synchronous>, transform_indices = @transform_15, window_bounds = array<i64: 1, 32>}, {pipeline_mode = #tpu.pipeline_mode<synchronous>, transform_indices = @transform_16, window_bounds = array<i64: 32, 256>}, {pipeline_mode = #tpu.pipeline_mode<synchronous>, transform_indices = @transform_17, window_bounds = array<i64: 64, 256>}, {pipeline_mode = #tpu.pipeline_mode<synchronous>, transform_indices = @transform_18, window_bounds = array<i64: 1, 256>}, {pipeline_mode = #tpu.pipeline_mode<synchronous>, transform_indices = @transform_19, window_bounds = array<i64: 32, 8>}, {pipeline_mode = #tpu.pipeline_mode<synchronous>, transform_indices = @transform_20, window_bounds = array<i64: 32, 8>}, {pipeline_mode = #tpu.pipeline_mode<synchronous>, transform_indices = @transform_21, window_bounds = array<i64: 1, 8>}, {pipeline_mode = #tpu.pipeline_mode<synchronous>, transform_indices = @transform_22, window_bounds = array<i64: 8, 8>}, {pipeline_mode = #tpu.pipeline_mode<synchronous>, transform_indices = @transform_23, window_bounds = array<i64: 1, 8>}, {pipeline_mode = #tpu.pipeline_mode<synchronous>, transform_indices = @transform_24, window_bounds = array<i64: 1, 8>}, {transform_indices = @transform_25, window_bounds = array<i64: 1, 1, 8>}]} {
    %c0 = arith.constant 0 : index
    %c0_0 = arith.constant 0 : index
    %c0_1 = arith.constant 0 : index
    %0 = vector.load %arg2[%c0, %c0_0, %c0_1] : memref<1x8x32xf32, #tpu.memory_space<vmem>>, vector<1x8x32xf32>
    %1 = vector.shape_cast %0 : vector<1x8x32xf32> to vector<8x32xf32>
    %c0_2 = arith.constant 0 : index
    %c0_3 = arith.constant 0 : index
    %2 = vector.load %arg4[%c0_2, %c0_3] : memref<1x32xf32, #tpu.memory_space<vmem>>, vector<1x32xf32>
    %c0_4 = arith.constant 0 : index
    %c0_5 = arith.constant 0 : index
    %3 = vector.load %arg5[%c0_4, %c0_5] : memref<1x32xf32, #tpu.memory_space<vmem>>, vector<1x32xf32>
    %cst = arith.constant dense<0.000000e+00> : vector<8xf32>
    %4 = vector.multi_reduction <add>, %1, %cst [1] : vector<8x32xf32> to vector<8xf32>
    %5 = vector.shape_cast %4 : vector<8xf32> to vector<8x1xf32>
    %cst_6 = arith.constant 3.200000e+01 : f32
    %6 = vector.broadcast %cst_6 : f32 to vector<8x1xf32>
    %7 = arith.divf %5, %6 : vector<8x1xf32>
    %8 = vector.broadcast %7 : vector<8x1xf32> to vector<8x32xf32>
    %9 = arith.subf %1, %8 : vector<8x32xf32>
    %10 = arith.mulf %9, %9 : vector<8x32xf32>
    %cst_7 = arith.constant dense<0.000000e+00> : vector<8xf32>
    %11 = vector.multi_reduction <add>, %10, %cst_7 [1] : vector<8x32xf32> to vector<8xf32>
    %12 = vector.shape_cast %11 : vector<8xf32> to vector<8x1xf32>
    %cst_8 = arith.constant 3.200000e+01 : f32
    %13 = vector.broadcast %cst_8 : f32 to vector<8x1xf32>
    %14 = arith.divf %12, %13 : vector<8x1xf32>
    %15 = vector.broadcast %7 : vector<8x1xf32> to vector<8x32xf32>
    %16 = arith.subf %1, %15 : vector<8x32xf32>
    %cst_9 = arith.constant 9.99999996E-13 : f32
    %17 = vector.broadcast %cst_9 : f32 to vector<8x1xf32>
    %18 = arith.addf %14, %17 : vector<8x1xf32>
    %19 = math.rsqrt %18 : vector<8x1xf32>
    %20 = vector.broadcast %19 : vector<8x1xf32> to vector<8x32xf32>
    %21 = arith.mulf %16, %20 : vector<8x32xf32>
    %22 = vector.broadcast %2 : vector<1x32xf32> to vector<8x32xf32>
    %23 = arith.mulf %21, %22 : vector<8x32xf32>
    %24 = vector.broadcast %3 : vector<1x32xf32> to vector<8x32xf32>
    %25 = arith.addf %23, %24 : vector<8x32xf32>
    %c0_10 = arith.constant 0 : index
    %c0_11 = arith.constant 0 : index
    %26 = vector.load %arg6[%c0_10, %c0_11] : memref<32x96xf32, #tpu.memory_space<vmem>>, vector<32x96xf32>
    %cst_12 = arith.constant dense<0.000000e+00> : vector<8x96xf32>
    %27 = tpu.matmul %25, %26, %cst_12 {dimension_numbers = #tpu.dot_dimension_numbers<[1], [0], [0], [1], [0, 0, 1, 1], [], []>} : vector<8x32xf32>, vector<32x96xf32>, vector<8x96xf32> -> vector<8x96xf32>
    %c0_13 = arith.constant 0 : index
    %c0_14 = arith.constant 0 : index
    %28 = vector.load %arg7[%c0_13, %c0_14] : memref<1x96xf32, #tpu.memory_space<vmem>>, vector<1x96xf32>
    %29 = vector.broadcast %28 : vector<1x96xf32> to vector<8x96xf32>
    %30 = arith.addf %27, %29 : vector<8x96xf32>
    %31 = vector.extract_strided_slice %30 {offsets = [0, 0], sizes = [8, 32], strides = [1, 1]} : vector<8x96xf32> to vector<8x32xf32>
    %32 = vector.extract_strided_slice %30 {offsets = [0, 32], sizes = [8, 32], strides = [1, 1]} : vector<8x96xf32> to vector<8x32xf32>
    %33 = vector.extract_strided_slice %30 {offsets = [0, 64], sizes = [8, 32], strides = [1, 1]} : vector<8x96xf32> to vector<8x32xf32>
    "tpu.trace_start"() <{level = 10 : i32, message = "sd,td->st"}> : () -> ()
    %cst_15 = arith.constant dense<0.000000e+00> : vector<8x8xf32>
    %34 = tpu.matmul %31, %32, %cst_15 {dimension_numbers = #tpu.dot_dimension_numbers<[1], [1], [0], [0], [0, 0, 1, 0], [], []>} : vector<8x32xf32>, vector<8x32xf32>, vector<8x8xf32> -> vector<8x8xf32>
    "tpu.trace_stop"() : () -> ()
    %cst_16 = arith.constant 0.176776692 : f32
    %35 = vector.broadcast %cst_16 : f32 to vector<8x8xf32>
    %36 = arith.mulf %34, %35 : vector<8x8xf32>
    %c0_17 = arith.constant 0 : index
    %c0_18 = arith.constant 0 : index
    %c0_19 = arith.constant 0 : index
    %37 = vector.load %arg3[%c0_17, %c0_18, %c0_19] : memref<1x1x8xf32, #tpu.memory_space<vmem>>, vector<1x1x8xf32>
    %38 = vector.shape_cast %37 : vector<1x1x8xf32> to vector<1x8xf32>
    %39 = vector.broadcast %38 : vector<1x8xf32> to vector<8x8xf32>
    %40 = arith.addf %36, %39 : vector<8x8xf32>
    %cst_20 = arith.constant dense<0xFF800000> : vector<8xf32>
    %41 = vector.multi_reduction <maximumf>, %40, %cst_20 [1] : vector<8x8xf32> to vector<8xf32>
    %42 = vector.shape_cast %41 : vector<8xf32> to vector<8x1xf32>
    %43 = vector.broadcast %42 : vector<8x1xf32> to vector<8x8xf32>
    %44 = arith.subf %40, %43 : vector<8x8xf32>
    %45 = math.exp %44 : vector<8x8xf32>
    %cst_21 = arith.constant dense<0.000000e+00> : vector<8xf32>
    %46 = vector.multi_reduction <add>, %45, %cst_21 [1] : vector<8x8xf32> to vector<8xf32>
    %47 = vector.shape_cast %46 : vector<8xf32> to vector<8x1xf32>
    %48 = vector.broadcast %47 : vector<8x1xf32> to vector<8x8xf32>
    %49 = arith.divf %45, %48 : vector<8x8xf32>
    %cst_22 = arith.constant dense<0.000000e+00> : vector<8x32xf32>
    %50 = tpu.matmul %49, %33, %cst_22 {dimension_numbers = #tpu.dot_dimension_numbers<[1], [0], [0], [1], [0, 0, 1, 1], [], []>} : vector<8x8xf32>, vector<8x32xf32>, vector<8x32xf32> -> vector<8x32xf32>
    %c0_23 = arith.constant 0 : index
    %c0_24 = arith.constant 0 : index
    %51 = vector.load %arg8[%c0_23, %c0_24] : memref<32x32xf32, #tpu.memory_space<vmem>>, vector<32x32xf32>
    %cst_25 = arith.constant dense<0.000000e+00> : vector<8x32xf32>
    %52 = tpu.matmul %50, %51, %cst_25 {dimension_numbers = #tpu.dot_dimension_numbers<[1], [0], [0], [1], [0, 0, 1, 1], [], []>} : vector<8x32xf32>, vector<32x32xf32>, vector<8x32xf32> -> vector<8x32xf32>
    %c0_26 = arith.constant 0 : index
    %c0_27 = arith.constant 0 : index
    %53 = vector.load %arg9[%c0_26, %c0_27] : memref<1x32xf32, #tpu.memory_space<vmem>>, vector<1x32xf32>
    %54 = vector.broadcast %53 : vector<1x32xf32> to vector<8x32xf32>
    %55 = arith.addf %52, %54 : vector<8x32xf32>
    %56 = arith.addf %25, %55 : vector<8x32xf32>
    %c0_28 = arith.constant 0 : index
    %c0_29 = arith.constant 0 : index
    %57 = vector.load %arg10[%c0_28, %c0_29] : memref<1x32xf32, #tpu.memory_space<vmem>>, vector<1x32xf32>
    %c0_30 = arith.constant 0 : index
    %c0_31 = arith.constant 0 : index
    %58 = vector.load %arg11[%c0_30, %c0_31] : memref<1x32xf32, #tpu.memory_space<vmem>>, vector<1x32xf32>
    %cst_32 = arith.constant dense<0.000000e+00> : vector<8xf32>
    %59 = vector.multi_reduction <add>, %56, %cst_32 [1] : vector<8x32xf32> to vector<8xf32>
    %60 = vector.shape_cast %59 : vector<8xf32> to vector<8x1xf32>
    %cst_33 = arith.constant 3.200000e+01 : f32
    %61 = vector.broadcast %cst_33 : f32 to vector<8x1xf32>
    %62 = arith.divf %60, %61 : vector<8x1xf32>
    %63 = vector.broadcast %62 : vector<8x1xf32> to vector<8x32xf32>
    %64 = arith.subf %56, %63 : vector<8x32xf32>
    %65 = arith.mulf %64, %64 : vector<8x32xf32>
    %cst_34 = arith.constant dense<0.000000e+00> : vector<8xf32>
    %66 = vector.multi_reduction <add>, %65, %cst_34 [1] : vector<8x32xf32> to vector<8xf32>
    %67 = vector.shape_cast %66 : vector<8xf32> to vector<8x1xf32>
    %cst_35 = arith.constant 3.200000e+01 : f32
    %68 = vector.broadcast %cst_35 : f32 to vector<8x1xf32>
    %69 = arith.divf %67, %68 : vector<8x1xf32>
    %70 = vector.broadcast %62 : vector<8x1xf32> to vector<8x32xf32>
    %71 = arith.subf %56, %70 : vector<8x32xf32>
    %cst_36 = arith.constant 9.99999996E-13 : f32
    %72 = vector.broadcast %cst_36 : f32 to vector<8x1xf32>
    %73 = arith.addf %69, %72 : vector<8x1xf32>
    %74 = math.rsqrt %73 : vector<8x1xf32>
    %75 = vector.broadcast %74 : vector<8x1xf32> to vector<8x32xf32>
    %76 = arith.mulf %71, %75 : vector<8x32xf32>
    %77 = vector.broadcast %57 : vector<1x32xf32> to vector<8x32xf32>
    %78 = arith.mulf %76, %77 : vector<8x32xf32>
    %79 = vector.broadcast %58 : vector<1x32xf32> to vector<8x32xf32>
    %80 = arith.addf %78, %79 : vector<8x32xf32>
    %c0_37 = arith.constant 0 : index
    %c0_38 = arith.constant 0 : index
    %81 = vector.load %arg12[%c0_37, %c0_38] : memref<32x128xf32, #tpu.memory_space<vmem>>, vector<32x128xf32>
    %cst_39 = arith.constant dense<0.000000e+00> : vector<8x128xf32>
    %82 = tpu.matmul %80, %81, %cst_39 {dimension_numbers = #tpu.dot_dimension_numbers<[1], [0], [0], [1], [0, 0, 1, 1], [], []>} : vector<8x32xf32>, vector<32x128xf32>, vector<8x128xf32> -> vector<8x128xf32>
    %c0_40 = arith.constant 0 : index
    %c0_41 = arith.constant 0 : index
    %83 = vector.load %arg13[%c0_40, %c0_41] : memref<1x128xf32, #tpu.memory_space<vmem>>, vector<1x128xf32>
    %84 = vector.broadcast %83 : vector<1x128xf32> to vector<8x128xf32>
    %85 = arith.addf %82, %84 : vector<8x128xf32>
    %86 = arith.mulf %85, %85 : vector<8x128xf32>
    %87 = arith.mulf %85, %86 : vector<8x128xf32>
    %cst_42 = arith.constant 4.471500e-02 : f32
    %88 = vector.broadcast %cst_42 : f32 to vector<8x128xf32>
    %89 = arith.mulf %88, %87 : vector<8x128xf32>
    %90 = arith.addf %85, %89 : vector<8x128xf32>
    %cst_43 = arith.constant 0.797884583 : f32
    %91 = vector.broadcast %cst_43 : f32 to vector<8x128xf32>
    %92 = arith.mulf %91, %90 : vector<8x128xf32>
    %93 = math.tanh %92 : vector<8x128xf32>
    %cst_44 = arith.constant 1.000000e+00 : f32
    %94 = vector.broadcast %cst_44 : f32 to vector<8x128xf32>
    %95 = arith.addf %94, %93 : vector<8x128xf32>
    %cst_45 = arith.constant 5.000000e-01 : f32
    %96 = vector.broadcast %cst_45 : f32 to vector<8x128xf32>
    %97 = arith.mulf %96, %95 : vector<8x128xf32>
    %98 = arith.mulf %85, %97 : vector<8x128xf32>
    %c0_46 = arith.constant 0 : index
    %c0_47 = arith.constant 0 : index
    %99 = vector.load %arg14[%c0_46, %c0_47] : memref<128x32xf32, #tpu.memory_space<vmem>>, vector<128x32xf32>
    %cst_48 = arith.constant dense<0.000000e+00> : vector<8x32xf32>
    %100 = tpu.matmul %98, %99, %cst_48 {dimension_numbers = #tpu.dot_dimension_numbers<[1], [0], [0], [1], [0, 0, 1, 1], [], []>} : vector<8x128xf32>, vector<128x32xf32>, vector<8x32xf32> -> vector<8x32xf32>
    %c0_49 = arith.constant 0 : index
    %c0_50 = arith.constant 0 : index
    %101 = vector.load %arg15[%c0_49, %c0_50] : memref<1x32xf32, #tpu.memory_space<vmem>>, vector<1x32xf32>
    %102 = vector.broadcast %101 : vector<1x32xf32> to vector<8x32xf32>
    %103 = arith.addf %100, %102 : vector<8x32xf32>
    %104 = arith.addf %80, %103 : vector<8x32xf32>
    %c0_51 = arith.constant 0 : index
    %c0_52 = arith.constant 0 : index
    %105 = vector.load %arg16[%c0_51, %c0_52] : memref<1x32xf32, #tpu.memory_space<vmem>>, vector<1x32xf32>
    %c0_53 = arith.constant 0 : index
    %c0_54 = arith.constant 0 : index
    %106 = vector.load %arg17[%c0_53, %c0_54] : memref<1x32xf32, #tpu.memory_space<vmem>>, vector<1x32xf32>
    %cst_55 = arith.constant dense<0.000000e+00> : vector<8xf32>
    %107 = vector.multi_reduction <add>, %104, %cst_55 [1] : vector<8x32xf32> to vector<8xf32>
    %108 = vector.shape_cast %107 : vector<8xf32> to vector<8x1xf32>
    %cst_56 = arith.constant 3.200000e+01 : f32
    %109 = vector.broadcast %cst_56 : f32 to vector<8x1xf32>
    %110 = arith.divf %108, %109 : vector<8x1xf32>
    %111 = vector.broadcast %110 : vector<8x1xf32> to vector<8x32xf32>
    %112 = arith.subf %104, %111 : vector<8x32xf32>
    %113 = arith.mulf %112, %112 : vector<8x32xf32>
    %cst_57 = arith.constant dense<0.000000e+00> : vector<8xf32>
    %114 = vector.multi_reduction <add>, %113, %cst_57 [1] : vector<8x32xf32> to vector<8xf32>
    %115 = vector.shape_cast %114 : vector<8xf32> to vector<8x1xf32>
    %cst_58 = arith.constant 3.200000e+01 : f32
    %116 = vector.broadcast %cst_58 : f32 to vector<8x1xf32>
    %117 = arith.divf %115, %116 : vector<8x1xf32>
    %118 = vector.broadcast %110 : vector<8x1xf32> to vector<8x32xf32>
    %119 = arith.subf %104, %118 : vector<8x32xf32>
    %cst_59 = arith.constant 9.99999996E-13 : f32
    %120 = vector.broadcast %cst_59 : f32 to vector<8x1xf32>
    %121 = arith.addf %117, %120 : vector<8x1xf32>
    %122 = math.rsqrt %121 : vector<8x1xf32>
    %123 = vector.broadcast %122 : vector<8x1xf32> to vector<8x32xf32>
    %124 = arith.mulf %119, %123 : vector<8x32xf32>
    %125 = vector.broadcast %105 : vector<1x32xf32> to vector<8x32xf32>
    %126 = arith.mulf %124, %125 : vector<8x32xf32>
    %127 = vector.broadcast %106 : vector<1x32xf32> to vector<8x32xf32>
    %128 = arith.addf %126, %127 : vector<8x32xf32>
    %c0_60 = arith.constant 0 : index
    %c0_61 = arith.constant 0 : index
    %129 = vector.load %arg18[%c0_60, %c0_61] : memref<32x256xf32, #tpu.memory_space<vmem>>, vector<32x256xf32>
    %cst_62 = arith.constant dense<0.000000e+00> : vector<8x256xf32>
    %130 = tpu.matmul %128, %129, %cst_62 {dimension_numbers = #tpu.dot_dimension_numbers<[1], [0], [0], [1], [0, 0, 1, 1], [], []>} : vector<8x32xf32>, vector<32x256xf32>, vector<8x256xf32> -> vector<8x256xf32>
    %c0_63 = arith.constant 0 : index
    %c0_64 = arith.constant 0 : index
    %131 = vector.load %arg20[%c0_63, %c0_64] : memref<1x256xf32, #tpu.memory_space<vmem>>, vector<1x256xf32>
    %132 = vector.broadcast %131 : vector<1x256xf32> to vector<8x256xf32>
    %133 = arith.addf %130, %132 : vector<8x256xf32>
    %c0_65 = arith.constant 0 : index
    %c0_66 = arith.constant 0 : index
    %134 = vector.load %arg19[%c0_65, %c0_66] : memref<64x256xf32, #tpu.memory_space<vmem>>, vector<64x256xf32>
    %135 = tpu.iota {dimensions = array<i32: 1>} : vector<1x256xi32>
    %c32_i32 = arith.constant 32 : i32
    %136 = vector.broadcast %c32_i32 : i32 to vector<1x256xi32>
    %137 = arith.andi %135, %136 : vector<1x256xi32>
    %c0_i32 = arith.constant 0 : i32
    %138 = vector.broadcast %c0_i32 : i32 to vector<1x256xi32>
    %139 = arith.cmpi eq, %137, %138 : vector<1x256xi32>
    %cst_67 = arith.constant 0.000000e+00 : f32
    %140 = vector.broadcast %cst_67 : f32 to vector<1x64xf32>
    %cst_68 = arith.constant 0.000000e+00 : f32
    %141 = vector.broadcast %cst_68 : f32 to vector<1x64xf32>
    %142 = vector.extract_strided_slice %133 {offsets = [0, 0], sizes = [1, 256], strides = [1, 1]} : vector<8x256xf32> to vector<1x256xf32>
    %143 = vector.extract_strided_slice %133 {offsets = [7, 0], sizes = [1, 256], strides = [1, 1]} : vector<8x256xf32> to vector<1x256xf32>
    %144 = arith.select %139, %142, %143 : vector<1x256xi1>, vector<1x256xf32>
    %cst_69 = arith.constant dense<0.000000e+00> : vector<1x256xf32>
    %145 = tpu.matmul %140, %134, %cst_69 {dimension_numbers = #tpu.dot_dimension_numbers<[1], [0], [0], [1], [0, 0, 1, 1], [], []>} : vector<1x64xf32>, vector<64x256xf32>, vector<1x256xf32> -> vector<1x256xf32>
    %146 = arith.addf %144, %145 : vector<1x256xf32>
    %147 = vector.extract_strided_slice %146 {offsets = [0, 0], sizes = [1, 64], strides = [1, 1]} : vector<1x256xf32> to vector<1x64xf32>
    %148 = arith.negf %147 : vector<1x64xf32>
    %149 = math.exp %148 : vector<1x64xf32>
    %cst_70 = arith.constant 1.000000e+00 : f32
    %150 = vector.broadcast %cst_70 : f32 to vector<1x64xf32>
    %151 = arith.addf %150, %149 : vector<1x64xf32>
    %152 = arith.divf %150, %151 : vector<1x64xf32>
    %153 = vector.extract_strided_slice %146 {offsets = [0, 64], sizes = [1, 64], strides = [1, 1]} : vector<1x256xf32> to vector<1x64xf32>
    %154 = arith.negf %153 : vector<1x64xf32>
    %155 = math.exp %154 : vector<1x64xf32>
    %cst_71 = arith.constant 1.000000e+00 : f32
    %156 = vector.broadcast %cst_71 : f32 to vector<1x64xf32>
    %157 = arith.addf %156, %155 : vector<1x64xf32>
    %158 = arith.divf %156, %157 : vector<1x64xf32>
    %159 = vector.extract_strided_slice %146 {offsets = [0, 128], sizes = [1, 64], strides = [1, 1]} : vector<1x256xf32> to vector<1x64xf32>
    %160 = math.tanh %159 : vector<1x64xf32>
    %161 = vector.extract_strided_slice %146 {offsets = [0, 192], sizes = [1, 64], strides = [1, 1]} : vector<1x256xf32> to vector<1x64xf32>
    %162 = arith.negf %161 : vector<1x64xf32>
    %163 = math.exp %162 : vector<1x64xf32>
    %cst_72 = arith.constant 1.000000e+00 : f32
    %164 = vector.broadcast %cst_72 : f32 to vector<1x64xf32>
    %165 = arith.addf %164, %163 : vector<1x64xf32>
    %166 = arith.divf %164, %165 : vector<1x64xf32>
    %167 = arith.mulf %158, %141 : vector<1x64xf32>
    %168 = arith.mulf %152, %160 : vector<1x64xf32>
    %169 = arith.addf %167, %168 : vector<1x64xf32>
    %170 = math.tanh %169 : vector<1x64xf32>
    %171 = arith.mulf %166, %170 : vector<1x64xf32>
    %172 = vector.extract_strided_slice %171 {offsets = [0, 0], sizes = [1, 32], strides = [1, 1]} : vector<1x64xf32> to vector<1x32xf32>
    %c0_73 = arith.constant 0 : index
    %c0_74 = arith.constant 0 : index
    %c0_75 = arith.constant 0 : index
    %173 = vector.load %arg28[%c0_73, %c0_74, %c0_75] : memref<2x8x32xf32, #tpu.memory_space<vmem>>, vector<1x1x32xf32>
    %174 = vector.shape_cast %173 : vector<1x1x32xf32> to vector<1x32xf32>
    %175 = vector.shape_cast %172 : vector<1x32xf32> to vector<1x1x32xf32>
    tpu.vector_store %arg28[%c0_73, %c0_74, %c0_75], %175 {strides = array<i32>} : memref<2x8x32xf32, #tpu.memory_space<vmem>>, vector<1x1x32xf32>,
    %176 = vector.extract_strided_slice %171 {offsets = [0, 32], sizes = [1, 32], strides = [1, 1]} : vector<1x64xf32> to vector<1x32xf32>
    %c1 = arith.constant 1 : index
    %c7 = arith.constant 7 : index
    %c0_76 = arith.constant 0 : index
    %177 = vector.load %arg28[%c1, %c7, %c0_76] : memref<2x8x32xf32, #tpu.memory_space<vmem>>, vector<1x1x32xf32>
    %178 = vector.shape_cast %177 : vector<1x1x32xf32> to vector<1x32xf32>
    %179 = vector.shape_cast %176 : vector<1x32xf32> to vector<1x1x32xf32>
    tpu.vector_store %arg28[%c1, %c7, %c0_76], %179 {strides = array<i32>} : memref<2x8x32xf32, #tpu.memory_space<vmem>>, vector<1x1x32xf32>,
    %180 = vector.extract_strided_slice %133 {offsets = [1, 0], sizes = [1, 256], strides = [1, 1]} : vector<8x256xf32> to vector<1x256xf32>
    %181 = vector.extract_strided_slice %133 {offsets = [6, 0], sizes = [1, 256], strides = [1, 1]} : vector<8x256xf32> to vector<1x256xf32>
    %182 = arith.select %139, %180, %181 : vector<1x256xi1>, vector<1x256xf32>
    %cst_77 = arith.constant dense<0.000000e+00> : vector<1x256xf32>
    %183 = tpu.matmul %171, %134, %cst_77 {dimension_numbers = #tpu.dot_dimension_numbers<[1], [0], [0], [1], [0, 0, 1, 1], [], []>} : vector<1x64xf32>, vector<64x256xf32>, vector<1x256xf32> -> vector<1x256xf32>
    %184 = arith.addf %182, %183 : vector<1x256xf32>
    %185 = vector.extract_strided_slice %184 {offsets = [0, 0], sizes = [1, 64], strides = [1, 1]} : vector<1x256xf32> to vector<1x64xf32>
    %186 = arith.negf %185 : vector<1x64xf32>
    %187 = math.exp %186 : vector<1x64xf32>
    %cst_78 = arith.constant 1.000000e+00 : f32
    %188 = vector.broadcast %cst_78 : f32 to vector<1x64xf32>
    %189 = arith.addf %188, %187 : vector<1x64xf32>
    %190 = arith.divf %188, %189 : vector<1x64xf32>
    %191 = vector.extract_strided_slice %184 {offsets = [0, 64], sizes = [1, 64], strides = [1, 1]} : vector<1x256xf32> to vector<1x64xf32>
    %192 = arith.negf %191 : vector<1x64xf32>
    %193 = math.exp %192 : vector<1x64xf32>
    %cst_79 = arith.constant 1.000000e+00 : f32
    %194 = vector.broadcast %cst_79 : f32 to vector<1x64xf32>
    %195 = arith.addf %194, %193 : vector<1x64xf32>
    %196 = arith.divf %194, %195 : vector<1x64xf32>
    %197 = vector.extract_strided_slice %184 {offsets = [0, 128], sizes = [1, 64], strides = [1, 1]} : vector<1x256xf32> to vector<1x64xf32>
    %198 = math.tanh %197 : vector<1x64xf32>
    %199 = vector.extract_strided_slice %184 {offsets = [0, 192], sizes = [1, 64], strides = [1, 1]} : vector<1x256xf32> to vector<1x64xf32>
    %200 = arith.negf %199 : vector<1x64xf32>
    %201 = math.exp %200 : vector<1x64xf32>
    %cst_80 = arith.constant 1.000000e+00 : f32
    %202 = vector.broadcast %cst_80 : f32 to vector<1x64xf32>
    %203 = arith.addf %202, %201 : vector<1x64xf32>
    %204 = arith.divf %202, %203 : vector<1x64xf32>
    %205 = arith.mulf %196, %169 : vector<1x64xf32>
    %206 = arith.mulf %190, %198 : vector<1x64xf32>
    %207 = arith.addf %205, %206 : vector<1x64xf32>
    %208 = math.tanh %207 : vector<1x64xf32>
    %209 = arith.mulf %204, %208 : vector<1x64xf32>
    %210 = vector.extract_strided_slice %209 {offsets = [0, 0], sizes = [1, 32], strides = [1, 1]} : vector<1x64xf32> to vector<1x32xf32>
    %c0_81 = arith.constant 0 : index
    %c1_82 = arith.constant 1 : index
    %c0_83 = arith.constant 0 : index
    %211 = vector.load %arg28[%c0_81, %c1_82, %c0_83] : memref<2x8x32xf32, #tpu.memory_space<vmem>>, vector<1x1x32xf32>
    %212 = vector.shape_cast %211 : vector<1x1x32xf32> to vector<1x32xf32>
    %213 = vector.shape_cast %210 : vector<1x32xf32> to vector<1x1x32xf32>
    tpu.vector_store %arg28[%c0_81, %c1_82, %c0_83], %213 {strides = array<i32>} : memref<2x8x32xf32, #tpu.memory_space<vmem>>, vector<1x1x32xf32>,
    %214 = vector.extract_strided_slice %209 {offsets = [0, 32], sizes = [1, 32], strides = [1, 1]} : vector<1x64xf32> to vector<1x32xf32>
    %c1_84 = arith.constant 1 : index
    %c6 = arith.constant 6 : index
    %c0_85 = arith.constant 0 : index
    %215 = vector.load %arg28[%c1_84, %c6, %c0_85] : memref<2x8x32xf32, #tpu.memory_space<vmem>>, vector<1x1x32xf32>
    %216 = vector.shape_cast %215 : vector<1x1x32xf32> to vector<1x32xf32>
    %217 = vector.shape_cast %214 : vector<1x32xf32> to vector<1x1x32xf32>
    tpu.vector_store %arg28[%c1_84, %c6, %c0_85], %217 {strides = array<i32>} : memref<2x8x32xf32, #tpu.memory_space<vmem>>, vector<1x1x32xf32>,
    %218 = vector.extract_strided_slice %133 {offsets = [2, 0], sizes = [1, 256], strides = [1, 1]} : vector<8x256xf32> to vector<1x256xf32>
    %219 = vector.extract_strided_slice %133 {offsets = [5, 0], sizes = [1, 256], strides = [1, 1]} : vector<8x256xf32> to vector<1x256xf32>
    %220 = arith.select %139, %218, %219 : vector<1x256xi1>, vector<1x256xf32>
    %cst_86 = arith.constant dense<0.000000e+00> : vector<1x256xf32>
    %221 = tpu.matmul %209, %134, %cst_86 {dimension_numbers = #tpu.dot_dimension_numbers<[1], [0], [0], [1], [0, 0, 1, 1], [], []>} : vector<1x64xf32>, vector<64x256xf32>, vector<1x256xf32> -> vector<1x256xf32>
    %222 = arith.addf %220, %221 : vector<1x256xf32>
    %223 = vector.extract_strided_slice %222 {offsets = [0, 0], sizes = [1, 64], strides = [1, 1]} : vector<1x256xf32> to vector<1x64xf32>
    %224 = arith.negf %223 : vector<1x64xf32>
    %225 = math.exp %224 : vector<1x64xf32>
    %cst_87 = arith.constant 1.000000e+00 : f32
    %226 = vector.broadcast %cst_87 : f32 to vector<1x64xf32>
    %227 = arith.addf %226, %225 : vector<1x64xf32>
    %228 = arith.divf %226, %227 : vector<1x64xf32>
    %229 = vector.extract_strided_slice %222 {offsets = [0, 64], sizes = [1, 64], strides = [1, 1]} : vector<1x256xf32> to vector<1x64xf32>
    %230 = arith.negf %229 : vector<1x64xf32>
    %231 = math.exp %230 : vector<1x64xf32>
    %cst_88 = arith.constant 1.000000e+00 : f32
    %232 = vector.broadcast %cst_88 : f32 to vector<1x64xf32>
    %233 = arith.addf %232, %231 : vector<1x64xf32>
    %234 = arith.divf %232, %233 : vector<1x64xf32>
    %235 = vector.extract_strided_slice %222 {offsets = [0, 128], sizes = [1, 64], strides = [1, 1]} : vector<1x256xf32> to vector<1x64xf32>
    %236 = math.tanh %235 : vector<1x64xf32>
    %237 = vector.extract_strided_slice %222 {offsets = [0, 192], sizes = [1, 64], strides = [1, 1]} : vector<1x256xf32> to vector<1x64xf32>
    %238 = arith.negf %237 : vector<1x64xf32>
    %239 = math.exp %238 : vector<1x64xf32>
    %cst_89 = arith.constant 1.000000e+00 : f32
    %240 = vector.broadcast %cst_89 : f32 to vector<1x64xf32>
    %241 = arith.addf %240, %239 : vector<1x64xf32>
    %242 = arith.divf %240, %241 : vector<1x64xf32>
    %243 = arith.mulf %234, %207 : vector<1x64xf32>
    %244 = arith.mulf %228, %236 : vector<1x64xf32>
    %245 = arith.addf %243, %244 : vector<1x64xf32>
    %246 = math.tanh %245 : vector<1x64xf32>
    %247 = arith.mulf %242, %246 : vector<1x64xf32>
    %248 = vector.extract_strided_slice %247 {offsets = [0, 0], sizes = [1, 32], strides = [1, 1]} : vector<1x64xf32> to vector<1x32xf32>
    %c0_90 = arith.constant 0 : index
    %c2 = arith.constant 2 : index
    %c0_91 = arith.constant 0 : index
    %249 = vector.load %arg28[%c0_90, %c2, %c0_91] : memref<2x8x32xf32, #tpu.memory_space<vmem>>, vector<1x1x32xf32>
    %250 = vector.shape_cast %249 : vector<1x1x32xf32> to vector<1x32xf32>
    %251 = vector.shape_cast %248 : vector<1x32xf32> to vector<1x1x32xf32>
    tpu.vector_store %arg28[%c0_90, %c2, %c0_91], %251 {strides = array<i32>} : memref<2x8x32xf32, #tpu.memory_space<vmem>>, vector<1x1x32xf32>,
    %252 = vector.extract_strided_slice %247 {offsets = [0, 32], sizes = [1, 32], strides = [1, 1]} : vector<1x64xf32> to vector<1x32xf32>
    %c1_92 = arith.constant 1 : index
    %c5 = arith.constant 5 : index
    %c0_93 = arith.constant 0 : index
    %253 = vector.load %arg28[%c1_92, %c5, %c0_93] : memref<2x8x32xf32, #tpu.memory_space<vmem>>, vector<1x1x32xf32>
    %254 = vector.shape_cast %253 : vector<1x1x32xf32> to vector<1x32xf32>
    %255 = vector.shape_cast %252 : vector<1x32xf32> to vector<1x1x32xf32>
    tpu.vector_store %arg28[%c1_92, %c5, %c0_93], %255 {strides = array<i32>} : memref<2x8x32xf32, #tpu.memory_space<vmem>>, vector<1x1x32xf32>,
    %256 = vector.extract_strided_slice %133 {offsets = [3, 0], sizes = [1, 256], strides = [1, 1]} : vector<8x256xf32> to vector<1x256xf32>
    %257 = vector.extract_strided_slice %133 {offsets = [4, 0], sizes = [1, 256], strides = [1, 1]} : vector<8x256xf32> to vector<1x256xf32>
    %258 = arith.select %139, %256, %257 : vector<1x256xi1>, vector<1x256xf32>
    %cst_94 = arith.constant dense<0.000000e+00> : vector<1x256xf32>
    %259 = tpu.matmul %247, %134, %cst_94 {dimension_numbers = #tpu.dot_dimension_numbers<[1], [0], [0], [1], [0, 0, 1, 1], [], []>} : vector<1x64xf32>, vector<64x256xf32>, vector<1x256xf32> -> vector<1x256xf32>
    %260 = arith.addf %258, %259 : vector<1x256xf32>
    %261 = vector.extract_strided_slice %260 {offsets = [0, 0], sizes = [1, 64], strides = [1, 1]} : vector<1x256xf32> to vector<1x64xf32>
    %262 = arith.negf %261 : vector<1x64xf32>
    %263 = math.exp %262 : vector<1x64xf32>
    %cst_95 = arith.constant 1.000000e+00 : f32
    %264 = vector.broadcast %cst_95 : f32 to vector<1x64xf32>
    %265 = arith.addf %264, %263 : vector<1x64xf32>
    %266 = arith.divf %264, %265 : vector<1x64xf32>
    %267 = vector.extract_strided_slice %260 {offsets = [0, 64], sizes = [1, 64], strides = [1, 1]} : vector<1x256xf32> to vector<1x64xf32>
    %268 = arith.negf %267 : vector<1x64xf32>
    %269 = math.exp %268 : vector<1x64xf32>
    %cst_96 = arith.constant 1.000000e+00 : f32
    %270 = vector.broadcast %cst_96 : f32 to vector<1x64xf32>
    %271 = arith.addf %270, %269 : vector<1x64xf32>
    %272 = arith.divf %270, %271 : vector<1x64xf32>
    %273 = vector.extract_strided_slice %260 {offsets = [0, 128], sizes = [1, 64], strides = [1, 1]} : vector<1x256xf32> to vector<1x64xf32>
    %274 = math.tanh %273 : vector<1x64xf32>
    %275 = vector.extract_strided_slice %260 {offsets = [0, 192], sizes = [1, 64], strides = [1, 1]} : vector<1x256xf32> to vector<1x64xf32>
    %276 = arith.negf %275 : vector<1x64xf32>
    %277 = math.exp %276 : vector<1x64xf32>
    %cst_97 = arith.constant 1.000000e+00 : f32
    %278 = vector.broadcast %cst_97 : f32 to vector<1x64xf32>
    %279 = arith.addf %278, %277 : vector<1x64xf32>
    %280 = arith.divf %278, %279 : vector<1x64xf32>
    %281 = arith.mulf %272, %245 : vector<1x64xf32>
    %282 = arith.mulf %266, %274 : vector<1x64xf32>
    %283 = arith.addf %281, %282 : vector<1x64xf32>
    %284 = math.tanh %283 : vector<1x64xf32>
    %285 = arith.mulf %280, %284 : vector<1x64xf32>
    %286 = vector.extract_strided_slice %285 {offsets = [0, 0], sizes = [1, 32], strides = [1, 1]} : vector<1x64xf32> to vector<1x32xf32>
    %c0_98 = arith.constant 0 : index
    %c3 = arith.constant 3 : index
    %c0_99 = arith.constant 0 : index
    %287 = vector.load %arg28[%c0_98, %c3, %c0_99] : memref<2x8x32xf32, #tpu.memory_space<vmem>>, vector<1x1x32xf32>
    %288 = vector.shape_cast %287 : vector<1x1x32xf32> to vector<1x32xf32>
    %289 = vector.shape_cast %286 : vector<1x32xf32> to vector<1x1x32xf32>
    tpu.vector_store %arg28[%c0_98, %c3, %c0_99], %289 {strides = array<i32>} : memref<2x8x32xf32, #tpu.memory_space<vmem>>, vector<1x1x32xf32>,
    %290 = vector.extract_strided_slice %285 {offsets = [0, 32], sizes = [1, 32], strides = [1, 1]} : vector<1x64xf32> to vector<1x32xf32>
    %c1_100 = arith.constant 1 : index
    %c4 = arith.constant 4 : index
    %c0_101 = arith.constant 0 : index
    %291 = vector.load %arg28[%c1_100, %c4, %c0_101] : memref<2x8x32xf32, #tpu.memory_space<vmem>>, vector<1x1x32xf32>
    %292 = vector.shape_cast %291 : vector<1x1x32xf32> to vector<1x32xf32>
    %293 = vector.shape_cast %290 : vector<1x32xf32> to vector<1x1x32xf32>
    tpu.vector_store %arg28[%c1_100, %c4, %c0_101], %293 {strides = array<i32>} : memref<2x8x32xf32, #tpu.memory_space<vmem>>, vector<1x1x32xf32>,
    %294 = vector.extract_strided_slice %133 {offsets = [4, 0], sizes = [1, 256], strides = [1, 1]} : vector<8x256xf32> to vector<1x256xf32>
    %295 = vector.extract_strided_slice %133 {offsets = [3, 0], sizes = [1, 256], strides = [1, 1]} : vector<8x256xf32> to vector<1x256xf32>
    %296 = arith.select %139, %294, %295 : vector<1x256xi1>, vector<1x256xf32>
    %cst_102 = arith.constant dense<0.000000e+00> : vector<1x256xf32>
    %297 = tpu.matmul %285, %134, %cst_102 {dimension_numbers = #tpu.dot_dimension_numbers<[1], [0], [0], [1], [0, 0, 1, 1], [], []>} : vector<1x64xf32>, vector<64x256xf32>, vector<1x256xf32> -> vector<1x256xf32>
    %298 = arith.addf %296, %297 : vector<1x256xf32>
    %299 = vector.extract_strided_slice %298 {offsets = [0, 0], sizes = [1, 64], strides = [1, 1]} : vector<1x256xf32> to vector<1x64xf32>
    %300 = arith.negf %299 : vector<1x64xf32>
    %301 = math.exp %300 : vector<1x64xf32>
    %cst_103 = arith.constant 1.000000e+00 : f32
    %302 = vector.broadcast %cst_103 : f32 to vector<1x64xf32>
    %303 = arith.addf %302, %301 : vector<1x64xf32>
    %304 = arith.divf %302, %303 : vector<1x64xf32>
    %305 = vector.extract_strided_slice %298 {offsets = [0, 64], sizes = [1, 64], strides = [1, 1]} : vector<1x256xf32> to vector<1x64xf32>
    %306 = arith.negf %305 : vector<1x64xf32>
    %307 = math.exp %306 : vector<1x64xf32>
    %cst_104 = arith.constant 1.000000e+00 : f32
    %308 = vector.broadcast %cst_104 : f32 to vector<1x64xf32>
    %309 = arith.addf %308, %307 : vector<1x64xf32>
    %310 = arith.divf %308, %309 : vector<1x64xf32>
    %311 = vector.extract_strided_slice %298 {offsets = [0, 128], sizes = [1, 64], strides = [1, 1]} : vector<1x256xf32> to vector<1x64xf32>
    %312 = math.tanh %311 : vector<1x64xf32>
    %313 = vector.extract_strided_slice %298 {offsets = [0, 192], sizes = [1, 64], strides = [1, 1]} : vector<1x256xf32> to vector<1x64xf32>
    %314 = arith.negf %313 : vector<1x64xf32>
    %315 = math.exp %314 : vector<1x64xf32>
    %cst_105 = arith.constant 1.000000e+00 : f32
    %316 = vector.broadcast %cst_105 : f32 to vector<1x64xf32>
    %317 = arith.addf %316, %315 : vector<1x64xf32>
    %318 = arith.divf %316, %317 : vector<1x64xf32>
    %319 = arith.mulf %310, %283 : vector<1x64xf32>
    %320 = arith.mulf %304, %312 : vector<1x64xf32>
    %321 = arith.addf %319, %320 : vector<1x64xf32>
    %322 = math.tanh %321 : vector<1x64xf32>
    %323 = arith.mulf %318, %322 : vector<1x64xf32>
    %324 = vector.extract_strided_slice %323 {offsets = [0, 0], sizes = [1, 32], strides = [1, 1]} : vector<1x64xf32> to vector<1x32xf32>
    %c0_106 = arith.constant 0 : index
    %c4_107 = arith.constant 4 : index
    %c0_108 = arith.constant 0 : index
    %325 = vector.load %arg28[%c0_106, %c4_107, %c0_108] : memref<2x8x32xf32, #tpu.memory_space<vmem>>, vector<1x1x32xf32>
    %326 = vector.shape_cast %325 : vector<1x1x32xf32> to vector<1x32xf32>
    %327 = vector.shape_cast %324 : vector<1x32xf32> to vector<1x1x32xf32>
    tpu.vector_store %arg28[%c0_106, %c4_107, %c0_108], %327 {strides = array<i32>} : memref<2x8x32xf32, #tpu.memory_space<vmem>>, vector<1x1x32xf32>,
    %328 = vector.extract_strided_slice %323 {offsets = [0, 32], sizes = [1, 32], strides = [1, 1]} : vector<1x64xf32> to vector<1x32xf32>
    %c1_109 = arith.constant 1 : index
    %c3_110 = arith.constant 3 : index
    %c0_111 = arith.constant 0 : index
    %329 = vector.load %arg28[%c1_109, %c3_110, %c0_111] : memref<2x8x32xf32, #tpu.memory_space<vmem>>, vector<1x1x32xf32>
    %330 = vector.shape_cast %329 : vector<1x1x32xf32> to vector<1x32xf32>
    %331 = vector.shape_cast %328 : vector<1x32xf32> to vector<1x1x32xf32>
    tpu.vector_store %arg28[%c1_109, %c3_110, %c0_111], %331 {strides = array<i32>} : memref<2x8x32xf32, #tpu.memory_space<vmem>>, vector<1x1x32xf32>,
    %332 = vector.extract_strided_slice %133 {offsets = [5, 0], sizes = [1, 256], strides = [1, 1]} : vector<8x256xf32> to vector<1x256xf32>
    %333 = vector.extract_strided_slice %133 {offsets = [2, 0], sizes = [1, 256], strides = [1, 1]} : vector<8x256xf32> to vector<1x256xf32>
    %334 = arith.select %139, %332, %333 : vector<1x256xi1>, vector<1x256xf32>
    %cst_112 = arith.constant dense<0.000000e+00> : vector<1x256xf32>
    %335 = tpu.matmul %323, %134, %cst_112 {dimension_numbers = #tpu.dot_dimension_numbers<[1], [0], [0], [1], [0, 0, 1, 1], [], []>} : vector<1x64xf32>, vector<64x256xf32>, vector<1x256xf32> -> vector<1x256xf32>
    %336 = arith.addf %334, %335 : vector<1x256xf32>
    %337 = vector.extract_strided_slice %336 {offsets = [0, 0], sizes = [1, 64], strides = [1, 1]} : vector<1x256xf32> to vector<1x64xf32>
    %338 = arith.negf %337 : vector<1x64xf32>
    %339 = math.exp %338 : vector<1x64xf32>
    %cst_113 = arith.constant 1.000000e+00 : f32
    %340 = vector.broadcast %cst_113 : f32 to vector<1x64xf32>
    %341 = arith.addf %340, %339 : vector<1x64xf32>
    %342 = arith.divf %340, %341 : vector<1x64xf32>
    %343 = vector.extract_strided_slice %336 {offsets = [0, 64], sizes = [1, 64], strides = [1, 1]} : vector<1x256xf32> to vector<1x64xf32>
    %344 = arith.negf %343 : vector<1x64xf32>
    %345 = math.exp %344 : vector<1x64xf32>
    %cst_114 = arith.constant 1.000000e+00 : f32
    %346 = vector.broadcast %cst_114 : f32 to vector<1x64xf32>
    %347 = arith.addf %346, %345 : vector<1x64xf32>
    %348 = arith.divf %346, %347 : vector<1x64xf32>
    %349 = vector.extract_strided_slice %336 {offsets = [0, 128], sizes = [1, 64], strides = [1, 1]} : vector<1x256xf32> to vector<1x64xf32>
    %350 = math.tanh %349 : vector<1x64xf32>
    %351 = vector.extract_strided_slice %336 {offsets = [0, 192], sizes = [1, 64], strides = [1, 1]} : vector<1x256xf32> to vector<1x64xf32>
    %352 = arith.negf %351 : vector<1x64xf32>
    %353 = math.exp %352 : vector<1x64xf32>
    %cst_115 = arith.constant 1.000000e+00 : f32
    %354 = vector.broadcast %cst_115 : f32 to vector<1x64xf32>
    %355 = arith.addf %354, %353 : vector<1x64xf32>
    %356 = arith.divf %354, %355 : vector<1x64xf32>
    %357 = arith.mulf %348, %321 : vector<1x64xf32>
    %358 = arith.mulf %342, %350 : vector<1x64xf32>
    %359 = arith.addf %357, %358 : vector<1x64xf32>
    %360 = math.tanh %359 : vector<1x64xf32>
    %361 = arith.mulf %356, %360 : vector<1x64xf32>
    %362 = vector.extract_strided_slice %361 {offsets = [0, 0], sizes = [1, 32], strides = [1, 1]} : vector<1x64xf32> to vector<1x32xf32>
    %c0_116 = arith.constant 0 : index
    %c5_117 = arith.constant 5 : index
    %c0_118 = arith.constant 0 : index
    %363 = vector.load %arg28[%c0_116, %c5_117, %c0_118] : memref<2x8x32xf32, #tpu.memory_space<vmem>>, vector<1x1x32xf32>
    %364 = vector.shape_cast %363 : vector<1x1x32xf32> to vector<1x32xf32>
    %365 = vector.shape_cast %362 : vector<1x32xf32> to vector<1x1x32xf32>
    tpu.vector_store %arg28[%c0_116, %c5_117, %c0_118], %365 {strides = array<i32>} : memref<2x8x32xf32, #tpu.memory_space<vmem>>, vector<1x1x32xf32>,
    %366 = vector.extract_strided_slice %361 {offsets = [0, 32], sizes = [1, 32], strides = [1, 1]} : vector<1x64xf32> to vector<1x32xf32>
    %c1_119 = arith.constant 1 : index
    %c2_120 = arith.constant 2 : index
    %c0_121 = arith.constant 0 : index
    %367 = vector.load %arg28[%c1_119, %c2_120, %c0_121] : memref<2x8x32xf32, #tpu.memory_space<vmem>>, vector<1x1x32xf32>
    %368 = vector.shape_cast %367 : vector<1x1x32xf32> to vector<1x32xf32>
    %369 = vector.shape_cast %366 : vector<1x32xf32> to vector<1x1x32xf32>
    tpu.vector_store %arg28[%c1_119, %c2_120, %c0_121], %369 {strides = array<i32>} : memref<2x8x32xf32, #tpu.memory_space<vmem>>, vector<1x1x32xf32>,
    %370 = vector.extract_strided_slice %133 {offsets = [6, 0], sizes = [1, 256], strides = [1, 1]} : vector<8x256xf32> to vector<1x256xf32>
    %371 = vector.extract_strided_slice %133 {offsets = [1, 0], sizes = [1, 256], strides = [1, 1]} : vector<8x256xf32> to vector<1x256xf32>
    %372 = arith.select %139, %370, %371 : vector<1x256xi1>, vector<1x256xf32>
    %cst_122 = arith.constant dense<0.000000e+00> : vector<1x256xf32>
    %373 = tpu.matmul %361, %134, %cst_122 {dimension_numbers = #tpu.dot_dimension_numbers<[1], [0], [0], [1], [0, 0, 1, 1], [], []>} : vector<1x64xf32>, vector<64x256xf32>, vector<1x256xf32> -> vector<1x256xf32>
    %374 = arith.addf %372, %373 : vector<1x256xf32>
    %375 = vector.extract_strided_slice %374 {offsets = [0, 0], sizes = [1, 64], strides = [1, 1]} : vector<1x256xf32> to vector<1x64xf32>
    %376 = arith.negf %375 : vector<1x64xf32>
    %377 = math.exp %376 : vector<1x64xf32>
    %cst_123 = arith.constant 1.000000e+00 : f32
    %378 = vector.broadcast %cst_123 : f32 to vector<1x64xf32>
    %379 = arith.addf %378, %377 : vector<1x64xf32>
    %380 = arith.divf %378, %379 : vector<1x64xf32>
    %381 = vector.extract_strided_slice %374 {offsets = [0, 64], sizes = [1, 64], strides = [1, 1]} : vector<1x256xf32> to vector<1x64xf32>
    %382 = arith.negf %381 : vector<1x64xf32>
    %383 = math.exp %382 : vector<1x64xf32>
    %cst_124 = arith.constant 1.000000e+00 : f32
    %384 = vector.broadcast %cst_124 : f32 to vector<1x64xf32>
    %385 = arith.addf %384, %383 : vector<1x64xf32>
    %386 = arith.divf %384, %385 : vector<1x64xf32>
    %387 = vector.extract_strided_slice %374 {offsets = [0, 128], sizes = [1, 64], strides = [1, 1]} : vector<1x256xf32> to vector<1x64xf32>
    %388 = math.tanh %387 : vector<1x64xf32>
    %389 = vector.extract_strided_slice %374 {offsets = [0, 192], sizes = [1, 64], strides = [1, 1]} : vector<1x256xf32> to vector<1x64xf32>
    %390 = arith.negf %389 : vector<1x64xf32>
    %391 = math.exp %390 : vector<1x64xf32>
    %cst_125 = arith.constant 1.000000e+00 : f32
    %392 = vector.broadcast %cst_125 : f32 to vector<1x64xf32>
    %393 = arith.addf %392, %391 : vector<1x64xf32>
    %394 = arith.divf %392, %393 : vector<1x64xf32>
    %395 = arith.mulf %386, %359 : vector<1x64xf32>
    %396 = arith.mulf %380, %388 : vector<1x64xf32>
    %397 = arith.addf %395, %396 : vector<1x64xf32>
    %398 = math.tanh %397 : vector<1x64xf32>
    %399 = arith.mulf %394, %398 : vector<1x64xf32>
    %400 = vector.extract_strided_slice %399 {offsets = [0, 0], sizes = [1, 32], strides = [1, 1]} : vector<1x64xf32> to vector<1x32xf32>
    %c0_126 = arith.constant 0 : index
    %c6_127 = arith.constant 6 : index
    %c0_128 = arith.constant 0 : index
    %401 = vector.load %arg28[%c0_126, %c6_127, %c0_128] : memref<2x8x32xf32, #tpu.memory_space<vmem>>, vector<1x1x32xf32>
    %402 = vector.shape_cast %401 : vector<1x1x32xf32> to vector<1x32xf32>
    %403 = vector.shape_cast %400 : vector<1x32xf32> to vector<1x1x32xf32>
    tpu.vector_store %arg28[%c0_126, %c6_127, %c0_128], %403 {strides = array<i32>} : memref<2x8x32xf32, #tpu.memory_space<vmem>>, vector<1x1x32xf32>,
    %404 = vector.extract_strided_slice %399 {offsets = [0, 32], sizes = [1, 32], strides = [1, 1]} : vector<1x64xf32> to vector<1x32xf32>
    %c1_129 = arith.constant 1 : index
    %c1_130 = arith.constant 1 : index
    %c0_131 = arith.constant 0 : index
    %405 = vector.load %arg28[%c1_129, %c1_130, %c0_131] : memref<2x8x32xf32, #tpu.memory_space<vmem>>, vector<1x1x32xf32>
    %406 = vector.shape_cast %405 : vector<1x1x32xf32> to vector<1x32xf32>
    %407 = vector.shape_cast %404 : vector<1x32xf32> to vector<1x1x32xf32>
    tpu.vector_store %arg28[%c1_129, %c1_130, %c0_131], %407 {strides = array<i32>} : memref<2x8x32xf32, #tpu.memory_space<vmem>>, vector<1x1x32xf32>,
    %408 = vector.extract_strided_slice %133 {offsets = [7, 0], sizes = [1, 256], strides = [1, 1]} : vector<8x256xf32> to vector<1x256xf32>
    %409 = vector.extract_strided_slice %133 {offsets = [0, 0], sizes = [1, 256], strides = [1, 1]} : vector<8x256xf32> to vector<1x256xf32>
    %410 = arith.select %139, %408, %409 : vector<1x256xi1>, vector<1x256xf32>
    %cst_132 = arith.constant dense<0.000000e+00> : vector<1x256xf32>
    %411 = tpu.matmul %399, %134, %cst_132 {dimension_numbers = #tpu.dot_dimension_numbers<[1], [0], [0], [1], [0, 0, 1, 1], [], []>} : vector<1x64xf32>, vector<64x256xf32>, vector<1x256xf32> -> vector<1x256xf32>
    %412 = arith.addf %410, %411 : vector<1x256xf32>
    %413 = vector.extract_strided_slice %412 {offsets = [0, 0], sizes = [1, 64], strides = [1, 1]} : vector<1x256xf32> to vector<1x64xf32>
    %414 = arith.negf %413 : vector<1x64xf32>
    %415 = math.exp %414 : vector<1x64xf32>
    %cst_133 = arith.constant 1.000000e+00 : f32
    %416 = vector.broadcast %cst_133 : f32 to vector<1x64xf32>
    %417 = arith.addf %416, %415 : vector<1x64xf32>
    %418 = arith.divf %416, %417 : vector<1x64xf32>
    %419 = vector.extract_strided_slice %412 {offsets = [0, 64], sizes = [1, 64], strides = [1, 1]} : vector<1x256xf32> to vector<1x64xf32>
    %420 = arith.negf %419 : vector<1x64xf32>
    %421 = math.exp %420 : vector<1x64xf32>
    %cst_134 = arith.constant 1.000000e+00 : f32
    %422 = vector.broadcast %cst_134 : f32 to vector<1x64xf32>
    %423 = arith.addf %422, %421 : vector<1x64xf32>
    %424 = arith.divf %422, %423 : vector<1x64xf32>
    %425 = vector.extract_strided_slice %412 {offsets = [0, 128], sizes = [1, 64], strides = [1, 1]} : vector<1x256xf32> to vector<1x64xf32>
    %426 = math.tanh %425 : vector<1x64xf32>
    %427 = vector.extract_strided_slice %412 {offsets = [0, 192], sizes = [1, 64], strides = [1, 1]} : vector<1x256xf32> to vector<1x64xf32>
    %428 = arith.negf %427 : vector<1x64xf32>
    %429 = math.exp %428 : vector<1x64xf32>
    %cst_135 = arith.constant 1.000000e+00 : f32
    %430 = vector.broadcast %cst_135 : f32 to vector<1x64xf32>
    %431 = arith.addf %430, %429 : vector<1x64xf32>
    %432 = arith.divf %430, %431 : vector<1x64xf32>
    %433 = arith.mulf %424, %397 : vector<1x64xf32>
    %434 = arith.mulf %418, %426 : vector<1x64xf32>
    %435 = arith.addf %433, %434 : vector<1x64xf32>
    %436 = math.tanh %435 : vector<1x64xf32>
    %437 = arith.mulf %432, %436 : vector<1x64xf32>
    %438 = vector.extract_strided_slice %437 {offsets = [0, 0], sizes = [1, 32], strides = [1, 1]} : vector<1x64xf32> to vector<1x32xf32>
    %c0_136 = arith.constant 0 : index
    %c7_137 = arith.constant 7 : index
    %c0_138 = arith.constant 0 : index
    %439 = vector.load %arg28[%c0_136, %c7_137, %c0_138] : memref<2x8x32xf32, #tpu.memory_space<vmem>>, vector<1x1x32xf32>
    %440 = vector.shape_cast %439 : vector<1x1x32xf32> to vector<1x32xf32>
    %441 = vector.shape_cast %438 : vector<1x32xf32> to vector<1x1x32xf32>
    tpu.vector_store %arg28[%c0_136, %c7_137, %c0_138], %441 {strides = array<i32>} : memref<2x8x32xf32, #tpu.memory_space<vmem>>, vector<1x1x32xf32>,
    %442 = vector.extract_strided_slice %437 {offsets = [0, 32], sizes = [1, 32], strides = [1, 1]} : vector<1x64xf32> to vector<1x32xf32>
    %c1_139 = arith.constant 1 : index
    %c0_140 = arith.constant 0 : index
    %c0_141 = arith.constant 0 : index
    %443 = vector.load %arg28[%c1_139, %c0_140, %c0_141] : memref<2x8x32xf32, #tpu.memory_space<vmem>>, vector<1x1x32xf32>
    %444 = vector.shape_cast %443 : vector<1x1x32xf32> to vector<1x32xf32>
    %445 = vector.shape_cast %442 : vector<1x32xf32> to vector<1x1x32xf32>
    tpu.vector_store %arg28[%c1_139, %c0_140, %c0_141], %445 {strides = array<i32>} : memref<2x8x32xf32, #tpu.memory_space<vmem>>, vector<1x1x32xf32>,
    %c0_142 = arith.constant 0 : index
    %c0_143 = arith.constant 0 : index
    %c0_144 = arith.constant 0 : index
    %446 = vector.load %arg28[%c0_142, %c0_143, %c0_144] : memref<2x8x32xf32, #tpu.memory_space<vmem>>, vector<1x8x32xf32>
    %447 = vector.shape_cast %446 : vector<1x8x32xf32> to vector<8x32xf32>
    %c0_145 = arith.constant 0 : index
    %c0_146 = arith.constant 0 : index
    %448 = vector.load %arg21[%c0_145, %c0_146] : memref<32x8xf32, #tpu.memory_space<vmem>>, vector<32x8xf32>
    %cst_147 = arith.constant dense<0.000000e+00> : vector<8x8xf32>
    %449 = tpu.matmul %447, %448, %cst_147 {dimension_numbers = #tpu.dot_dimension_numbers<[1], [0], [0], [1], [0, 0, 1, 1], [], []>} : vector<8x32xf32>, vector<32x8xf32>, vector<8x8xf32> -> vector<8x8xf32>
    %c1_148 = arith.constant 1 : index
    %c0_149 = arith.constant 0 : index
    %c0_150 = arith.constant 0 : index
    %450 = vector.load %arg28[%c1_148, %c0_149, %c0_150] : memref<2x8x32xf32, #tpu.memory_space<vmem>>, vector<1x8x32xf32>
    %451 = vector.shape_cast %450 : vector<1x8x32xf32> to vector<8x32xf32>
    %c0_151 = arith.constant 0 : index
    %c0_152 = arith.constant 0 : index
    %452 = vector.load %arg22[%c0_151, %c0_152] : memref<32x8xf32, #tpu.memory_space<vmem>>, vector<32x8xf32>
    %cst_153 = arith.constant dense<0.000000e+00> : vector<8x8xf32>
    %453 = tpu.matmul %451, %452, %cst_153 {dimension_numbers = #tpu.dot_dimension_numbers<[1], [0], [0], [1], [0, 0, 1, 1], [], []>} : vector<8x32xf32>, vector<32x8xf32>, vector<8x8xf32> -> vector<8x8xf32>
    %454 = arith.addf %449, %453 : vector<8x8xf32>
    %c0_154 = arith.constant 0 : index
    %c0_155 = arith.constant 0 : index
    %455 = vector.load %arg23[%c0_154, %c0_155] : memref<1x8xf32, #tpu.memory_space<vmem>>, vector<1x8xf32>
    %456 = vector.broadcast %455 : vector<1x8xf32> to vector<8x8xf32>
    %457 = arith.addf %454, %456 : vector<8x8xf32>
    %c0_156 = arith.constant 0 : index
    %c0_157 = arith.constant 0 : index
    %458 = vector.load %arg24[%c0_156, %c0_157] : memref<8x8xf32, #tpu.memory_space<vmem>>, vector<8x8xf32>
    %459 = tpu.iota {dimensions = array<i32: 0>} : vector<8x8xi32>
    %460 = tpu.iota {dimensions = array<i32: 1>} : vector<8x8xi32>
    %461 = arith.cmpi eq, %459, %460 : vector<8x8xi32>
    %462 = tpu.iota {dimensions = array<i32: 1>} : vector<1x8xi32>
    %463 = tpu.iota {dimensions = array<i32: 1>} : vector<1x8xi32>
    %c0_158 = arith.constant 0 : index
    %c0_159 = arith.constant 0 : index
    %464 = vector.load %arg25[%c0_158, %c0_159] : memref<1x8xf32, #tpu.memory_space<vmem>>, vector<1x8xf32>
    %465 = vector.extract_strided_slice %457 {offsets = [0, 0], sizes = [1, 8], strides = [1, 1]} : vector<8x8xf32> to vector<1x8xf32>
    %466 = arith.addf %464, %465 : vector<1x8xf32>
    %467 = vector.shape_cast %466 : vector<1x8xf32> to vector<1x8xf32>
    %468 = vector.broadcast %467 : vector<1x8xf32> to vector<8x8xf32>
    %cst_160 = arith.constant 0.000000e+00 : f32
    %469 = vector.broadcast %cst_160 : f32 to vector<8x8xf32>
    %470 = arith.select %461, %468, %469 : vector<8x8xi1>, vector<8x8xf32>
    %cst_161 = arith.constant dense<0.000000e+00> : vector<8xf32>
    %471 = vector.multi_reduction <add>, %470, %cst_161 [1] : vector<8x8xf32> to vector<8xf32>
    %472 = vector.shape_cast %471 : vector<8xf32> to vector<8x1xf32>
    %473 = vector.broadcast %472 : vector<8x1xf32> to vector<8x8xf32>
    %474 = arith.addf %473, %458 : vector<8x8xf32>
    %cst_162 = arith.constant dense<0xFF800000> : vector<8xf32>
    %475 = vector.multi_reduction <maximumf>, %474, %cst_162 [0] : vector<8x8xf32> to vector<8xf32>
    %476 = vector.shape_cast %475 : vector<8xf32> to vector<1x8xf32>
    %477 = vector.broadcast %476 : vector<1x8xf32> to vector<8x8xf32>
    %478 = arith.cmpf oge, %474, %477 : vector<8x8xf32>
    %c8_i32 = arith.constant 8 : i32
    %479 = vector.broadcast %c8_i32 : i32 to vector<8x8xi32>
    %480 = arith.select %478, %459, %479 : vector<8x8xi1>, vector<8x8xi32>
    %cst_163 = arith.constant dense<2147483647> : vector<8xi32>
    %481 = vector.multi_reduction <minsi>, %480, %cst_163 [0] : vector<8x8xi32> to vector<8xi32>
    %482 = vector.shape_cast %481 : vector<8xi32> to vector<1x8xi32>
    %483 = arith.index_cast %arg0 : i32 to index
    %c1_164 = arith.constant 1 : index
    %484 = memref.load %arg1[%483, %c1_164] : memref<2x8xi32, #tpu.memory_space<smem>>
    %c0_i32_165 = arith.constant 0 : i32
    %485 = arith.cmpi sgt, %484, %c0_i32_165 : i32
    %486 = vector.extract_strided_slice %457 {offsets = [1, 0], sizes = [1, 8], strides = [1, 1]} : vector<8x8xf32> to vector<1x8xf32>
    %487 = arith.addf %476, %486 : vector<1x8xf32>
    %488 = arith.select %485, %487, %466 : vector<1x8xf32>
    %489 = vector.shape_cast %488 : vector<1x8xf32> to vector<1x8xf32>
    %490 = vector.broadcast %489 : vector<1x8xf32> to vector<8x8xf32>
    %cst_166 = arith.constant 0.000000e+00 : f32
    %491 = vector.broadcast %cst_166 : f32 to vector<8x8xf32>
    %492 = arith.select %461, %490, %491 : vector<8x8xi1>, vector<8x8xf32>
    %cst_167 = arith.constant dense<0.000000e+00> : vector<8xf32>
    %493 = vector.multi_reduction <add>, %492, %cst_167 [1] : vector<8x8xf32> to vector<8xf32>
    %494 = vector.shape_cast %493 : vector<8xf32> to vector<8x1xf32>
    %495 = vector.broadcast %494 : vector<8x1xf32> to vector<8x8xf32>
    %496 = arith.addf %495, %458 : vector<8x8xf32>
    %cst_168 = arith.constant dense<0xFF800000> : vector<8xf32>
    %497 = vector.multi_reduction <maximumf>, %496, %cst_168 [0] : vector<8x8xf32> to vector<8xf32>
    %498 = vector.shape_cast %497 : vector<8xf32> to vector<1x8xf32>
    %499 = vector.broadcast %498 : vector<1x8xf32> to vector<8x8xf32>
    %500 = arith.cmpf oge, %496, %499 : vector<8x8xf32>
    %c8_i32_169 = arith.constant 8 : i32
    %501 = vector.broadcast %c8_i32_169 : i32 to vector<8x8xi32>
    %502 = arith.select %500, %459, %501 : vector<8x8xi1>, vector<8x8xi32>
    %cst_170 = arith.constant dense<2147483647> : vector<8xi32>
    %503 = vector.multi_reduction <minsi>, %502, %cst_170 [0] : vector<8x8xi32> to vector<8xi32>
    %504 = vector.shape_cast %503 : vector<8xi32> to vector<1x8xi32>
    %505 = arith.index_cast %arg0 : i32 to index
    %c2_171 = arith.constant 2 : index
    %506 = memref.load %arg1[%505, %c2_171] : memref<2x8xi32, #tpu.memory_space<smem>>
    %c0_i32_172 = arith.constant 0 : i32
    %507 = arith.cmpi sgt, %506, %c0_i32_172 : i32
    %508 = vector.extract_strided_slice %457 {offsets = [2, 0], sizes = [1, 8], strides = [1, 1]} : vector<8x8xf32> to vector<1x8xf32>
    %509 = arith.addf %498, %508 : vector<1x8xf32>
    %510 = arith.select %507, %509, %488 : vector<1x8xf32>
    %511 = vector.shape_cast %510 : vector<1x8xf32> to vector<1x8xf32>
    %512 = vector.broadcast %511 : vector<1x8xf32> to vector<8x8xf32>
    %cst_173 = arith.constant 0.000000e+00 : f32
    %513 = vector.broadcast %cst_173 : f32 to vector<8x8xf32>
    %514 = arith.select %461, %512, %513 : vector<8x8xi1>, vector<8x8xf32>
    %cst_174 = arith.constant dense<0.000000e+00> : vector<8xf32>
    %515 = vector.multi_reduction <add>, %514, %cst_174 [1] : vector<8x8xf32> to vector<8xf32>
    %516 = vector.shape_cast %515 : vector<8xf32> to vector<8x1xf32>
    %517 = vector.broadcast %516 : vector<8x1xf32> to vector<8x8xf32>
    %518 = arith.addf %517, %458 : vector<8x8xf32>
    %cst_175 = arith.constant dense<0xFF800000> : vector<8xf32>
    %519 = vector.multi_reduction <maximumf>, %518, %cst_175 [0] : vector<8x8xf32> to vector<8xf32>
    %520 = vector.shape_cast %519 : vector<8xf32> to vector<1x8xf32>
    %521 = vector.broadcast %520 : vector<1x8xf32> to vector<8x8xf32>
    %522 = arith.cmpf oge, %518, %521 : vector<8x8xf32>
    %c8_i32_176 = arith.constant 8 : i32
    %523 = vector.broadcast %c8_i32_176 : i32 to vector<8x8xi32>
    %524 = arith.select %522, %459, %523 : vector<8x8xi1>, vector<8x8xi32>
    %cst_177 = arith.constant dense<2147483647> : vector<8xi32>
    %525 = vector.multi_reduction <minsi>, %524, %cst_177 [0] : vector<8x8xi32> to vector<8xi32>
    %526 = vector.shape_cast %525 : vector<8xi32> to vector<1x8xi32>
    %527 = arith.index_cast %arg0 : i32 to index
    %c3_178 = arith.constant 3 : index
    %528 = memref.load %arg1[%527, %c3_178] : memref<2x8xi32, #tpu.memory_space<smem>>
    %c0_i32_179 = arith.constant 0 : i32
    %529 = arith.cmpi sgt, %528, %c0_i32_179 : i32
    %530 = vector.extract_strided_slice %457 {offsets = [3, 0], sizes = [1, 8], strides = [1, 1]} : vector<8x8xf32> to vector<1x8xf32>
    %531 = arith.addf %520, %530 : vector<1x8xf32>
    %532 = arith.select %529, %531, %510 : vector<1x8xf32>
    %533 = vector.shape_cast %532 : vector<1x8xf32> to vector<1x8xf32>
    %534 = vector.broadcast %533 : vector<1x8xf32> to vector<8x8xf32>
    %cst_180 = arith.constant 0.000000e+00 : f32
    %535 = vector.broadcast %cst_180 : f32 to vector<8x8xf32>
    %536 = arith.select %461, %534, %535 : vector<8x8xi1>, vector<8x8xf32>
    %cst_181 = arith.constant dense<0.000000e+00> : vector<8xf32>
    %537 = vector.multi_reduction <add>, %536, %cst_181 [1] : vector<8x8xf32> to vector<8xf32>
    %538 = vector.shape_cast %537 : vector<8xf32> to vector<8x1xf32>
    %539 = vector.broadcast %538 : vector<8x1xf32> to vector<8x8xf32>
    %540 = arith.addf %539, %458 : vector<8x8xf32>
    %cst_182 = arith.constant dense<0xFF800000> : vector<8xf32>
    %541 = vector.multi_reduction <maximumf>, %540, %cst_182 [0] : vector<8x8xf32> to vector<8xf32>
    %542 = vector.shape_cast %541 : vector<8xf32> to vector<1x8xf32>
    %543 = vector.broadcast %542 : vector<1x8xf32> to vector<8x8xf32>
    %544 = arith.cmpf oge, %540, %543 : vector<8x8xf32>
    %c8_i32_183 = arith.constant 8 : i32
    %545 = vector.broadcast %c8_i32_183 : i32 to vector<8x8xi32>
    %546 = arith.select %544, %459, %545 : vector<8x8xi1>, vector<8x8xi32>
    %cst_184 = arith.constant dense<2147483647> : vector<8xi32>
    %547 = vector.multi_reduction <minsi>, %546, %cst_184 [0] : vector<8x8xi32> to vector<8xi32>
    %548 = vector.shape_cast %547 : vector<8xi32> to vector<1x8xi32>
    %549 = arith.index_cast %arg0 : i32 to index
    %c4_185 = arith.constant 4 : index
    %550 = memref.load %arg1[%549, %c4_185] : memref<2x8xi32, #tpu.memory_space<smem>>
    %c0_i32_186 = arith.constant 0 : i32
    %551 = arith.cmpi sgt, %550, %c0_i32_186 : i32
    %552 = vector.extract_strided_slice %457 {offsets = [4, 0], sizes = [1, 8], strides = [1, 1]} : vector<8x8xf32> to vector<1x8xf32>
    %553 = arith.addf %542, %552 : vector<1x8xf32>
    %554 = arith.select %551, %553, %532 : vector<1x8xf32>
    %555 = vector.shape_cast %554 : vector<1x8xf32> to vector<1x8xf32>
    %556 = vector.broadcast %555 : vector<1x8xf32> to vector<8x8xf32>
    %cst_187 = arith.constant 0.000000e+00 : f32
    %557 = vector.broadcast %cst_187 : f32 to vector<8x8xf32>
    %558 = arith.select %461, %556, %557 : vector<8x8xi1>, vector<8x8xf32>
    %cst_188 = arith.constant dense<0.000000e+00> : vector<8xf32>
    %559 = vector.multi_reduction <add>, %558, %cst_188 [1] : vector<8x8xf32> to vector<8xf32>
    %560 = vector.shape_cast %559 : vector<8xf32> to vector<8x1xf32>
    %561 = vector.broadcast %560 : vector<8x1xf32> to vector<8x8xf32>
    %562 = arith.addf %561, %458 : vector<8x8xf32>
    %cst_189 = arith.constant dense<0xFF800000> : vector<8xf32>
    %563 = vector.multi_reduction <maximumf>, %562, %cst_189 [0] : vector<8x8xf32> to vector<8xf32>
    %564 = vector.shape_cast %563 : vector<8xf32> to vector<1x8xf32>
    %565 = vector.broadcast %564 : vector<1x8xf32> to vector<8x8xf32>
    %566 = arith.cmpf oge, %562, %565 : vector<8x8xf32>
    %c8_i32_190 = arith.constant 8 : i32
    %567 = vector.broadcast %c8_i32_190 : i32 to vector<8x8xi32>
    %568 = arith.select %566, %459, %567 : vector<8x8xi1>, vector<8x8xi32>
    %cst_191 = arith.constant dense<2147483647> : vector<8xi32>
    %569 = vector.multi_reduction <minsi>, %568, %cst_191 [0] : vector<8x8xi32> to vector<8xi32>
    %570 = vector.shape_cast %569 : vector<8xi32> to vector<1x8xi32>
    %571 = arith.index_cast %arg0 : i32 to index
    %c5_192 = arith.constant 5 : index
    %572 = memref.load %arg1[%571, %c5_192] : memref<2x8xi32, #tpu.memory_space<smem>>
    %c0_i32_193 = arith.constant 0 : i32
    %573 = arith.cmpi sgt, %572, %c0_i32_193 : i32
    %574 = vector.extract_strided_slice %457 {offsets = [5, 0], sizes = [1, 8], strides = [1, 1]} : vector<8x8xf32> to vector<1x8xf32>
    %575 = arith.addf %564, %574 : vector<1x8xf32>
    %576 = arith.select %573, %575, %554 : vector<1x8xf32>
    %577 = vector.shape_cast %576 : vector<1x8xf32> to vector<1x8xf32>
    %578 = vector.broadcast %577 : vector<1x8xf32> to vector<8x8xf32>
    %cst_194 = arith.constant 0.000000e+00 : f32
    %579 = vector.broadcast %cst_194 : f32 to vector<8x8xf32>
    %580 = arith.select %461, %578, %579 : vector<8x8xi1>, vector<8x8xf32>
    %cst_195 = arith.constant dense<0.000000e+00> : vector<8xf32>
    %581 = vector.multi_reduction <add>, %580, %cst_195 [1] : vector<8x8xf32> to vector<8xf32>
    %582 = vector.shape_cast %581 : vector<8xf32> to vector<8x1xf32>
    %583 = vector.broadcast %582 : vector<8x1xf32> to vector<8x8xf32>
    %584 = arith.addf %583, %458 : vector<8x8xf32>
    %cst_196 = arith.constant dense<0xFF800000> : vector<8xf32>
    %585 = vector.multi_reduction <maximumf>, %584, %cst_196 [0] : vector<8x8xf32> to vector<8xf32>
    %586 = vector.shape_cast %585 : vector<8xf32> to vector<1x8xf32>
    %587 = vector.broadcast %586 : vector<1x8xf32> to vector<8x8xf32>
    %588 = arith.cmpf oge, %584, %587 : vector<8x8xf32>
    %c8_i32_197 = arith.constant 8 : i32
    %589 = vector.broadcast %c8_i32_197 : i32 to vector<8x8xi32>
    %590 = arith.select %588, %459, %589 : vector<8x8xi1>, vector<8x8xi32>
    %cst_198 = arith.constant dense<2147483647> : vector<8xi32>
    %591 = vector.multi_reduction <minsi>, %590, %cst_198 [0] : vector<8x8xi32> to vector<8xi32>
    %592 = vector.shape_cast %591 : vector<8xi32> to vector<1x8xi32>
    %593 = arith.index_cast %arg0 : i32 to index
    %c6_199 = arith.constant 6 : index
    %594 = memref.load %arg1[%593, %c6_199] : memref<2x8xi32, #tpu.memory_space<smem>>
    %c0_i32_200 = arith.constant 0 : i32
    %595 = arith.cmpi sgt, %594, %c0_i32_200 : i32
    %596 = vector.extract_strided_slice %457 {offsets = [6, 0], sizes = [1, 8], strides = [1, 1]} : vector<8x8xf32> to vector<1x8xf32>
    %597 = arith.addf %586, %596 : vector<1x8xf32>
    %598 = arith.select %595, %597, %576 : vector<1x8xf32>
    %599 = vector.shape_cast %598 : vector<1x8xf32> to vector<1x8xf32>
    %600 = vector.broadcast %599 : vector<1x8xf32> to vector<8x8xf32>
    %cst_201 = arith.constant 0.000000e+00 : f32
    %601 = vector.broadcast %cst_201 : f32 to vector<8x8xf32>
    %602 = arith.select %461, %600, %601 : vector<8x8xi1>, vector<8x8xf32>
    %cst_202 = arith.constant dense<0.000000e+00> : vector<8xf32>
    %603 = vector.multi_reduction <add>, %602, %cst_202 [1] : vector<8x8xf32> to vector<8xf32>
    %604 = vector.shape_cast %603 : vector<8xf32> to vector<8x1xf32>
    %605 = vector.broadcast %604 : vector<8x1xf32> to vector<8x8xf32>
    %606 = arith.addf %605, %458 : vector<8x8xf32>
    %cst_203 = arith.constant dense<0xFF800000> : vector<8xf32>
    %607 = vector.multi_reduction <maximumf>, %606, %cst_203 [0] : vector<8x8xf32> to vector<8xf32>
    %608 = vector.shape_cast %607 : vector<8xf32> to vector<1x8xf32>
    %609 = vector.broadcast %608 : vector<1x8xf32> to vector<8x8xf32>
    %610 = arith.cmpf oge, %606, %609 : vector<8x8xf32>
    %c8_i32_204 = arith.constant 8 : i32
    %611 = vector.broadcast %c8_i32_204 : i32 to vector<8x8xi32>
    %612 = arith.select %610, %459, %611 : vector<8x8xi1>, vector<8x8xi32>
    %cst_205 = arith.constant dense<2147483647> : vector<8xi32>
    %613 = vector.multi_reduction <minsi>, %612, %cst_205 [0] : vector<8x8xi32> to vector<8xi32>
    %614 = vector.shape_cast %613 : vector<8xi32> to vector<1x8xi32>
    %615 = arith.index_cast %arg0 : i32 to index
    %c7_206 = arith.constant 7 : index
    %616 = memref.load %arg1[%615, %c7_206] : memref<2x8xi32, #tpu.memory_space<smem>>
    %c0_i32_207 = arith.constant 0 : i32
    %617 = arith.cmpi sgt, %616, %c0_i32_207 : i32
    %618 = vector.extract_strided_slice %457 {offsets = [7, 0], sizes = [1, 8], strides = [1, 1]} : vector<8x8xf32> to vector<1x8xf32>
    %619 = arith.addf %608, %618 : vector<1x8xf32>
    %620 = arith.select %617, %619, %598 : vector<1x8xf32>
    %c0_208 = arith.constant 0 : index
    %c0_209 = arith.constant 0 : index
    %621 = vector.load %arg26[%c0_208, %c0_209] : memref<1x8xf32, #tpu.memory_space<vmem>>, vector<1x8xf32>
    %622 = arith.addf %620, %621 : vector<1x8xf32>
    %623 = arith.index_cast %arg0 : i32 to index
    %c0_210 = arith.constant 0 : index
    %624 = memref.load %arg1[%623, %c0_210] : memref<2x8xi32, #tpu.memory_space<smem>>
    %625 = arith.index_cast %arg0 : i32 to index
    %c1_211 = arith.constant 1 : index
    %626 = memref.load %arg1[%625, %c1_211] : memref<2x8xi32, #tpu.memory_space<smem>>
    %627 = arith.addi %624, %626 : i32
    %628 = arith.index_cast %arg0 : i32 to index
    %c2_212 = arith.constant 2 : index
    %629 = memref.load %arg1[%628, %c2_212] : memref<2x8xi32, #tpu.memory_space<smem>>
    %630 = arith.addi %627, %629 : i32
    %631 = arith.index_cast %arg0 : i32 to index
    %c3_213 = arith.constant 3 : index
    %632 = memref.load %arg1[%631, %c3_213] : memref<2x8xi32, #tpu.memory_space<smem>>
    %633 = arith.addi %630, %632 : i32
    %634 = arith.index_cast %arg0 : i32 to index
    %c4_214 = arith.constant 4 : index
    %635 = memref.load %arg1[%634, %c4_214] : memref<2x8xi32, #tpu.memory_space<smem>>
    %636 = arith.addi %633, %635 : i32
    %637 = arith.index_cast %arg0 : i32 to index
    %c5_215 = arith.constant 5 : index
    %638 = memref.load %arg1[%637, %c5_215] : memref<2x8xi32, #tpu.memory_space<smem>>
    %639 = arith.addi %636, %638 : i32
    %640 = arith.index_cast %arg0 : i32 to index
    %c6_216 = arith.constant 6 : index
    %641 = memref.load %arg1[%640, %c6_216] : memref<2x8xi32, #tpu.memory_space<smem>>
    %642 = arith.addi %639, %641 : i32
    %643 = arith.index_cast %arg0 : i32 to index
    %c7_217 = arith.constant 7 : index
    %644 = memref.load %arg1[%643, %c7_217] : memref<2x8xi32, #tpu.memory_space<smem>>
    %645 = arith.addi %642, %644 : i32
    %c1_i32 = arith.constant 1 : i32
    %646 = arith.subi %645, %c1_i32 : i32
    %647 = vector.shape_cast %622 : vector<1x8xf32> to vector<1x1x8xf32>
    %cst_218 = arith.constant dense<0xFF800000> : vector<1xf32>
    %648 = vector.multi_reduction <maximumf>, %647, %cst_218 [1, 2] : vector<1x1x8xf32> to vector<1xf32>
    %649 = vector.shape_cast %648 : vector<1xf32> to vector<1x1x1xf32>
    %650 = vector.extract %649[0, 0, 0] : f32 from vector<1x1x1xf32>
    %651 = vector.broadcast %650 : f32 to vector<1x8xf32>
    %652 = arith.cmpf oge, %622, %651 : vector<1x8xf32>
    %c8_i32_219 = arith.constant 8 : i32
    %653 = vector.broadcast %c8_i32_219 : i32 to vector<1x8xi32>
    %654 = arith.select %652, %462, %653 : vector<1x8xi1>, vector<1x8xi32>
    %655 = vector.shape_cast %654 : vector<1x8xi32> to vector<1x1x8xi32>
    %cst_220 = arith.constant dense<2147483647> : vector<1xi32>
    %656 = vector.multi_reduction <minsi>, %655, %cst_220 [1, 2] : vector<1x1x8xi32> to vector<1xi32>
    %657 = vector.shape_cast %656 : vector<1xi32> to vector<1x1x1xi32>
    %658 = vector.extract %657[0, 0, 0] : i32 from vector<1x1x1xi32>
    %659 = vector.broadcast %646 : i32 to vector<1x8xi32>
    %660 = arith.cmpi eq, %463, %659 : vector<1x8xi32>
    %c0_i32_221 = arith.constant 0 : i32
    %661 = vector.broadcast %658 : i32 to vector<1x8xi32>
    %662 = vector.broadcast %c0_i32_221 : i32 to vector<1x8xi32>
    %663 = arith.select %660, %661, %662 : vector<1x8xi1>, vector<1x8xi32>
    %c6_i32 = arith.constant 6 : i32
    %664 = arith.cmpi sgt, %646, %c6_i32 : i32
    %665 = vector.broadcast %658 : i32 to vector<1x8xi32>
    %666 = arith.cmpi eq, %462, %665 : vector<1x8xi32>
    %c0_i32_222 = arith.constant 0 : i32
    %667 = vector.broadcast %c0_i32_222 : i32 to vector<1x8xi32>
    %668 = arith.select %666, %614, %667 : vector<1x8xi1>, vector<1x8xi32>
    %669 = vector.shape_cast %668 : vector<1x8xi32> to vector<1x1x8xi32>
    %cst_223 = arith.constant dense<0> : vector<1xi32>
    %670 = vector.multi_reduction <add>, %669, %cst_223 [1, 2] : vector<1x1x8xi32> to vector<1xi32>
    %671 = vector.shape_cast %670 : vector<1xi32> to vector<1x1x1xi32>
    %672 = vector.extract %671[0, 0, 0] : i32 from vector<1x1x1xi32>
    %673 = arith.select %664, %672, %658 : i32
    %c6_i32_224 = arith.constant 6 : i32
    %674 = vector.broadcast %c6_i32_224 : i32 to vector<1x8xi32>
    %675 = arith.cmpi eq, %463, %674 : vector<1x8xi32>
    %676 = vector.broadcast %664 : i1 to vector<1x8xi1>
    %677 = arith.andi %675, %676 : vector<1x8xi1>
    %678 = vector.broadcast %673 : i32 to vector<1x8xi32>
    %679 = arith.select %677, %678, %663 : vector<1x8xi1>, vector<1x8xi32>
    %c5_i32 = arith.constant 5 : i32
    %680 = arith.cmpi sgt, %646, %c5_i32 : i32
    %681 = vector.broadcast %673 : i32 to vector<1x8xi32>
    %682 = arith.cmpi eq, %462, %681 : vector<1x8xi32>
    %c0_i32_225 = arith.constant 0 : i32
    %683 = vector.broadcast %c0_i32_225 : i32 to vector<1x8xi32>
    %684 = arith.select %682, %592, %683 : vector<1x8xi1>, vector<1x8xi32>
    %685 = vector.shape_cast %684 : vector<1x8xi32> to vector<1x1x8xi32>
    %cst_226 = arith.constant dense<0> : vector<1xi32>
    %686 = vector.multi_reduction <add>, %685, %cst_226 [1, 2] : vector<1x1x8xi32> to vector<1xi32>
    %687 = vector.shape_cast %686 : vector<1xi32> to vector<1x1x1xi32>
    %688 = vector.extract %687[0, 0, 0] : i32 from vector<1x1x1xi32>
    %689 = arith.select %680, %688, %673 : i32
    %c5_i32_227 = arith.constant 5 : i32
    %690 = vector.broadcast %c5_i32_227 : i32 to vector<1x8xi32>
    %691 = arith.cmpi eq, %463, %690 : vector<1x8xi32>
    %692 = vector.broadcast %680 : i1 to vector<1x8xi1>
    %693 = arith.andi %691, %692 : vector<1x8xi1>
    %694 = vector.broadcast %689 : i32 to vector<1x8xi32>
    %695 = arith.select %693, %694, %679 : vector<1x8xi1>, vector<1x8xi32>
    %c4_i32 = arith.constant 4 : i32
    %696 = arith.cmpi sgt, %646, %c4_i32 : i32
    %697 = vector.broadcast %689 : i32 to vector<1x8xi32>
    %698 = arith.cmpi eq, %462, %697 : vector<1x8xi32>
    %c0_i32_228 = arith.constant 0 : i32
    %699 = vector.broadcast %c0_i32_228 : i32 to vector<1x8xi32>
    %700 = arith.select %698, %570, %699 : vector<1x8xi1>, vector<1x8xi32>
    %701 = vector.shape_cast %700 : vector<1x8xi32> to vector<1x1x8xi32>
    %cst_229 = arith.constant dense<0> : vector<1xi32>
    %702 = vector.multi_reduction <add>, %701, %cst_229 [1, 2] : vector<1x1x8xi32> to vector<1xi32>
    %703 = vector.shape_cast %702 : vector<1xi32> to vector<1x1x1xi32>
    %704 = vector.extract %703[0, 0, 0] : i32 from vector<1x1x1xi32>
    %705 = arith.select %696, %704, %689 : i32
    %c4_i32_230 = arith.constant 4 : i32
    %706 = vector.broadcast %c4_i32_230 : i32 to vector<1x8xi32>
    %707 = arith.cmpi eq, %463, %706 : vector<1x8xi32>
    %708 = vector.broadcast %696 : i1 to vector<1x8xi1>
    %709 = arith.andi %707, %708 : vector<1x8xi1>
    %710 = vector.broadcast %705 : i32 to vector<1x8xi32>
    %711 = arith.select %709, %710, %695 : vector<1x8xi1>, vector<1x8xi32>
    %c3_i32 = arith.constant 3 : i32
    %712 = arith.cmpi sgt, %646, %c3_i32 : i32
    %713 = vector.broadcast %705 : i32 to vector<1x8xi32>
    %714 = arith.cmpi eq, %462, %713 : vector<1x8xi32>
    %c0_i32_231 = arith.constant 0 : i32
    %715 = vector.broadcast %c0_i32_231 : i32 to vector<1x8xi32>
    %716 = arith.select %714, %548, %715 : vector<1x8xi1>, vector<1x8xi32>
    %717 = vector.shape_cast %716 : vector<1x8xi32> to vector<1x1x8xi32>
    %cst_232 = arith.constant dense<0> : vector<1xi32>
    %718 = vector.multi_reduction <add>, %717, %cst_232 [1, 2] : vector<1x1x8xi32> to vector<1xi32>
    %719 = vector.shape_cast %718 : vector<1xi32> to vector<1x1x1xi32>
    %720 = vector.extract %719[0, 0, 0] : i32 from vector<1x1x1xi32>
    %721 = arith.select %712, %720, %705 : i32
    %c3_i32_233 = arith.constant 3 : i32
    %722 = vector.broadcast %c3_i32_233 : i32 to vector<1x8xi32>
    %723 = arith.cmpi eq, %463, %722 : vector<1x8xi32>
    %724 = vector.broadcast %712 : i1 to vector<1x8xi1>
    %725 = arith.andi %723, %724 : vector<1x8xi1>
    %726 = vector.broadcast %721 : i32 to vector<1x8xi32>
    %727 = arith.select %725, %726, %711 : vector<1x8xi1>, vector<1x8xi32>
    %c2_i32 = arith.constant 2 : i32
    %728 = arith.cmpi sgt, %646, %c2_i32 : i32
    %729 = vector.broadcast %721 : i32 to vector<1x8xi32>
    %730 = arith.cmpi eq, %462, %729 : vector<1x8xi32>
    %c0_i32_234 = arith.constant 0 : i32
    %731 = vector.broadcast %c0_i32_234 : i32 to vector<1x8xi32>
    %732 = arith.select %730, %526, %731 : vector<1x8xi1>, vector<1x8xi32>
    %733 = vector.shape_cast %732 : vector<1x8xi32> to vector<1x1x8xi32>
    %cst_235 = arith.constant dense<0> : vector<1xi32>
    %734 = vector.multi_reduction <add>, %733, %cst_235 [1, 2] : vector<1x1x8xi32> to vector<1xi32>
    %735 = vector.shape_cast %734 : vector<1xi32> to vector<1x1x1xi32>
    %736 = vector.extract %735[0, 0, 0] : i32 from vector<1x1x1xi32>
    %737 = arith.select %728, %736, %721 : i32
    %c2_i32_236 = arith.constant 2 : i32
    %738 = vector.broadcast %c2_i32_236 : i32 to vector<1x8xi32>
    %739 = arith.cmpi eq, %463, %738 : vector<1x8xi32>
    %740 = vector.broadcast %728 : i1 to vector<1x8xi1>
    %741 = arith.andi %739, %740 : vector<1x8xi1>
    %742 = vector.broadcast %737 : i32 to vector<1x8xi32>
    %743 = arith.select %741, %742, %727 : vector<1x8xi1>, vector<1x8xi32>
    %c1_i32_237 = arith.constant 1 : i32
    %744 = arith.cmpi sgt, %646, %c1_i32_237 : i32
    %745 = vector.broadcast %737 : i32 to vector<1x8xi32>
    %746 = arith.cmpi eq, %462, %745 : vector<1x8xi32>
    %c0_i32_238 = arith.constant 0 : i32
    %747 = vector.broadcast %c0_i32_238 : i32 to vector<1x8xi32>
    %748 = arith.select %746, %504, %747 : vector<1x8xi1>, vector<1x8xi32>
    %749 = vector.shape_cast %748 : vector<1x8xi32> to vector<1x1x8xi32>
    %cst_239 = arith.constant dense<0> : vector<1xi32>
    %750 = vector.multi_reduction <add>, %749, %cst_239 [1, 2] : vector<1x1x8xi32> to vector<1xi32>
    %751 = vector.shape_cast %750 : vector<1xi32> to vector<1x1x1xi32>
    %752 = vector.extract %751[0, 0, 0] : i32 from vector<1x1x1xi32>
    %753 = arith.select %744, %752, %737 : i32
    %c1_i32_240 = arith.constant 1 : i32
    %754 = vector.broadcast %c1_i32_240 : i32 to vector<1x8xi32>
    %755 = arith.cmpi eq, %463, %754 : vector<1x8xi32>
    %756 = vector.broadcast %744 : i1 to vector<1x8xi1>
    %757 = arith.andi %755, %756 : vector<1x8xi1>
    %758 = vector.broadcast %753 : i32 to vector<1x8xi32>
    %759 = arith.select %757, %758, %743 : vector<1x8xi1>, vector<1x8xi32>
    %c0_i32_241 = arith.constant 0 : i32
    %760 = arith.cmpi sgt, %646, %c0_i32_241 : i32
    %761 = vector.broadcast %753 : i32 to vector<1x8xi32>
    %762 = arith.cmpi eq, %462, %761 : vector<1x8xi32>
    %c0_i32_242 = arith.constant 0 : i32
    %763 = vector.broadcast %c0_i32_242 : i32 to vector<1x8xi32>
    %764 = arith.select %762, %482, %763 : vector<1x8xi1>, vector<1x8xi32>
    %765 = vector.shape_cast %764 : vector<1x8xi32> to vector<1x1x8xi32>
    %cst_243 = arith.constant dense<0> : vector<1xi32>
    %766 = vector.multi_reduction <add>, %765, %cst_243 [1, 2] : vector<1x1x8xi32> to vector<1xi32>
    %767 = vector.shape_cast %766 : vector<1xi32> to vector<1x1x1xi32>
    %768 = vector.extract %767[0, 0, 0] : i32 from vector<1x1x1xi32>
    %769 = arith.select %760, %768, %753 : i32
    %c0_i32_244 = arith.constant 0 : i32
    %770 = vector.broadcast %c0_i32_244 : i32 to vector<1x8xi32>
    %771 = arith.cmpi eq, %463, %770 : vector<1x8xi32>
    %772 = vector.broadcast %760 : i1 to vector<1x8xi1>
    %773 = arith.andi %771, %772 : vector<1x8xi1>
    %774 = vector.broadcast %769 : i32 to vector<1x8xi32>
    %775 = arith.select %773, %774, %759 : vector<1x8xi1>, vector<1x8xi32>
    %c0_245 = arith.constant 0 : index
    %c0_246 = arith.constant 0 : index
    %c0_247 = arith.constant 0 : index
    %776 = vector.load %arg27[%c0_245, %c0_246, %c0_247] : memref<1x1x8xi32, #tpu.memory_space<vmem>>, vector<1x1x8xi32>
    %777 = vector.shape_cast %776 : vector<1x1x8xi32> to vector<1x8xi32>
    %778 = vector.shape_cast %775 : vector<1x8xi32> to vector<1x1x8xi32>
    tpu.vector_store %arg27[%c0_245, %c0_246, %c0_247], %778 {strides = array<i32>} : memref<1x1x8xi32, #tpu.memory_space<vmem>>, vector<1x1x8xi32>,
    return
  }
  func.func @transform_0(%arg0: i32, %arg1: memref<2x8xi32, #tpu.memory_space<smem>>) -> (i32, i32, i32) {
    %c0_i32 = arith.constant 0 : i32
    %c0_i32_0 = arith.constant 0 : i32
    %c0_i32_1 = arith.constant 0 : i32
    return %arg0, %c0_i32, %c0_i32_0 : i32, i32, i32
  }
  func.func @transform_1(%arg0: i32, %arg1: memref<2x8xi32, #tpu.memory_space<smem>>) -> (i32, i32, i32) {
    %c0_i32 = arith.constant 0 : i32
    %c0_i32_0 = arith.constant 0 : i32
    %c0_i32_1 = arith.constant 0 : i32
    return %arg0, %c0_i32, %c0_i32_0 : i32, i32, i32
  }
  func.func @transform_2(%arg0: i32, %arg1: memref<2x8xi32, #tpu.memory_space<smem>>) -> (i32, i32) {
    %c0_i32 = arith.constant 0 : i32
    %c0_i32_0 = arith.constant 0 : i32
    %c0_i32_1 = arith.constant 0 : i32
    return %c0_i32, %c0_i32_0 : i32, i32
  }
  func.func @transform_3(%arg0: i32, %arg1: memref<2x8xi32, #tpu.memory_space<smem>>) -> (i32, i32) {
    %c0_i32 = arith.constant 0 : i32
    %c0_i32_0 = arith.constant 0 : i32
    %c0_i32_1 = arith.constant 0 : i32
    return %c0_i32, %c0_i32_0 : i32, i32
  }
  func.func @transform_4(%arg0: i32, %arg1: memref<2x8xi32, #tpu.memory_space<smem>>) -> (i32, i32) {
    %c0_i32 = arith.constant 0 : i32
    %c0_i32_0 = arith.constant 0 : i32
    %c0_i32_1 = arith.constant 0 : i32
    return %c0_i32, %c0_i32_0 : i32, i32
  }
  func.func @transform_5(%arg0: i32, %arg1: memref<2x8xi32, #tpu.memory_space<smem>>) -> (i32, i32) {
    %c0_i32 = arith.constant 0 : i32
    %c0_i32_0 = arith.constant 0 : i32
    %c0_i32_1 = arith.constant 0 : i32
    return %c0_i32, %c0_i32_0 : i32, i32
  }
  func.func @transform_6(%arg0: i32, %arg1: memref<2x8xi32, #tpu.memory_space<smem>>) -> (i32, i32) {
    %c0_i32 = arith.constant 0 : i32
    %c0_i32_0 = arith.constant 0 : i32
    %c0_i32_1 = arith.constant 0 : i32
    return %c0_i32, %c0_i32_0 : i32, i32
  }
  func.func @transform_7(%arg0: i32, %arg1: memref<2x8xi32, #tpu.memory_space<smem>>) -> (i32, i32) {
    %c0_i32 = arith.constant 0 : i32
    %c0_i32_0 = arith.constant 0 : i32
    %c0_i32_1 = arith.constant 0 : i32
    return %c0_i32, %c0_i32_0 : i32, i32
  }
  func.func @transform_8(%arg0: i32, %arg1: memref<2x8xi32, #tpu.memory_space<smem>>) -> (i32, i32) {
    %c0_i32 = arith.constant 0 : i32
    %c0_i32_0 = arith.constant 0 : i32
    %c0_i32_1 = arith.constant 0 : i32
    return %c0_i32, %c0_i32_0 : i32, i32
  }
  func.func @transform_9(%arg0: i32, %arg1: memref<2x8xi32, #tpu.memory_space<smem>>) -> (i32, i32) {
    %c0_i32 = arith.constant 0 : i32
    %c0_i32_0 = arith.constant 0 : i32
    %c0_i32_1 = arith.constant 0 : i32
    return %c0_i32, %c0_i32_0 : i32, i32
  }
  func.func @transform_10(%arg0: i32, %arg1: memref<2x8xi32, #tpu.memory_space<smem>>) -> (i32, i32) {
    %c0_i32 = arith.constant 0 : i32
    %c0_i32_0 = arith.constant 0 : i32
    %c0_i32_1 = arith.constant 0 : i32
    return %c0_i32, %c0_i32_0 : i32, i32
  }
  func.func @transform_11(%arg0: i32, %arg1: memref<2x8xi32, #tpu.memory_space<smem>>) -> (i32, i32) {
    %c0_i32 = arith.constant 0 : i32
    %c0_i32_0 = arith.constant 0 : i32
    %c0_i32_1 = arith.constant 0 : i32
    return %c0_i32, %c0_i32_0 : i32, i32
  }
  func.func @transform_12(%arg0: i32, %arg1: memref<2x8xi32, #tpu.memory_space<smem>>) -> (i32, i32) {
    %c0_i32 = arith.constant 0 : i32
    %c0_i32_0 = arith.constant 0 : i32
    %c0_i32_1 = arith.constant 0 : i32
    return %c0_i32, %c0_i32_0 : i32, i32
  }
  func.func @transform_13(%arg0: i32, %arg1: memref<2x8xi32, #tpu.memory_space<smem>>) -> (i32, i32) {
    %c0_i32 = arith.constant 0 : i32
    %c0_i32_0 = arith.constant 0 : i32
    %c0_i32_1 = arith.constant 0 : i32
    return %c0_i32, %c0_i32_0 : i32, i32
  }
  func.func @transform_14(%arg0: i32, %arg1: memref<2x8xi32, #tpu.memory_space<smem>>) -> (i32, i32) {
    %c0_i32 = arith.constant 0 : i32
    %c0_i32_0 = arith.constant 0 : i32
    %c0_i32_1 = arith.constant 0 : i32
    return %c0_i32, %c0_i32_0 : i32, i32
  }
  func.func @transform_15(%arg0: i32, %arg1: memref<2x8xi32, #tpu.memory_space<smem>>) -> (i32, i32) {
    %c0_i32 = arith.constant 0 : i32
    %c0_i32_0 = arith.constant 0 : i32
    %c0_i32_1 = arith.constant 0 : i32
    return %c0_i32, %c0_i32_0 : i32, i32
  }
  func.func @transform_16(%arg0: i32, %arg1: memref<2x8xi32, #tpu.memory_space<smem>>) -> (i32, i32) {
    %c0_i32 = arith.constant 0 : i32
    %c0_i32_0 = arith.constant 0 : i32
    %c0_i32_1 = arith.constant 0 : i32
    return %c0_i32, %c0_i32_0 : i32, i32
  }
  func.func @transform_17(%arg0: i32, %arg1: memref<2x8xi32, #tpu.memory_space<smem>>) -> (i32, i32) {
    %c0_i32 = arith.constant 0 : i32
    %c0_i32_0 = arith.constant 0 : i32
    %c0_i32_1 = arith.constant 0 : i32
    return %c0_i32, %c0_i32_0 : i32, i32
  }
  func.func @transform_18(%arg0: i32, %arg1: memref<2x8xi32, #tpu.memory_space<smem>>) -> (i32, i32) {
    %c0_i32 = arith.constant 0 : i32
    %c0_i32_0 = arith.constant 0 : i32
    %c0_i32_1 = arith.constant 0 : i32
    return %c0_i32, %c0_i32_0 : i32, i32
  }
  func.func @transform_19(%arg0: i32, %arg1: memref<2x8xi32, #tpu.memory_space<smem>>) -> (i32, i32) {
    %c0_i32 = arith.constant 0 : i32
    %c0_i32_0 = arith.constant 0 : i32
    %c0_i32_1 = arith.constant 0 : i32
    return %c0_i32, %c0_i32_0 : i32, i32
  }
  func.func @transform_20(%arg0: i32, %arg1: memref<2x8xi32, #tpu.memory_space<smem>>) -> (i32, i32) {
    %c0_i32 = arith.constant 0 : i32
    %c0_i32_0 = arith.constant 0 : i32
    %c0_i32_1 = arith.constant 0 : i32
    return %c0_i32, %c0_i32_0 : i32, i32
  }
  func.func @transform_21(%arg0: i32, %arg1: memref<2x8xi32, #tpu.memory_space<smem>>) -> (i32, i32) {
    %c0_i32 = arith.constant 0 : i32
    %c0_i32_0 = arith.constant 0 : i32
    %c0_i32_1 = arith.constant 0 : i32
    return %c0_i32, %c0_i32_0 : i32, i32
  }
  func.func @transform_22(%arg0: i32, %arg1: memref<2x8xi32, #tpu.memory_space<smem>>) -> (i32, i32) {
    %c0_i32 = arith.constant 0 : i32
    %c0_i32_0 = arith.constant 0 : i32
    %c0_i32_1 = arith.constant 0 : i32
    return %c0_i32, %c0_i32_0 : i32, i32
  }
  func.func @transform_23(%arg0: i32, %arg1: memref<2x8xi32, #tpu.memory_space<smem>>) -> (i32, i32) {
    %c0_i32 = arith.constant 0 : i32
    %c0_i32_0 = arith.constant 0 : i32
    %c0_i32_1 = arith.constant 0 : i32
    return %c0_i32, %c0_i32_0 : i32, i32
  }
  func.func @transform_24(%arg0: i32, %arg1: memref<2x8xi32, #tpu.memory_space<smem>>) -> (i32, i32) {
    %c0_i32 = arith.constant 0 : i32
    %c0_i32_0 = arith.constant 0 : i32
    %c0_i32_1 = arith.constant 0 : i32
    return %c0_i32, %c0_i32_0 : i32, i32
  }
  func.func @transform_25(%arg0: i32, %arg1: memref<2x8xi32, #tpu.memory_space<smem>>) -> (i32, i32, i32) {
    %c0_i32 = arith.constant 0 : i32
    %c0_i32_0 = arith.constant 0 : i32
    %c0_i32_1 = arith.constant 0 : i32
    return %arg0, %c0_i32, %c0_i32_0 : i32, i32, i32
  }
}

</mosaic_0001>

<llo_original>
// kernel: tpu_custom_call.1
$region0: #{tpu_custom_call.1}
  #allocation0 [shape = 'u32[]', space=smem, size = 0x4, offset = 0x4, fixed_abs, tag = 'smem constant byte address 0x4 - core index']
  #allocation1 [shape = 'u32[144,128]{1,0:T(1,128)}', space=vmem, size = 0x12000, scoped, tag = 'internal scratch']
  #allocation2 [shape = 'f32[2,8,32]{2,1,0:T(8,128)}', space=vmem, size = 0x2000, scoped, tag = 'scratch operand']
  #allocation3 [shape = 's32[1]{0}', space=sflag, size = 0x4, scoped, tag = 'scoped memory for tpu_custom_call.1']
  #allocation4 [shape = 'u8[1024]{0}', space=smem, size = 0x400, scoped, tag = 'prefetched SMEM operand 0']
  %s0 = inlined_call_operand.hbm [shape: s32[2,8], index: 0, kind: input, shape index: {}]
  %s1 = inlined_call_operand.hbm [shape: f32[2,8,32], index: 1, kind: input, shape index: {}]
  %s2 = inlined_call_operand.hbm [shape: f32[2,1,8], index: 2, kind: input, shape index: {}]
  %s3 = inlined_call_operand.vmem [shape: f32[1,32], index: 3, kind: input, shape index: {}]
  %s4 = inlined_call_operand.hbm [shape: f32[1,32], index: 4, kind: input, shape index: {}]
  %s5 = inlined_call_operand.vmem [shape: f32[32,96], index: 5, kind: input, shape index: {}]
  %s6 = inlined_call_operand.hbm [shape: f32[1,96], index: 6, kind: input, shape index: {}]
  %s7 = inlined_call_operand.hbm [shape: f32[32,32], index: 7, kind: input, shape index: {}]
  %s8 = inlined_call_operand.hbm [shape: f32[1,32], index: 8, kind: input, shape index: {}]
  %s9 = inlined_call_operand.hbm [shape: f32[1,32], index: 9, kind: input, shape index: {}]
  %s10 = inlined_call_operand.hbm [shape: f32[1,32], index: 10, kind: input, shape index: {}]
  %s11 = inlined_call_operand.hbm [shape: f32[32,128], index: 11, kind: input, shape index: {}]
  %s12 = inlined_call_operand.vmem [shape: f32[1,128], index: 12, kind: input, shape index: {}]
  %s13 = inlined_call_operand.vmem [shape: f32[128,32], index: 13, kind: input, shape index: {}]
  %s14 = inlined_call_operand.vmem [shape: f32[1,32], index: 14, kind: input, shape index: {}]
  %s15 = inlined_call_operand.vmem [shape: f32[1,32], index: 15, kind: input, shape index: {}]
  %s16 = inlined_call_operand.vmem [shape: f32[1,32], index: 16, kind: input, shape index: {}]
  %s17 = inlined_call_operand.vmem [shape: f32[32,256], index: 17, kind: input, shape index: {}]
  %s18 = inlined_call_operand.vmem [shape: f32[64,256], index: 18, kind: input, shape index: {}]
  %s19 = inlined_call_operand.vmem [shape: f32[1,256], index: 19, kind: input, shape index: {}]
  %s20 = inlined_call_operand.vmem [shape: f32[32,8], index: 20, kind: input, shape index: {}]
  %s21 = inlined_call_operand.vmem [shape: f32[32,8], index: 21, kind: input, shape index: {}]
  %s22 = inlined_call_operand.vmem [shape: f32[1,8], index: 22, kind: input, shape index: {}]
  %s23 = inlined_call_operand.vmem [shape: f32[8,8], index: 23, kind: input, shape index: {}]
  %s24 = inlined_call_operand.vmem [shape: f32[1,8], index: 24, kind: input, shape index: {}]
  %s25 = inlined_call_operand.vmem [shape: f32[1,8], index: 25, kind: input, shape index: {}]
  %s26 = inlined_call_operand.hbm [shape: s32[2,1,8], index: 26, kind: output, shape index: {}]
  %s27 = sld [smem:[#allocation0]]
  $region169: #{tpu_custom_call.1} parent=0
    _
  %s29 = ssub.s32 1, %s27
  %s30 = scalar_select 0, %s29, %s27
  %32 = dma.hbm_to_smem %s0, 32, [#allocation4], [#allocation3]
  %33 = dma.done [#allocation3], 32
  %34 = sfence
  $region1: #{tpu_custom_call.1} parent=0
    #allocation5 [shape = 'u8[8192]{0}', space=vmem, size = 0x2000, scoped, tag = 'input window, operand 1']
    #allocation6 [shape = 's32[2]{0}', space=sflag, size = 0x8, scoped, tag = 'scoped memory for tpu_custom_call.1']
    #allocation7 [shape = 's32[2]{0}', space=sflag, size = 0x8, scoped, tag = 'scoped memory for tpu_custom_call.1']
    #allocation8 [shape = 'u8[1024]{0}', space=vmem, size = 0x400, scoped, tag = 'input window, operand 2']
    #allocation9 [shape = 's32[2]{0}', space=sflag, size = 0x8, scoped, tag = 'scoped memory for tpu_custom_call.1']
    #allocation10 [shape = 'u8[512]{0}', space=vmem, size = 0x400, scoped, tag = 'input window, operand 4, single buffered']
    #allocation11 [shape = 'u8[512]{0}', space=vmem, size = 0x400, scoped, tag = 'input window, operand 6, single buffered']
    #allocation12 [shape = 's32[1]{0}', space=sflag, size = 0x4, scoped, tag = 'scoped memory for tpu_custom_call.1']
    #allocation13 [shape = 'u8[16384]{0}', space=vmem, size = 0x4000, scoped, tag = 'input window, operand 7, single buffered']
    #allocation14 [shape = 'u8[512]{0}', space=vmem, size = 0x400, scoped, tag = 'input window, operand 8, single buffered']
    #allocation15 [shape = 's32[1]{0}', space=sflag, size = 0x4, scoped, tag = 'scoped memory for tpu_custom_call.1']
    #allocation16 [shape = 'u8[512]{0}', space=vmem, size = 0x400, scoped, tag = 'input window, operand 9, single buffered']
    #allocation17 [shape = 'u8[512]{0}', space=vmem, size = 0x400, scoped, tag = 'input window, operand 10, single buffered']
    #allocation18 [shape = 's32[1]{0}', space=sflag, size = 0x4, scoped, tag = 'scoped memory for tpu_custom_call.1']
    #allocation19 [shape = 'u8[16384]{0}', space=vmem, size = 0x4000, scoped, tag = 'input window, operand 11, single buffered']
    #allocation20 [shape = 'u8[1024]{0}', space=vmem, size = 0x400, scoped, tag = 'output window, operand 0']
    %35 = vsyncpa [#allocation6], 0
    %s36 = scalar_lea.sflag [#allocation6], 1
    %37 = vsyncpa %s36, 0
    %38 = vsyncpa [#allocation9], 0
    %s39 = scalar_lea.sflag [#allocation9], 1
    %40 = vsyncpa %s39, 0
    %41 = vsyncpa [#allocation12], 0
    %42 = vsyncpa [#allocation15], 0
    %43 = vsyncpa [#allocation18], 0
    %44 = vsyncpa [#allocation7], 0
    %s45 = scalar_lea.sflag [#allocation7], 1
    %46 = vsyncpa %s45, 0
    loop: start=0, step=1, limit=4
    $region2: #{tpu_custom_call.1} parent=1 // loop_pre_header
      _
    $region3: #{tpu_custom_call.1} parent=1 // loop_header
      %s48 = sphi 0, %s52
      %p49 = scmp.ge.s32.totalorder %s48, 4
      %s58 = sphi 0, %s60
      %s61 = sphi 0, %s58
      %s62 = sphi 0, %s61
      %s78 = sphi 0, %s62
      %s84 = sphi 0, %s86
      %s87 = sphi 0, %s84
      %s88 = sphi 0, %s87
      %s104 = sphi 0, %s88
      %s108 = sphi 0, %s108
      %s110 = sphi 0, %s108
      %s111 = sphi 0, %s110
      %s125 = sphi 0, %s111
      %s129 = sphi 0, %s129
      %s131 = sphi 0, %s129
      %s132 = sphi 0, %s131
      %s146 = sphi 0, %s132
      %s150 = sphi 0, %s150
      %s152 = sphi 0, %s150
      %s153 = sphi 0, %s152
      %s167 = sphi 0, %s153
      %s171 = sphi 0, %s171
      %s173 = sphi 0, %s171
      %s174 = sphi 0, %s173
      %s188 = sphi 0, %s174
      %s192 = sphi 0, %s192
      %s194 = sphi 0, %s192
      %s195 = sphi 0, %s194
      %s209 = sphi 0, %s195
      %s213 = sphi 0, %s213
      %s215 = sphi 0, %s213
      %s216 = sphi 0, %s215
      %s230 = sphi 0, %s216
      %s234 = sphi 0, %s234
      %s236 = sphi 0, %s234
      %s237 = sphi 0, %s236
      %s251 = sphi 0, %s237
      %s255 = sphi 0, %s255
      %s257 = sphi 0, %s255
      %s258 = sphi 0, %s257
      %s272 = sphi 0, %s258
      %s276 = sphi 0, %s276
      %s278 = sphi 0, %s276
      %s279 = sphi 0, %s278
      %s293 = sphi 0, %s279
      %s297 = sphi 0, %s297
      %s299 = sphi 0, %s297
      %s300 = sphi 0, %s299
      %s314 = sphi 0, %s300
      %s318 = sphi 0, %s318
      %s320 = sphi 0, %s318
      %s321 = sphi 0, %s320
      %s335 = sphi 0, %s321
      %s339 = sphi 0, %s339
      %s341 = sphi 0, %s339
      %s342 = sphi 0, %s341
      %s356 = sphi 0, %s342
      %s360 = sphi 0, %s360
      %s362 = sphi 0, %s360
      %s363 = sphi 0, %s362
      %s377 = sphi 0, %s363
      %s381 = sphi 0, %s381
      %s383 = sphi 0, %s381
      %s384 = sphi 0, %s383
      %s398 = sphi 0, %s384
      %s402 = sphi 0, %s402
      %s404 = sphi 0, %s402
      %s405 = sphi 0, %s404
      %s419 = sphi 0, %s405
      %s423 = sphi 0, %s423
      %s425 = sphi 0, %s423
      %s426 = sphi 0, %s425
      %s440 = sphi 0, %s426
      %s444 = sphi 0, %s444
      %s446 = sphi 0, %s444
      %s447 = sphi 0, %s446
      %s461 = sphi 0, %s447
      %s465 = sphi 0, %s465
      %s467 = sphi 0, %s465
      %s468 = sphi 0, %s467
      %s482 = sphi 0, %s468
      %s486 = sphi 0, %s486
      %s488 = sphi 0, %s486
      %s489 = sphi 0, %s488
      %s503 = sphi 0, %s489
      %s507 = sphi 0, %s507
      %s509 = sphi 0, %s507
      %s510 = sphi 0, %s509
      %s524 = sphi 0, %s510
      %s528 = sphi 0, %s528
      %s530 = sphi 0, %s528
      %s531 = sphi 0, %s530
      %s545 = sphi 0, %s531
      %s549 = sphi 0, %s549
      %s551 = sphi 0, %s549
      %s552 = sphi 0, %s551
      %s566 = sphi 0, %s552
      %s570 = sphi 0, %s570
      %s572 = sphi 0, %s570
      %s573 = sphi 0, %s572
      %s587 = sphi 0, %s573
      %s593 = sphi 0, %s595
      %s596 = sphi 0, %s593
      %s597 = sphi 0, %s596
      %s613 = sphi 0, %s597
    $region4: #{tpu_custom_call.1} parent=1 // loop_header_branch
      %51 = sbr.rel (%p49) target = $region8
    $region5: #{tpu_custom_call.1} parent=1 // loop_body
      %s53 = ssub.s32 %s48, 1
      %s54 = ssub.s32 %s48, 2
      %s55 = sadd.s32 %s48, 1
      %s56 = ssub.s32 %s48, %s55
      %p57 = scmp.eq.s32.totalorder %s56, 0
      %s59 = sadd.s32 %s58, 1
      %s60 = scalar_select %p57, %s58, %s59
      %p63 = pneg %p57
      %p64 = scmp.eq.s32.totalorder %s48, 1
      %p65 = por %p63, %p64
      %p66 = scmp.ne.s32.totalorder %s58, %s61
      %p67 = scmp.eq.s32.totalorder %s48, 0
      %p68 = por %p66, %p67
      %p69 = scmp.ne.s32.totalorder %s58, %s61
      %p70 = scmp.eq.s32.totalorder %s53, 1
      %p71 = por %p69, %p70
      %p72 = scmp.ne.s32.totalorder %s61, %s62
      %p73 = scmp.eq.s32.totalorder %s53, 0
      %p74 = por %p72, %p73
      %p75 = scmp.ne.s32.totalorder %s61, %s62
      %p76 = scmp.eq.s32.totalorder %s54, 1
      %p77 = por %p75, %p76
      %p79 = scmp.ne.s32.totalorder %s62, %s78
      %p80 = scmp.eq.s32.totalorder %s54, 0
      %p81 = por %p79, %p80
      %s82 = ssub.s32 %s48, %s55
      %p83 = scmp.eq.s32.totalorder %s82, 0
      %s85 = sadd.s32 %s84, 1
      %s86 = scalar_select %p83, %s84, %s85
      %p89 = pneg %p83
      %p90 = scmp.eq.s32.totalorder %s48, 1
      %p91 = por %p89, %p90
      %p92 = scmp.ne.s32.totalorder %s84, %s87
      %p93 = scmp.eq.s32.totalorder %s48, 0
      %p94 = por %p92, %p93
      %p95 = scmp.ne.s32.totalorder %s84, %s87
      %p96 = scmp.eq.s32.totalorder %s53, 1
      %p97 = por %p95, %p96
      %p98 = scmp.ne.s32.totalorder %s87, %s88
      %p99 = scmp.eq.s32.totalorder %s53, 0
      %p100 = por %p98, %p99
      %p101 = scmp.ne.s32.totalorder %s87, %s88
      %p102 = scmp.eq.s32.totalorder %s54, 1
      %p103 = por %p101, %p102
      %p105 = scmp.ne.s32.totalorder %s88, %s104
      %p106 = scmp.eq.s32.totalorder %s54, 0
      %p107 = por %p105, %p106
      %s109 = sadd.s32 %s108, 1
      %p112 = scmp.eq.s32.totalorder %s48, 1
      %p113 = scmp.ne.s32.totalorder %s108, %s110
      %p114 = scmp.eq.s32.totalorder %s48, 0
      %p115 = por %p113, %p114
      %p116 = scmp.ne.s32.totalorder %s108, %s110
      %p117 = scmp.eq.s32.totalorder %s53, 1
      %p118 = por %p116, %p117
      %p119 = scmp.ne.s32.totalorder %s110, %s111
      %p120 = scmp.eq.s32.totalorder %s53, 0
      %p121 = por %p119, %p120
      %p122 = scmp.ne.s32.totalorder %s110, %s111
      %p123 = scmp.eq.s32.totalorder %s54, 1
      %p124 = por %p122, %p123
      %p126 = scmp.ne.s32.totalorder %s111, %s125
      %p127 = scmp.eq.s32.totalorder %s54, 0
      %p128 = por %p126, %p127
      %s130 = sadd.s32 %s129, 1
      %p133 = scmp.eq.s32.totalorder %s48, 1
      %p134 = scmp.ne.s32.totalorder %s129, %s131
      %p135 = scmp.eq.s32.totalorder %s48, 0
      %p136 = por %p134, %p135
      %p137 = scmp.ne.s32.totalorder %s129, %s131
      %p138 = scmp.eq.s32.totalorder %s53, 1
      %p139 = por %p137, %p138
      %p140 = scmp.ne.s32.totalorder %s131, %s132
      %p141 = scmp.eq.s32.totalorder %s53, 0
      %p142 = por %p140, %p141
      %p143 = scmp.ne.s32.totalorder %s131, %s132
      %p144 = scmp.eq.s32.totalorder %s54, 1
      %p145 = por %p143, %p144
      %p147 = scmp.ne.s32.totalorder %s132, %s146
      %p148 = scmp.eq.s32.totalorder %s54, 0
      %p149 = por %p147, %p148
      %s151 = sadd.s32 %s150, 1
      %p154 = scmp.eq.s32.totalorder %s48, 1
      %p155 = scmp.ne.s32.totalorder %s150, %s152
      %p156 = scmp.eq.s32.totalorder %s48, 0
      %p157 = por %p155, %p156
      %p158 = scmp.ne.s32.totalorder %s150, %s152
      %p159 = scmp.eq.s32.totalorder %s53, 1
      %p160 = por %p158, %p159
      %p161 = scmp.ne.s32.totalorder %s152, %s153
      %p162 = scmp.eq.s32.totalorder %s53, 0
      %p163 = por %p161, %p162
      %p164 = scmp.ne.s32.totalorder %s152, %s153
      %p165 = scmp.eq.s32.totalorder %s54, 1
      %p166 = por %p164, %p165
      %p168 = scmp.ne.s32.totalorder %s153, %s167
      %p169 = scmp.eq.s32.totalorder %s54, 0
      %p170 = por %p168, %p169
      %s172 = sadd.s32 %s171, 1
      %p175 = scmp.eq.s32.totalorder %s48, 1
      %p176 = scmp.ne.s32.totalorder %s171, %s173
      %p177 = scmp.eq.s32.totalorder %s48, 0
      %p178 = por %p176, %p177
      %p179 = scmp.ne.s32.totalorder %s171, %s173
      %p180 = scmp.eq.s32.totalorder %s53, 1
      %p181 = por %p179, %p180
      %p182 = scmp.ne.s32.totalorder %s173, %s174
      %p183 = scmp.eq.s32.totalorder %s53, 0
      %p184 = por %p182, %p183
      %p185 = scmp.ne.s32.totalorder %s173, %s174
      %p186 = scmp.eq.s32.totalorder %s54, 1
      %p187 = por %p185, %p186
      %p189 = scmp.ne.s32.totalorder %s174, %s188
      %p190 = scmp.eq.s32.totalorder %s54, 0
      %p191 = por %p189, %p190
      %s193 = sadd.s32 %s192, 1
      %p196 = scmp.eq.s32.totalorder %s48, 1
      %p197 = scmp.ne.s32.totalorder %s192, %s194
      %p198 = scmp.eq.s32.totalorder %s48, 0
      %p199 = por %p197, %p198
      %p200 = scmp.ne.s32.totalorder %s192, %s194
      %p201 = scmp.eq.s32.totalorder %s53, 1
      %p202 = por %p200, %p201
      %p203 = scmp.ne.s32.totalorder %s194, %s195
      %p204 = scmp.eq.s32.totalorder %s53, 0
      %p205 = por %p203, %p204
      %p206 = scmp.ne.s32.totalorder %s194, %s195
      %p207 = scmp.eq.s32.totalorder %s54, 1
      %p208 = por %p206, %p207
      %p210 = scmp.ne.s32.totalorder %s195, %s209
      %p211 = scmp.eq.s32.totalorder %s54, 0
      %p212 = por %p210, %p211
      %s214 = sadd.s32 %s213, 1
      %p217 = scmp.eq.s32.totalorder %s48, 1
      %p218 = scmp.ne.s32.totalorder %s213, %s215
      %p219 = scmp.eq.s32.totalorder %s48, 0
      %p220 = por %p218, %p219
      %p221 = scmp.ne.s32.totalorder %s213, %s215
      %p222 = scmp.eq.s32.totalorder %s53, 1
      %p223 = por %p221, %p222
      %p224 = scmp.ne.s32.totalorder %s215, %s216
      %p225 = scmp.eq.s32.totalorder %s53, 0
      %p226 = por %p224, %p225
      %p227 = scmp.ne.s32.totalorder %s215, %s216
      %p228 = scmp.eq.s32.totalorder %s54, 1
      %p229 = por %p227, %p228
      %p231 = scmp.ne.s32.totalorder %s216, %s230
      %p232 = scmp.eq.s32.totalorder %s54, 0
      %p233 = por %p231, %p232
      %s235 = sadd.s32 %s234, 1
      %p238 = scmp.eq.s32.totalorder %s48, 1
      %p239 = scmp.ne.s32.totalorder %s234, %s236
      %p240 = scmp.eq.s32.totalorder %s48, 0
      %p241 = por %p239, %p240
      %p242 = scmp.ne.s32.totalorder %s234, %s236
      %p243 = scmp.eq.s32.totalorder %s53, 1
      %p244 = por %p242, %p243
      %p245 = scmp.ne.s32.totalorder %s236, %s237
      %p246 = scmp.eq.s32.totalorder %s53, 0
      %p247 = por %p245, %p246
      %p248 = scmp.ne.s32.totalorder %s236, %s237
      %p249 = scmp.eq.s32.totalorder %s54, 1
      %p250 = por %p248, %p249
      %p252 = scmp.ne.s32.totalorder %s237, %s251
      %p253 = scmp.eq.s32.totalorder %s54, 0
      %p254 = por %p252, %p253
      %s256 = sadd.s32 %s255, 1
      %p259 = scmp.eq.s32.totalorder %s48, 1
      %p260 = scmp.ne.s32.totalorder %s255, %s257
      %p261 = scmp.eq.s32.totalorder %s48, 0
      %p262 = por %p260, %p261
      %p263 = scmp.ne.s32.totalorder %s255, %s257
      %p264 = scmp.eq.s32.totalorder %s53, 1
      %p265 = por %p263, %p264
      %p266 = scmp.ne.s32.totalorder %s257, %s258
      %p267 = scmp.eq.s32.totalorder %s53, 0
      %p268 = por %p266, %p267
      %p269 = scmp.ne.s32.totalorder %s257, %s258
      %p270 = scmp.eq.s32.totalorder %s54, 1
      %p271 = por %p269, %p270
      %p273 = scmp.ne.s32.totalorder %s258, %s272
      %p274 = scmp.eq.s32.totalorder %s54, 0
      %p275 = por %p273, %p274
      %s277 = sadd.s32 %s276, 1
      %p280 = scmp.eq.s32.totalorder %s48, 1
      %p281 = scmp.ne.s32.totalorder %s276, %s278
      %p282 = scmp.eq.s32.totalorder %s48, 0
      %p283 = por %p281, %p282
      %p284 = scmp.ne.s32.totalorder %s276, %s278
      %p285 = scmp.eq.s32.totalorder %s53, 1
      %p286 = por %p284, %p285
      %p287 = scmp.ne.s32.totalorder %s278, %s279
      %p288 = scmp.eq.s32.totalorder %s53, 0
      %p289 = por %p287, %p288
      %p290 = scmp.ne.s32.totalorder %s278, %s279
      %p291 = scmp.eq.s32.totalorder %s54, 1
      %p292 = por %p290, %p291
      %p294 = scmp.ne.s32.totalorder %s279, %s293
      %p295 = scmp.eq.s32.totalorder %s54, 0
      %p296 = por %p294, %p295
      %s298 = sadd.s32 %s297, 1
      %p301 = scmp.eq.s32.totalorder %s48, 1
      %p302 = scmp.ne.s32.totalorder %s297, %s299
      %p303 = scmp.eq.s32.totalorder %s48, 0
      %p304 = por %p302, %p303
      %p305 = scmp.ne.s32.totalorder %s297, %s299
      %p306 = scmp.eq.s32.totalorder %s53, 1
      %p307 = por %p305, %p306
      %p308 = scmp.ne.s32.totalorder %s299, %s300
      %p309 = scmp.eq.s32.totalorder %s53, 0
      %p310 = por %p308, %p309
      %p311 = scmp.ne.s32.totalorder %s299, %s300
      %p312 = scmp.eq.s32.totalorder %s54, 1
      %p313 = por %p311, %p312
      %p315 = scmp.ne.s32.totalorder %s300, %s314
      %p316 = scmp.eq.s32.totalorder %s54, 0
      %p317 = por %p315, %p316
      %s319 = sadd.s32 %s318, 1
      %p322 = scmp.eq.s32.totalorder %s48, 1
      %p323 = scmp.ne.s32.totalorder %s318, %s320
      %p324 = scmp.eq.s32.totalorder %s48, 0
      %p325 = por %p323, %p324
      %p326 = scmp.ne.s32.totalorder %s318, %s320
      %p327 = scmp.eq.s32.totalorder %s53, 1
      %p328 = por %p326, %p327
      %p329 = scmp.ne.s32.totalorder %s320, %s321
      %p330 = scmp.eq.s32.totalorder %s53, 0
      %p331 = por %p329, %p330
      %p332 = scmp.ne.s32.totalorder %s320, %s321
      %p333 = scmp.eq.s32.totalorder %s54, 1
      %p334 = por %p332, %p333
      %p336 = scmp.ne.s32.totalorder %s321, %s335
      %p337 = scmp.eq.s32.totalorder %s54, 0
      %p338 = por %p336, %p337
      %s340 = sadd.s32 %s339, 1
      %p343 = scmp.eq.s32.totalorder %s48, 1
      %p344 = scmp.ne.s32.totalorder %s339, %s341
      %p345 = scmp.eq.s32.totalorder %s48, 0
      %p346 = por %p344, %p345
      %p347 = scmp.ne.s32.totalorder %s339, %s341
      %p348 = scmp.eq.s32.totalorder %s53, 1
      %p349 = por %p347, %p348
      %p350 = scmp.ne.s32.totalorder %s341, %s342
      %p351 = scmp.eq.s32.totalorder %s53, 0
      %p352 = por %p350, %p351
      %p353 = scmp.ne.s32.totalorder %s341, %s342
      %p354 = scmp.eq.s32.totalorder %s54, 1
      %p355 = por %p353, %p354
      %p357 = scmp.ne.s32.totalorder %s342, %s356
      %p358 = scmp.eq.s32.totalorder %s54, 0
      %p359 = por %p357, %p358
      %s361 = sadd.s32 %s360, 1
      %p364 = scmp.eq.s32.totalorder %s48, 1
      %p365 = scmp.ne.s32.totalorder %s360, %s362
      %p366 = scmp.eq.s32.totalorder %s48, 0
      %p367 = por %p365, %p366
      %p368 = scmp.ne.s32.totalorder %s360, %s362
      %p369 = scmp.eq.s32.totalorder %s53, 1
      %p370 = por %p368, %p369
      %p371 = scmp.ne.s32.totalorder %s362, %s363
      %p372 = scmp.eq.s32.totalorder %s53, 0
      %p373 = por %p371, %p372
      %p374 = scmp.ne.s32.totalorder %s362, %s363
      %p375 = scmp.eq.s32.totalorder %s54, 1
      %p376 = por %p374, %p375
      %p378 = scmp.ne.s32.totalorder %s363, %s377
      %p379 = scmp.eq.s32.totalorder %s54, 0
      %p380 = por %p378, %p379
      %s382 = sadd.s32 %s381, 1
      %p385 = scmp.eq.s32.totalorder %s48, 1
      %p386 = scmp.ne.s32.totalorder %s381, %s383
      %p387 = scmp.eq.s32.totalorder %s48, 0
      %p388 = por %p386, %p387
      %p389 = scmp.ne.s32.totalorder %s381, %s383
      %p390 = scmp.eq.s32.totalorder %s53, 1
      %p391 = por %p389, %p390
      %p392 = scmp.ne.s32.totalorder %s383, %s384
      %p393 = scmp.eq.s32.totalorder %s53, 0
      %p394 = por %p392, %p393
      %p395 = scmp.ne.s32.totalorder %s383, %s384
      %p396 = scmp.eq.s32.totalorder %s54, 1
      %p397 = por %p395, %p396
      %p399 = scmp.ne.s32.totalorder %s384, %s398
      %p400 = scmp.eq.s32.totalorder %s54, 0
      %p401 = por %p399, %p400
      %s403 = sadd.s32 %s402, 1
      %p406 = scmp.eq.s32.totalorder %s48, 1
      %p407 = scmp.ne.s32.totalorder %s402, %s404
      %p408 = scmp.eq.s32.totalorder %s48, 0
      %p409 = por %p407, %p408
      %p410 = scmp.ne.s32.totalorder %s402, %s404
      %p411 = scmp.eq.s32.totalorder %s53, 1
      %p412 = por %p410, %p411
      %p413 = scmp.ne.s32.totalorder %s404, %s405
      %p414 = scmp.eq.s32.totalorder %s53, 0
      %p415 = por %p413, %p414
      %p416 = scmp.ne.s32.totalorder %s404, %s405
      %p417 = scmp.eq.s32.totalorder %s54, 1
      %p418 = por %p416, %p417
      %p420 = scmp.ne.s32.totalorder %s405, %s419
      %p421 = scmp.eq.s32.totalorder %s54, 0
      %p422 = por %p420, %p421
      %s424 = sadd.s32 %s423, 1
      %p427 = scmp.eq.s32.totalorder %s48, 1
      %p428 = scmp.ne.s32.totalorder %s423, %s425
      %p429 = scmp.eq.s32.totalorder %s48, 0
      %p430 = por %p428, %p429
      %p431 = scmp.ne.s32.totalorder %s423, %s425
      %p432 = scmp.eq.s32.totalorder %s53, 1
      %p433 = por %p431, %p432
      %p434 = scmp.ne.s32.totalorder %s425, %s426
      %p435 = scmp.eq.s32.totalorder %s53, 0
      %p436 = por %p434, %p435
      %p437 = scmp.ne.s32.totalorder %s425, %s426
      %p438 = scmp.eq.s32.totalorder %s54, 1
      %p439 = por %p437, %p438
      %p441 = scmp.ne.s32.totalorder %s426, %s440
      %p442 = scmp.eq.s32.totalorder %s54, 0
      %p443 = por %p441, %p442
      %s445 = sadd.s32 %s444, 1
      %p448 = scmp.eq.s32.totalorder %s48, 1
      %p449 = scmp.ne.s32.totalorder %s444, %s446
      %p450 = scmp.eq.s32.totalorder %s48, 0
      %p451 = por %p449, %p450
      %p452 = scmp.ne.s32.totalorder %s444, %s446
      %p453 = scmp.eq.s32.totalorder %s53, 1
      %p454 = por %p452, %p453
      %p455 = scmp.ne.s32.totalorder %s446, %s447
      %p456 = scmp.eq.s32.totalorder %s53, 0
      %p457 = por %p455, %p456
      %p458 = scmp.ne.s32.totalorder %s446, %s447
      %p459 = scmp.eq.s32.totalorder %s54, 1
      %p460 = por %p458, %p459
      %p462 = scmp.ne.s32.totalorder %s447, %s461
      %p463 = scmp.eq.s32.totalorder %s54, 0
      %p464 = por %p462, %p463
      %s466 = sadd.s32 %s465, 1
      %p469 = scmp.eq.s32.totalorder %s48, 1
      %p470 = scmp.ne.s32.totalorder %s465, %s467
      %p471 = scmp.eq.s32.totalorder %s48, 0
      %p472 = por %p470, %p471
      %p473 = scmp.ne.s32.totalorder %s465, %s467
      %p474 = scmp.eq.s32.totalorder %s53, 1
      %p475 = por %p473, %p474
      %p476 = scmp.ne.s32.totalorder %s467, %s468
      %p477 = scmp.eq.s32.totalorder %s53, 0
      %p478 = por %p476, %p477
      %p479 = scmp.ne.s32.totalorder %s467, %s468
      %p480 = scmp.eq.s32.totalorder %s54, 1
      %p481 = por %p479, %p480
      %p483 = scmp.ne.s32.totalorder %s468, %s482
      %p484 = scmp.eq.s32.totalorder %s54, 0
      %p485 = por %p483, %p484
      %s487 = sadd.s32 %s486, 1
      %p490 = scmp.eq.s32.totalorder %s48, 1
      %p491 = scmp.ne.s32.totalorder %s486, %s488
      %p492 = scmp.eq.s32.totalorder %s48, 0
      %p493 = por %p491, %p492
      %p494 = scmp.ne.s32.totalorder %s486, %s488
      %p495 = scmp.eq.s32.totalorder %s53, 1
      %p496 = por %p494, %p495
      %p497 = scmp.ne.s32.totalorder %s488, %s489
      %p498 = scmp.eq.s32.totalorder %s53, 0
      %p499 = por %p497, %p498
      %p500 = scmp.ne.s32.totalorder %s488, %s489
      %p501 = scmp.eq.s32.totalorder %s54, 1
      %p502 = por %p500, %p501
      %p504 = scmp.ne.s32.totalorder %s489, %s503
      %p505 = scmp.eq.s32.totalorder %s54, 0
      %p506 = por %p504, %p505
      %s508 = sadd.s32 %s507, 1
      %p511 = scmp.eq.s32.totalorder %s48, 1
      %p512 = scmp.ne.s32.totalorder %s507, %s509
      %p513 = scmp.eq.s32.totalorder %s48, 0
      %p514 = por %p512, %p513
      %p515 = scmp.ne.s32.totalorder %s507, %s509
      %p516 = scmp.eq.s32.totalorder %s53, 1
      %p517 = por %p515, %p516
      %p518 = scmp.ne.s32.totalorder %s509, %s510
      %p519 = scmp.eq.s32.totalorder %s53, 0
      %p520 = por %p518, %p519
      %p521 = scmp.ne.s32.totalorder %s509, %s510
      %p522 = scmp.eq.s32.totalorder %s54, 1
      %p523 = por %p521, %p522
      %p525 = scmp.ne.s32.totalorder %s510, %s524
      %p526 = scmp.eq.s32.totalorder %s54, 0
      %p527 = por %p525, %p526
      %s529 = sadd.s32 %s528, 1
      %p532 = scmp.eq.s32.totalorder %s48, 1
      %p533 = scmp.ne.s32.totalorder %s528, %s530
      %p534 = scmp.eq.s32.totalorder %s48, 0
      %p535 = por %p533, %p534
      %p536 = scmp.ne.s32.totalorder %s528, %s530
      %p537 = scmp.eq.s32.totalorder %s53, 1
      %p538 = por %p536, %p537
      %p539 = scmp.ne.s32.totalorder %s530, %s531
      %p540 = scmp.eq.s32.totalorder %s53, 0
      %p541 = por %p539, %p540
      %p542 = scmp.ne.s32.totalorder %s530, %s531
      %p543 = scmp.eq.s32.totalorder %s54, 1
      %p544 = por %p542, %p543
      %p546 = scmp.ne.s32.totalorder %s531, %s545
      %p547 = scmp.eq.s32.totalorder %s54, 0
      %p548 = por %p546, %p547
      %s550 = sadd.s32 %s549, 1
      %p553 = scmp.eq.s32.totalorder %s48, 1
      %p554 = scmp.ne.s32.totalorder %s549, %s551
      %p555 = scmp.eq.s32.totalorder %s48, 0
      %p556 = por %p554, %p555
      %p557 = scmp.ne.s32.totalorder %s549, %s551
      %p558 = scmp.eq.s32.totalorder %s53, 1
      %p559 = por %p557, %p558
      %p560 = scmp.ne.s32.totalorder %s551, %s552
      %p561 = scmp.eq.s32.totalorder %s53, 0
      %p562 = por %p560, %p561
      %p563 = scmp.ne.s32.totalorder %s551, %s552
      %p564 = scmp.eq.s32.totalorder %s54, 1
      %p565 = por %p563, %p564
      %p567 = scmp.ne.s32.totalorder %s552, %s566
      %p568 = scmp.eq.s32.totalorder %s54, 0
      %p569 = por %p567, %p568
      %s571 = sadd.s32 %s570, 1
      %p574 = scmp.eq.s32.totalorder %s48, 1
      %p575 = scmp.ne.s32.totalorder %s570, %s572
      %p576 = scmp.eq.s32.totalorder %s48, 0
      %p577 = por %p575, %p576
      %p578 = scmp.ne.s32.totalorder %s570, %s572
      %p579 = scmp.eq.s32.totalorder %s53, 1
      %p580 = por %p578, %p579
      %p581 = scmp.ne.s32.totalorder %s572, %s573
      %p582 = scmp.eq.s32.totalorder %s53, 0
      %p583 = por %p581, %p582
      %p584 = scmp.ne.s32.totalorder %s572, %s573
      %p585 = scmp.eq.s32.totalorder %s54, 1
      %p586 = por %p584, %p585
      %p588 = scmp.ne.s32.totalorder %s573, %s587
      %p589 = scmp.eq.s32.totalorder %s54, 0
      %p590 = por %p588, %p589
      %s591 = ssub.s32 %s48, %s55
      %p592 = scmp.eq.s32.totalorder %s591, 0
      %s594 = sadd.s32 %s593, 1
      %s595 = scalar_select %p592, %s593, %s594
      %p598 = pneg %p592
      %p599 = scmp.eq.s32.totalorder %s48, 1
      %p600 = por %p598, %p599
      %p601 = scmp.ne.s32.totalorder %s593, %s596
      %p602 = scmp.eq.s32.totalorder %s48, 0
      %p603 = por %p601, %p602
      %p604 = scmp.ne.s32.totalorder %s593, %s596
      %p605 = scmp.eq.s32.totalorder %s53, 1
      %p606 = por %p604, %p605
      %p607 = scmp.ne.s32.totalorder %s596, %s597
      %p608 = scmp.eq.s32.totalorder %s53, 0
      %p609 = por %p607, %p608
      %p610 = scmp.ne.s32.totalorder %s596, %s597
      %p611 = scmp.eq.s32.totalorder %s54, 1
      %p612 = por %p610, %p611
      %p614 = scmp.ne.s32.totalorder %s597, %s613
      %p615 = scmp.eq.s32.totalorder %s54, 0
      %p616 = por %p614, %p615
      %p617 = scmp.le.s32.totalorder 1, %s48
      %p618 = scmp.lt.s32.totalorder %s48, 3
      %p619 = pnand %p617, %p618
      %p620 = pneg %p619
      // Predicated region
      $region9: #{tpu_custom_call.1} parent=5 // pred_check
        _
      $region10: #{tpu_custom_call.1} parent=5 // pred_check_branch
        %622 = sbr.rel (%p619) target = $region12
      $region11: #{tpu_custom_call.1} parent=5 // pred_region
        %s623 = ssub.s32 %s48, 1
        // Predicated region
        $region13: #{tpu_custom_call.1} parent=11 // pred_check
          %p624 = pneg %p121
        $region14: #{tpu_custom_call.1} parent=11 // pred_check_branch
          %626 = sbr.rel (%p624) target = $region16
        $region15: #{tpu_custom_call.1} parent=11 // pred_region
          _
        $region16: #{tpu_custom_call.1} parent=11 // pred_fallthru
          _
        // Predicated region
        $region17: #{tpu_custom_call.1} parent=11 // pred_check
          %p627 = pneg %p142
        $region18: #{tpu_custom_call.1} parent=11 // pred_check_branch
          %629 = sbr.rel (%p627) target = $region20
        $region19: #{tpu_custom_call.1} parent=11 // pred_region
          %s631 = ssub.s32 16, 16
          %632 = vsyncadd [#allocation9], %s631
          %s634 = sshll.u32 [#allocation10], 4
          %s635 = int_to_ptr.vmem [resolvable:$true] %s634
          %637 = dma.hbm_to_vmem [thread:$0]  %s4, 16, %s635, [#allocation9]
        $region20: #{tpu_custom_call.1} parent=11 // pred_fallthru
          _
        // Predicated region
        $region21: #{tpu_custom_call.1} parent=11 // pred_check
          %p638 = pneg %p163
        $region22: #{tpu_custom_call.1} parent=11 // pred_check_branch
          %640 = sbr.rel (%p638) target = $region24
        $region23: #{tpu_custom_call.1} parent=11 // pred_region
          _
        $region24: #{tpu_custom_call.1} parent=11 // pred_fallthru
          _
        // Predicated region
        $region25: #{tpu_custom_call.1} parent=11 // pred_check
          %p641 = pneg %p184
        $region26: #{tpu_custom_call.1} parent=11 // pred_check_branch
          %643 = sbr.rel (%p641) target = $region28
        $region27: #{tpu_custom_call.1} parent=11 // pred_region
          %s645 = ssub.s32 16, 16
          %646 = vsyncadd [#allocation12], %s645
          %s648 = sshll.u32 [#allocation11], 4
          %s649 = int_to_ptr.vmem [resolvable:$true] %s648
          %651 = dma.hbm_to_vmem [thread:$0]  %s6, 16, %s649, [#allocation12]
        $region28: #{tpu_custom_call.1} parent=11 // pred_fallthru
          _
        // Predicated region
        $region29: #{tpu_custom_call.1} parent=11 // pred_check
          %p652 = pneg %p205
        $region30: #{tpu_custom_call.1} parent=11 // pred_check_branch
          %654 = sbr.rel (%p652) target = $region32
        $region31: #{tpu_custom_call.1} parent=11 // pred_region
          %s656 = ssub.s32 512, 512
          %657 = vsyncadd [#allocation12], %s656
          %s658 = sshll.u32 [#allocation13], 4
          %s659 = int_to_ptr.vmem [resolvable:$true] %s658
          %664 = dma.hbm_to_vmem [thread:$0]  %s7, 512, %s659, [#allocation12], 128, 128, 8
        $region32: #{tpu_custom_call.1} parent=11 // pred_fallthru
          _
        // Predicated region
        $region33: #{tpu_custom_call.1} parent=11 // pred_check
          %p665 = pneg %p226
        $region34: #{tpu_custom_call.1} parent=11 // pred_check_branch
          %667 = sbr.rel (%p665) target = $region36
        $region35: #{tpu_custom_call.1} parent=11 // pred_region
          %s669 = ssub.s32 16, 16
          %670 = vsyncadd [#allocation15], %s669
          %s672 = sshll.u32 [#allocation14], 4
          %s673 = int_to_ptr.vmem [resolvable:$true] %s672
          %675 = dma.hbm_to_vmem [thread:$0]  %s8, 16, %s673, [#allocation15]
        $region36: #{tpu_custom_call.1} parent=11 // pred_fallthru
          _
        // Predicated region
        $region37: #{tpu_custom_call.1} parent=11 // pred_check
          %p676 = pneg %p247
        $region38: #{tpu_custom_call.1} parent=11 // pred_check_branch
          %678 = sbr.rel (%p676) target = $region40
        $region39: #{tpu_custom_call.1} parent=11 // pred_region
          %s680 = ssub.s32 16, 16
          %681 = vsyncadd [#allocation15], %s680
          %s683 = sshll.u32 [#allocation16], 4
          %s684 = int_to_ptr.vmem [resolvable:$true] %s683
          %686 = dma.hbm_to_vmem [thread:$0]  %s9, 16, %s684, [#allocation15]
        $region40: #{tpu_custom_call.1} parent=11 // pred_fallthru
          _
        // Predicated region
        $region41: #{tpu_custom_call.1} parent=11 // pred_check
          %p687 = pneg %p268
        $region42: #{tpu_custom_call.1} parent=11 // pred_check_branch
          %689 = sbr.rel (%p687) target = $region44
        $region43: #{tpu_custom_call.1} parent=11 // pred_region
          %s691 = ssub.s32 16, 16
          %692 = vsyncadd [#allocation18], %s691
          %s694 = sshll.u32 [#allocation17], 4
          %s695 = int_to_ptr.vmem [resolvable:$true] %s694
          %697 = dma.hbm_to_vmem [thread:$0]  %s10, 16, %s695, [#allocation18]
        $region44: #{tpu_custom_call.1} parent=11 // pred_fallthru
          _
        // Predicated region
        $region45: #{tpu_custom_call.1} parent=11 // pred_check
          %p698 = pneg %p289
        $region46: #{tpu_custom_call.1} parent=11 // pred_check_branch
          %700 = sbr.rel (%p698) target = $region48
        $region47: #{tpu_custom_call.1} parent=11 // pred_region
          %s702 = ssub.s32 512, 512
          %703 = vsyncadd [#allocation18], %s702
          %s704 = sshll.u32 [#allocation19], 4
          %s705 = int_to_ptr.vmem [resolvable:$true] %s704
          %710 = dma.hbm_to_vmem [thread:$0]  %s11, 512, %s705, [#allocation18], 128, 128, 8
        $region48: #{tpu_custom_call.1} parent=11 // pred_fallthru
          _
        // Predicated region
        $region49: #{tpu_custom_call.1} parent=11 // pred_check
          %p711 = pneg %p310
        $region50: #{tpu_custom_call.1} parent=11 // pred_check_branch
          %713 = sbr.rel (%p711) target = $region52
        $region51: #{tpu_custom_call.1} parent=11 // pred_region
          _
        $region52: #{tpu_custom_call.1} parent=11 // pred_fallthru
          _
        // Predicated region
        $region53: #{tpu_custom_call.1} parent=11 // pred_check
          %p714 = pneg %p331
        $region54: #{tpu_custom_call.1} parent=11 // pred_check_branch
          %716 = sbr.rel (%p714) target = $region56
        $region55: #{tpu_custom_call.1} parent=11 // pred_region
          _
        $region56: #{tpu_custom_call.1} parent=11 // pred_fallthru
          _
        // Predicated region
        $region57: #{tpu_custom_call.1} parent=11 // pred_check
          %p717 = pneg %p352
        $region58: #{tpu_custom_call.1} parent=11 // pred_check_branch
          %719 = sbr.rel (%p717) target = $region60
        $region59: #{tpu_custom_call.1} parent=11 // pred_region
          _
        $region60: #{tpu_custom_call.1} parent=11 // pred_fallthru
          _
        // Predicated region
        $region61: #{tpu_custom_call.1} parent=11 // pred_check
          %p720 = pneg %p373
        $region62: #{tpu_custom_call.1} parent=11 // pred_check_branch
          %722 = sbr.rel (%p720) target = $region64
        $region63: #{tpu_custom_call.1} parent=11 // pred_region
          _
        $region64: #{tpu_custom_call.1} parent=11 // pred_fallthru
          _
        // Predicated region
        $region65: #{tpu_custom_call.1} parent=11 // pred_check
          %p723 = pneg %p394
        $region66: #{tpu_custom_call.1} parent=11 // pred_check_branch
          %725 = sbr.rel (%p723) target = $region68
        $region67: #{tpu_custom_call.1} parent=11 // pred_region
          _
        $region68: #{tpu_custom_call.1} parent=11 // pred_fallthru
          _
        // Predicated region
        $region69: #{tpu_custom_call.1} parent=11 // pred_check
          %p726 = pneg %p415
        $region70: #{tpu_custom_call.1} parent=11 // pred_check_branch
          %728 = sbr.rel (%p726) target = $region72
        $region71: #{tpu_custom_call.1} parent=11 // pred_region
          _
        $region72: #{tpu_custom_call.1} parent=11 // pred_fallthru
          _
        // Predicated region
        $region73: #{tpu_custom_call.1} parent=11 // pred_check
          %p729 = pneg %p436
        $region74: #{tpu_custom_call.1} parent=11 // pred_check_branch
          %731 = sbr.rel (%p729) target = $region76
        $region75: #{tpu_custom_call.1} parent=11 // pred_region
          _
        $region76: #{tpu_custom_call.1} parent=11 // pred_fallthru
          _
        // Predicated region
        $region77: #{tpu_custom_call.1} parent=11 // pred_check
          %p732 = pneg %p457
        $region78: #{tpu_custom_call.1} parent=11 // pred_check_branch
          %734 = sbr.rel (%p732) target = $region80
        $region79: #{tpu_custom_call.1} parent=11 // pred_region
          _
        $region80: #{tpu_custom_call.1} parent=11 // pred_fallthru
          _
        // Predicated region
        $region81: #{tpu_custom_call.1} parent=11 // pred_check
          %p735 = pneg %p478
        $region82: #{tpu_custom_call.1} parent=11 // pred_check_branch
          %737 = sbr.rel (%p735) target = $region84
        $region83: #{tpu_custom_call.1} parent=11 // pred_region
          _
        $region84: #{tpu_custom_call.1} parent=11 // pred_fallthru
          _
        // Predicated region
        $region85: #{tpu_custom_call.1} parent=11 // pred_check
          %p738 = pneg %p499
        $region86: #{tpu_custom_call.1} parent=11 // pred_check_branch
          %740 = sbr.rel (%p738) target = $region88
        $region87: #{tpu_custom_call.1} parent=11 // pred_region
          _
        $region88: #{tpu_custom_call.1} parent=11 // pred_fallthru
          _
        // Predicated region
        $region89: #{tpu_custom_call.1} parent=11 // pred_check
          %p741 = pneg %p520
        $region90: #{tpu_custom_call.1} parent=11 // pred_check_branch
          %743 = sbr.rel (%p741) target = $region92
        $region91: #{tpu_custom_call.1} parent=11 // pred_region
          _
        $region92: #{tpu_custom_call.1} parent=11 // pred_fallthru
          _
        // Predicated region
        $region93: #{tpu_custom_call.1} parent=11 // pred_check
          %p744 = pneg %p541
        $region94: #{tpu_custom_call.1} parent=11 // pred_check_branch
          %746 = sbr.rel (%p744) target = $region96
        $region95: #{tpu_custom_call.1} parent=11 // pred_region
          _
        $region96: #{tpu_custom_call.1} parent=11 // pred_fallthru
          _
        // Predicated region
        $region97: #{tpu_custom_call.1} parent=11 // pred_check
          %p747 = pneg %p562
        $region98: #{tpu_custom_call.1} parent=11 // pred_check_branch
          %749 = sbr.rel (%p747) target = $region100
        $region99: #{tpu_custom_call.1} parent=11 // pred_region
          _
        $region100: #{tpu_custom_call.1} parent=11 // pred_fallthru
          _
        // Predicated region
        $region101: #{tpu_custom_call.1} parent=11 // pred_check
          %p750 = pneg %p583
        $region102: #{tpu_custom_call.1} parent=11 // pred_check_branch
          %752 = sbr.rel (%p750) target = $region104
        $region103: #{tpu_custom_call.1} parent=11 // pred_region
          _
        $region104: #{tpu_custom_call.1} parent=11 // pred_fallthru
          _
      $region12: #{tpu_custom_call.1} parent=5 // pred_fallthru
        _
      %p753 = scmp.lt.s32.totalorder %s48, 2
      // Predicated region
      $region105: #{tpu_custom_call.1} parent=5 // pred_check
        %p754 = pneg %p753
      $region106: #{tpu_custom_call.1} parent=5 // pred_check_branch
        %756 = sbr.rel (%p754) target = $region108
      $region107: #{tpu_custom_call.1} parent=5 // pred_region
        // Predicated region
        $region109: #{tpu_custom_call.1} parent=107 // pred_check
          %p757 = pneg %p68
        $region110: #{tpu_custom_call.1} parent=107 // pred_check_branch
          %759 = sbr.rel (%p757) target = $region112
        $region111: #{tpu_custom_call.1} parent=107 // pred_region
          %s760 = sand.u32 %s58, 1
          %s761 = scalar_lea.sflag [#allocation6], %s760
          %s762 = sand.u32 %s58, 1
          %s763 = smul.addr %s762, 8
          %s764 = scalar_lea.vmem [#allocation5], %s763
          %s766 = ssub.s32 128, 128
          %767 = vsyncadd %s761, %s766
          %s768 = smul.addr %s48, 128
          %s769 = scalar_lea.hbm %s1, %s768
          %s771 = sshll.u32 %s764, 4
          %s772 = int_to_ptr.vmem [resolvable:$true] %s771
          %774 = dma.hbm_to_vmem [thread:$0]  %s769, 128, %s772, %s761
        $region112: #{tpu_custom_call.1} parent=107 // pred_fallthru
          _
        // Predicated region
        $region113: #{tpu_custom_call.1} parent=107 // pred_check
          %p775 = pneg %p94
        $region114: #{tpu_custom_call.1} parent=107 // pred_check_branch
          %777 = sbr.rel (%p775) target = $region116
        $region115: #{tpu_custom_call.1} parent=107 // pred_region
          %s778 = sand.u32 %s48, 1
          %s779 = scalar_lea.sflag [#allocation9], %s778
          %s780 = sand.u32 %s84, 1
          %s781 = scalar_lea.vmem [#allocation8], %s780
          %s783 = ssub.s32 16, 16
          %784 = vsyncadd %s779, %s783
          %s785 = smul.addr %s48, 16
          %s786 = scalar_lea.hbm %s2, %s785
          %s788 = sshll.u32 %s781, 4
          %s789 = int_to_ptr.vmem [resolvable:$true] %s788
          %791 = dma.hbm_to_vmem [thread:$0]  %s786, 16, %s789, %s779
        $region116: #{tpu_custom_call.1} parent=107 // pred_fallthru
          _
      $region108: #{tpu_custom_call.1} parent=5 // pred_fallthru
        _
      %p792 = scmp.le.s32.totalorder 1, %s48
      %p793 = scmp.lt.s32.totalorder %s48, 3
      %p794 = pnand %p792, %p793
      %p795 = pneg %p794
      // Predicated region
      $region117: #{tpu_custom_call.1} parent=5 // pred_check
        _
      $region118: #{tpu_custom_call.1} parent=5 // pred_check_branch
        %797 = sbr.rel (%p794) target = $region120
      $region119: #{tpu_custom_call.1} parent=5 // pred_region
        %s798 = ssub.s32 %s48, 1
        %s799 = sand.u32 %s61, 1
        %s800 = scalar_lea.sflag [#allocation6], %s799
        %s801 = sand.u32 %s61, 1
        %s802 = smul.addr %s801, 8
        %s803 = scalar_lea.vmem [#allocation5], %s802
        // Predicated region
        $region121: #{tpu_custom_call.1} parent=119 // pred_check
          %p804 = pneg %p74
        $region122: #{tpu_custom_call.1} parent=119 // pred_check_branch
          %806 = sbr.rel (%p804) target = $region124
        $region123: #{tpu_custom_call.1} parent=119 // pred_region
          %807 = dma.done %s800, 128
        $region124: #{tpu_custom_call.1} parent=119 // pred_fallthru
          _
        %s808 = sand.u32 %s53, 1
        %s809 = scalar_lea.sflag [#allocation9], %s808
        %s810 = sand.u32 %s87, 1
        %s811 = scalar_lea.vmem [#allocation8], %s810
        // Predicated region
        $region125: #{tpu_custom_call.1} parent=119 // pred_check
          %p812 = pneg %p100
        $region126: #{tpu_custom_call.1} parent=119 // pred_check_branch
          %814 = sbr.rel (%p812) target = $region128
        $region127: #{tpu_custom_call.1} parent=119 // pred_region
          %815 = dma.done %s809, 16
        $region128: #{tpu_custom_call.1} parent=119 // pred_fallthru
          _
        // Predicated region
        $region129: #{tpu_custom_call.1} parent=119 // pred_check
          %p816 = pneg %p142
        $region130: #{tpu_custom_call.1} parent=119 // pred_check_branch
          %818 = sbr.rel (%p816) target = $region132
        $region131: #{tpu_custom_call.1} parent=119 // pred_region
          %819 = dma.done [#allocation9], 16
        $region132: #{tpu_custom_call.1} parent=119 // pred_fallthru
          _
        // Predicated region
        $region133: #{tpu_custom_call.1} parent=119 // pred_check
          %p820 = pneg %p184
        $region134: #{tpu_custom_call.1} parent=119 // pred_check_branch
          %822 = sbr.rel (%p820) target = $region136
        $region135: #{tpu_custom_call.1} parent=119 // pred_region
          %823 = dma.done [#allocation12], 16
        $region136: #{tpu_custom_call.1} parent=119 // pred_fallthru
          _
        // Predicated region
        $region137: #{tpu_custom_call.1} parent=119 // pred_check
          %p824 = pneg %p205
        $region138: #{tpu_custom_call.1} parent=119 // pred_check_branch
          %826 = sbr.rel (%p824) target = $region140
        $region139: #{tpu_custom_call.1} parent=119 // pred_region
          %827 = dma.done [#allocation12], 512
        $region140: #{tpu_custom_call.1} parent=119 // pred_fallthru
          _
        // Predicated region
        $region141: #{tpu_custom_call.1} parent=119 // pred_check
          %p828 = pneg %p226
        $region142: #{tpu_custom_call.1} parent=119 // pred_check_branch
          %830 = sbr.rel (%p828) target = $region144
        $region143: #{tpu_custom_call.1} parent=119 // pred_region
          %831 = dma.done [#allocation15], 16
        $region144: #{tpu_custom_call.1} parent=119 // pred_fallthru
          _
        // Predicated region
        $region145: #{tpu_custom_call.1} parent=119 // pred_check
          %p832 = pneg %p247
        $region146: #{tpu_custom_call.1} parent=119 // pred_check_branch
          %834 = sbr.rel (%p832) target = $region148
        $region147: #{tpu_custom_call.1} parent=119 // pred_region
          %835 = dma.done [#allocation15], 16
        $region148: #{tpu_custom_call.1} parent=119 // pred_fallthru
          _
        // Predicated region
        $region149: #{tpu_custom_call.1} parent=119 // pred_check
          %p836 = pneg %p268
        $region150: #{tpu_custom_call.1} parent=119 // pred_check_branch
          %838 = sbr.rel (%p836) target = $region152
        $region151: #{tpu_custom_call.1} parent=119 // pred_region
          %839 = dma.done [#allocation18], 16
        $region152: #{tpu_custom_call.1} parent=119 // pred_fallthru
          _
        // Predicated region
        $region153: #{tpu_custom_call.1} parent=119 // pred_check
          %p840 = pneg %p289
        $region154: #{tpu_custom_call.1} parent=119 // pred_check_branch
          %842 = sbr.rel (%p840) target = $region156
        $region155: #{tpu_custom_call.1} parent=119 // pred_region
          %843 = dma.done [#allocation18], 512
        $region156: #{tpu_custom_call.1} parent=119 // pred_fallthru
          _
        %s844 = sand.u32 %s61, 1
        %s845 = scalar_lea.sflag [#allocation6], %s844
        %s846 = sand.u32 %s61, 1
        %s847 = smul.addr %s846, 8
        %s848 = scalar_lea.vmem [#allocation5], %s847
        %p849 = pneg %p74
        %p850 = pneg %p71
        %s851 = sand.u32 %s53, 1
        %s852 = scalar_lea.sflag [#allocation9], %s851
        %s853 = sand.u32 %s87, 1
        %s854 = scalar_lea.vmem [#allocation8], %s853
        %p855 = pneg %p100
        %p856 = pneg %p97
        %p857 = pneg %p121
        %p858 = pneg %p118
        %p859 = pneg %p142
        %p860 = pneg %p139
        %p861 = pneg %p163
        %p862 = pneg %p160
        %p863 = pneg %p184
        %p864 = pneg %p181
        %p865 = pneg %p205
        %p866 = pneg %p202
        %p867 = pneg %p226
        %p868 = pneg %p223
        %p869 = pneg %p247
        %p870 = pneg %p244
        %p871 = pneg %p268
        %p872 = pneg %p265
        %p873 = pneg %p289
        %p874 = pneg %p286
        %p875 = pneg %p310
        %p876 = pneg %p307
        %p877 = pneg %p331
        %p878 = pneg %p328
        %p879 = pneg %p352
        %p880 = pneg %p349
        %p881 = pneg %p373
        %p882 = pneg %p370
        %p883 = pneg %p394
        %p884 = pneg %p391
        %p885 = pneg %p415
        %p886 = pneg %p412
        %p887 = pneg %p436
        %p888 = pneg %p433
        %p889 = pneg %p457
        %p890 = pneg %p454
        %p891 = pneg %p478
        %p892 = pneg %p475
        %p893 = pneg %p499
        %p894 = pneg %p496
        %p895 = pneg %p520
        %p896 = pneg %p517
        %p897 = pneg %p541
        %p898 = pneg %p538
        %p899 = pneg %p562
        %p900 = pneg %p559
        %p901 = pneg %p583
        %p902 = pneg %p580
        %p903 = pneg %p609
        %p904 = pneg %p606
        %s905 = sand.u32 %s596, 1
        %s906 = scalar_lea.sflag [#allocation7], %s905
        %s907 = sand.u32 %s596, 1
        %s908 = scalar_lea.vmem [#allocation20], %s907
        %v909 = vld [vmem:[%s803] sm:$0xff]
        %v910 = vld [vmem:[%s3] sm:$0x1]
        %v911 = vld [vmem:[#allocation10] sm:$0x1]
        %vm912 = vcmask 261120
        %v913 = vsel %vm912, %v909, 0.0
        %914 = vadd.xlane.f32.xlu0 %v913
        %v915 = vpop.xlane.xlu0 %914
        %v916 = vrcp.pop 32.0
        %v917 = vmul.f32 %v915, %v916
        %v918 = vsub.f32 %v909, %v917
        %v919 = vmul.f32 %v918, %v918
        %v920 = vsel %vm912, %v919, 0.0
        %921 = vadd.xlane.f32.xlu0 %v920
        %v922 = vpop.xlane.xlu0 %921
        %v923 = vmul.f32 %v922, %v916
        %v924 = vadd.f32 %v923, 1e-12
        %v925 = vrsqrt.pop %v924
        %v926 = vmul.f32 %v918, %v925
        %v928 = vlaneseq
        %v929 = vshrl.u32 %v928, 7
        %v930 = vsub.s32 0, %v929
        %v931 = vrot.slane %v910, %v930
        %v933 = vmul.f32 %v926, %v931
        %v935 = vlaneseq
        %v936 = vshrl.u32 %v935, 7
        %v937 = vsub.s32 0, %v936
        %v938 = vrot.slane %v911, %v937
        %v940 = vadd.f32 %v933, %v938
        %v941 = vld [vmem:[%s5] sm:$0xff]
        %v942 = vld [vmem:[%s5 + $0x8] sm:$0xff]
        %v943 = vld [vmem:[%s5 + $0x10] sm:$0xff]
        %v944 = vld [vmem:[%s5 + $0x18] sm:$0xff]
        %v945 = vld [vmem:[#allocation11] sm:$0x1]
        %v947 = vlaneseq
        %v948 = vshrl.u32 %v947, 7
        %v949 = vsub.s32 0, %v948
        %v950 = vrot.slane %v945, %v949
        %v953 = vsel %vm912, %v940, 0
        %955 = vmatprep.subr.mxu0 0.0
        %956 = vmatpush1.msra.mxu0 %v941
        %957 = vmatprep.subr.mxu0 0.0
        %958 = vmatpush1.msra.mxu0 %v942
        %959 = vmatprep.subr.mxu0 0.0
        %960 = vmatpush1.msra.mxu0 %v943
        %961 = vmatprep.subr.mxu0 0.0
        %962 = vmatpush1.msra.mxu0 %v944
        %963 = vmatprep.subr.mxu0 0.0
        %964 = vmatpush1.msra.mxu0 0.0
        %965 = vmatprep.subr.mxu0 0.0
        %966 = vmatpush1.msra.mxu0 0.0
        %967 = vmatprep.subr.mxu0 0.0
        %968 = vmatpush1.msra.mxu0 0.0
        %969 = vmatprep.subr.mxu0 0.0
        %970 = vmatpush1.msra.mxu0 0.0
        %971 = vmatprep.subr.mxu0 0.0
        %972 = vmatpush1.msra.mxu0 0.0
        %973 = vmatprep.subr.mxu0 0.0
        %974 = vmatpush1.msra.mxu0 0.0
        %975 = vmatprep.subr.mxu0 0.0
        %976 = vmatpush1.msra.mxu0 0.0
        %977 = vmatprep.subr.mxu0 0.0
        %978 = vmatpush1.msra.mxu0 0.0
        %979 = vmatprep.subr.mxu0 0.0
        %980 = vmatpush1.msra.mxu0 0.0
        %981 = vmatprep.subr.mxu0 0.0
        %982 = vmatpush1.msra.mxu0 0.0
        %983 = vmatprep.subr.mxu0 0.0
        %984 = vmatpush1.msra.mxu0 0.0
        %985 = vmatprep.subr.mxu0 0.0
        %986 = vmatpush1.msra.mxu0 0.0
        %987 = vmatprep.subr.mxu0 0.0
        %988 = vmatpush1.msra.mxu0 0.0
        %989 = vmatprep.subr.mxu0 0.0
        %990 = vmatpush1.msra.mxu0 0.0
        %991 = vmatprep.subr.mxu0 0.0
        %992 = vmatpush1.msra.mxu0 0.0
        %993 = vmatprep.subr.mxu0 0.0
        %994 = vmatpush1.msra.mxu0 0.0
        %995 = vmatprep.subr.mxu0 0.0
        %996 = vmatpush1.msra.mxu0 0.0
        %997 = vmatprep.subr.mxu0 0.0
        %998 = vmatpush1.msra.mxu0 0.0
        %999 = vmatprep.subr.mxu0 0.0
        %1000 = vmatpush1.msra.mxu0 0.0
        %1001 = vmatprep.subr.mxu0 0.0
        %1002 = vmatpush1.msra.mxu0 0.0
        %1003 = vmatprep.subr.mxu0 0.0
        %1004 = vmatpush1.msra.mxu0 0.0
        %1005 = vmatprep.subr.mxu0 0.0
        %1006 = vmatpush1.msra.mxu0 0.0
        %1007 = vmatprep.subr.mxu0 0.0
        %1008 = vmatpush1.msra.mxu0 0.0
        %1009 = vmatprep.subr.mxu0 0.0
        %1010 = vmatpush1.msra.mxu0 0.0
        %1011 = vmatprep.subr.mxu0 0.0
        %1012 = vmatpush1.msra.mxu0 0.0
        %1013 = vmatprep.subr.mxu0 0.0
        %1014 = vmatpush1.msra.mxu0 0.0
        %1015 = vmatprep.subr.mxu0 0.0
        %1016 = vmatpush1.msra.mxu0 0.0
        %1017 = vmatprep.subr.mxu0 0.0
        %1018 = vmatpush1.msra.mxu0 0.0
        %1019 = vmatprep.mubr.f32.mxu0 0.0
        %1020 = vmatmul.mubr.f32.gmra.mrb[0].mxu0 %v953
        %v1021 = vpop.f32.mrb[0].mxu0
        %v1022 = vadd.f32 %v950, %v1021
        %v1023 = vpop.f32.mrb[0].mxu0
        %1024 = vdwg.mxu0
        %1026 = vrot.lane.b32.xlu0 %v1022, 96
        %v1027 = vpop.permute.xlu0 %1026
        %v1028 = vsel %vm912, %v1022, 0
        %v1030 = vsel %vm912, %v1027, 0
        %1032 = vmatprep.subr.mxu0 0.0
        %1033 = vmatpush1.xpose.msra.mxu0 %v1030
        %1034 = vmatprep.subr.mxu0 0.0
        %1035 = vmatpush1.xpose.msra.mxu0 0.0
        %1036 = vmatprep.subr.mxu0 0.0
        %1037 = vmatpush1.xpose.msra.mxu0 0.0
        %1038 = vmatprep.subr.mxu0 0.0
        %1039 = vmatpush1.xpose.msra.mxu0 0.0
        %1040 = vmatprep.subr.mxu0 0.0
        %1041 = vmatpush1.xpose.msra.mxu0 0.0
        %1042 = vmatprep.subr.mxu0 0.0
        %1043 = vmatpush1.xpose.msra.mxu0 0.0
        %1044 = vmatprep.subr.mxu0 0.0
        %1045 = vmatpush1.xpose.msra.mxu0 0.0
        %1046 = vmatprep.subr.mxu0 0.0
        %1047 = vmatpush1.xpose.msra.mxu0 0.0
        %1048 = vmatprep.subr.mxu0 0.0
        %1049 = vmatpush1.xpose.msra.mxu0 0.0
        %1050 = vmatprep.subr.mxu0 0.0
        %1051 = vmatpush1.xpose.msra.mxu0 0.0
        %1052 = vmatprep.subr.mxu0 0.0
        %1053 = vmatpush1.xpose.msra.mxu0 0.0
        %1054 = vmatprep.subr.mxu0 0.0
        %1055 = vmatpush1.xpose.msra.mxu0 0.0
        %1056 = vmatprep.subr.mxu0 0.0
        %1057 = vmatpush1.xpose.msra.mxu0 0.0
        %1058 = vmatprep.subr.mxu0 0.0
        %1059 = vmatpush1.xpose.msra.mxu0 0.0
        %1060 = vmatprep.subr.mxu0 0.0
        %1061 = vmatpush1.xpose.msra.mxu0 0.0
        %1062 = vmatprep.subr.mxu0 0.0
        %1063 = vmatpush1.xpose.msra.mxu0 0.0
        %1064 = vmatprep.subr.mxu0 0.0
        %1065 = vmatpush1.xpose.msra.mxu0 0.0
        %1066 = vmatprep.subr.mxu0 0.0
        %1067 = vmatpush1.xpose.msra.mxu0 0.0
        %1068 = vmatprep.subr.mxu0 0.0
        %1069 = vmatpush1.xpose.msra.mxu0 0.0
        %1070 = vmatprep.subr.mxu0 0.0
        %1071 = vmatpush1.xpose.msra.mxu0 0.0
        %1072 = vmatprep.subr.mxu0 0.0
        %1073 = vmatpush1.xpose.msra.mxu0 0.0
        %1074 = vmatprep.subr.mxu0 0.0
        %1075 = vmatpush1.xpose.msra.mxu0 0.0
        %1076 = vmatprep.subr.mxu0 0.0
        %1077 = vmatpush1.xpose.msra.mxu0 0.0
        %1078 = vmatprep.subr.mxu0 0.0
        %1079 = vmatpush1.xpose.msra.mxu0 0.0
        %1080 = vmatprep.subr.mxu0 0.0
        %1081 = vmatpush1.xpose.msra.mxu0 0.0
        %1082 = vmatprep.subr.mxu0 0.0
        %1083 = vmatpush1.xpose.msra.mxu0 0.0
        %1084 = vmatprep.subr.mxu0 0.0
        %1085 = vmatpush1.xpose.msra.mxu0 0.0
        %1086 = vmatprep.subr.mxu0 0.0
        %1087 = vmatpush1.xpose.msra.mxu0 0.0
        %1088 = vmatprep.subr.mxu0 0.0
        %1089 = vmatpush1.xpose.msra.mxu0 0.0
        %1090 = vmatprep.subr.mxu0 0.0
        %1091 = vmatpush1.xpose.msra.mxu0 0.0
        %1092 = vmatprep.subr.mxu0 0.0
        %1093 = vmatpush1.xpose.msra.mxu0 0.0
        %1094 = vmatprep.subr.mxu0 0.0
        %1095 = vmatpush1.xpose.msra.mxu0 0.0
        %1096 = vmatprep.mubr.f32.mxu0 0.0
        %1097 = vmatmul.mubr.f32.gmra.mrb[0].mxu0 %v1028
        %v1098 = vpop.f32.mrb[0].mxu0
        %v1099 = vadd.f32 0.0, %v1098
        %v1100 = vpop.f32.mrb[0].mxu0
        %1101 = vdwg.mxu0
        %v1102 = vmul.f32 %v1099, 0.17677669
        %v1103 = vld [vmem:[%s811] sm:$0x1]
        %v1105 = vlaneseq
        %v1106 = vshrl.u32 %v1105, 7
        %v1107 = vsub.s32 0, %v1106
        %v1108 = vrot.slane %v1103, %v1107
        %v1110 = vadd.f32 %v1102, %v1108
        %vm1111 = vcmask 64512
        %v1112 = vsel %vm1111, %v1110, -inf
        %1113 = vmax.xlane.f32.xlu0 %v1112
        %v1114 = vpop.xlane.xlu0 %1113
        %v1115 = vsub.f32 %v1110, %v1114
        %v1116 = vmul.f32 %v1115, 1.442695
        %v1117 = vpow.pop %v1116
        %v1118 = vsel %vm1111, %v1117, 0.0
        %1119 = vadd.xlane.f32.xlu0 %v1118
        %v1120 = vpop.xlane.xlu0 %1119
        %v1121 = vrcp.pop %v1120
        %v1122 = vmul.f32 %v1117, %v1121
        %1123 = vrot.lane.b32.xlu0 %v1022, 64
        %v1124 = vpop.permute.xlu0 %1123
        %v1127 = vsel %vm1111, %v1122, 0
        %1129 = vmatprep.subr.mxu0 0.0
        %1130 = vmatpush1.msra.mxu0 %v1124
        %1131 = vmatprep.subr.mxu0 0.0
        %1132 = vmatpush1.msra.mxu0 0.0
        %1133 = vmatprep.subr.mxu0 0.0
        %1134 = vmatpush1.msra.mxu0 0.0
        %1135 = vmatprep.subr.mxu0 0.0
        %1136 = vmatpush1.msra.mxu0 0.0
        %1137 = vmatprep.subr.mxu0 0.0
        %1138 = vmatpush1.msra.mxu0 0.0
        %1139 = vmatprep.subr.mxu0 0.0
        %1140 = vmatpush1.msra.mxu0 0.0
        %1141 = vmatprep.subr.mxu0 0.0
        %1142 = vmatpush1.msra.mxu0 0.0
        %1143 = vmatprep.subr.mxu0 0.0
        %1144 = vmatpush1.msra.mxu0 0.0
        %1145 = vmatprep.subr.mxu0 0.0
        %1146 = vmatpush1.msra.mxu0 0.0
        %1147 = vmatprep.subr.mxu0 0.0
        %1148 = vmatpush1.msra.mxu0 0.0
        %1149 = vmatprep.subr.mxu0 0.0
        %1150 = vmatpush1.msra.mxu0 0.0
        %1151 = vmatprep.subr.mxu0 0.0
        %1152 = vmatpush1.msra.mxu0 0.0
        %1153 = vmatprep.subr.mxu0 0.0
        %1154 = vmatpush1.msra.mxu0 0.0
        %1155 = vmatprep.subr.mxu0 0.0
        %1156 = vmatpush1.msra.mxu0 0.0
        %1157 = vmatprep.subr.mxu0 0.0
        %1158 = vmatpush1.msra.mxu0 0.0
        %1159 = vmatprep.subr.mxu0 0.0
        %1160 = vmatpush1.msra.mxu0 0.0
        %1161 = vmatprep.subr.mxu0 0.0
        %1162 = vmatpush1.msra.mxu0 0.0
        %1163 = vmatprep.subr.mxu0 0.0
        %1164 = vmatpush1.msra.mxu0 0.0
        %1165 = vmatprep.subr.mxu0 0.0
        %1166 = vmatpush1.msra.mxu0 0.0
        %1167 = vmatprep.subr.mxu0 0.0
        %1168 = vmatpush1.msra.mxu0 0.0
        %1169 = vmatprep.subr.mxu0 0.0
        %1170 = vmatpush1.msra.mxu0 0.0
        %1171 = vmatprep.subr.mxu0 0.0
        %1172 = vmatpush1.msra.mxu0 0.0
        %1173 = vmatprep.subr.mxu0 0.0
        %1174 = vmatpush1.msra.mxu0 0.0
        %1175 = vmatprep.subr.mxu0 0.0
        %1176 = vmatpush1.msra.mxu0 0.0
        %1177 = vmatprep.subr.mxu0 0.0
        %1178 = vmatpush1.msra.mxu0 0.0
        %1179 = vmatprep.subr.mxu0 0.0
        %1180 = vmatpush1.msra.mxu0 0.0
        %1181 = vmatprep.subr.mxu0 0.0
        %1182 = vmatpush1.msra.mxu0 0.0
        %1183 = vmatprep.subr.mxu0 0.0
        %1184 = vmatpush1.msra.mxu0 0.0
        %1185 = vmatprep.subr.mxu0 0.0
        %1186 = vmatpush1.msra.mxu0 0.0
        %1187 = vmatprep.subr.mxu0 0.0
        %1188 = vmatpush1.msra.mxu0 0.0
        %1189 = vmatprep.subr.mxu0 0.0
        %1190 = vmatpush1.msra.mxu0 0.0
        %1191 = vmatprep.subr.mxu0 0.0
        %1192 = vmatpush1.msra.mxu0 0.0
        %1193 = vmatprep.mubr.f32.mxu0 0.0
        %1194 = vmatmul.mubr.f32.gmra.mrb[0].mxu0 %v1127
        %v1195 = vpop.f32.mrb[0].mxu0
        %v1196 = vadd.f32 0.0, %v1195
        %v1197 = vpop.f32.mrb[0].mxu0
        %1198 = vdwg.mxu0
        %v1199 = vld [vmem:[#allocation13] sm:$0xff]
        %v1200 = vld [vmem:[#allocation13 + $0x8] sm:$0xff]
        %v1201 = vld [vmem:[#allocation13 + $0x10] sm:$0xff]
        %v1202 = vld [vmem:[#allocation13 + $0x18] sm:$0xff]
        %v1203 = vld [vmem:[#allocation14] sm:$0x1]
        %v1205 = vlaneseq
        %v1206 = vshrl.u32 %v1205, 7
        %v1207 = vsub.s32 0, %v1206
        %v1208 = vrot.slane %v1203, %v1207
        %v1211 = vsel %vm912, %v1196, 0
        %1213 = vmatprep.subr.mxu0 0.0
        %1214 = vmatpush1.msra.mxu0 %v1199
        %1215 = vmatprep.subr.mxu0 0.0
        %1216 = vmatpush1.msra.mxu0 %v1200
        %1217 = vmatprep.subr.mxu0 0.0
        %1218 = vmatpush1.msra.mxu0 %v1201
        %1219 = vmatprep.subr.mxu0 0.0
        %1220 = vmatpush1.msra.mxu0 %v1202
        %1221 = vmatprep.subr.mxu0 0.0
        %1222 = vmatpush1.msra.mxu0 0.0
        %1223 = vmatprep.subr.mxu0 0.0
        %1224 = vmatpush1.msra.mxu0 0.0
        %1225 = vmatprep.subr.mxu0 0.0
        %1226 = vmatpush1.msra.mxu0 0.0
        %1227 = vmatprep.subr.mxu0 0.0
        %1228 = vmatpush1.msra.mxu0 0.0
        %1229 = vmatprep.subr.mxu0 0.0
        %1230 = vmatpush1.msra.mxu0 0.0
        %1231 = vmatprep.subr.mxu0 0.0
        %1232 = vmatpush1.msra.mxu0 0.0
        %1233 = vmatprep.subr.mxu0 0.0
        %1234 = vmatpush1.msra.mxu0 0.0
        %1235 = vmatprep.subr.mxu0 0.0
        %1236 = vmatpush1.msra.mxu0 0.0
        %1237 = vmatprep.subr.mxu0 0.0
        %1238 = vmatpush1.msra.mxu0 0.0
        %1239 = vmatprep.subr.mxu0 0.0
        %1240 = vmatpush1.msra.mxu0 0.0
        %1241 = vmatprep.subr.mxu0 0.0
        %1242 = vmatpush1.msra.mxu0 0.0
        %1243 = vmatprep.subr.mxu0 0.0
        %1244 = vmatpush1.msra.mxu0 0.0
        %1245 = vmatprep.subr.mxu0 0.0
        %1246 = vmatpush1.msra.mxu0 0.0
        %1247 = vmatprep.subr.mxu0 0.0
        %1248 = vmatpush1.msra.mxu0 0.0
        %1249 = vmatprep.subr.mxu0 0.0
        %1250 = vmatpush1.msra.mxu0 0.0
        %1251 = vmatprep.subr.mxu0 0.0
        %1252 = vmatpush1.msra.mxu0 0.0
        %1253 = vmatprep.subr.mxu0 0.0
        %1254 = vmatpush1.msra.mxu0 0.0
        %1255 = vmatprep.subr.mxu0 0.0
        %1256 = vmatpush1.msra.mxu0 0.0
        %1257 = vmatprep.subr.mxu0 0.0
        %1258 = vmatpush1.msra.mxu0 0.0
        %1259 = vmatprep.subr.mxu0 0.0
        %1260 = vmatpush1.msra.mxu0 0.0
        %1261 = vmatprep.subr.mxu0 0.0
        %1262 = vmatpush1.msra.mxu0 0.0
        %1263 = vmatprep.subr.mxu0 0.0
        %1264 = vmatpush1.msra.mxu0 0.0
        %1265 = vmatprep.subr.mxu0 0.0
        %1266 = vmatpush1.msra.mxu0 0.0
        %1267 = vmatprep.subr.mxu0 0.0
        %1268 = vmatpush1.msra.mxu0 0.0
        %1269 = vmatprep.subr.mxu0 0.0
        %1270 = vmatpush1.msra.mxu0 0.0
        %1271 = vmatprep.subr.mxu0 0.0
        %1272 = vmatpush1.msra.mxu0 0.0
        %1273 = vmatprep.subr.mxu0 0.0
        %1274 = vmatpush1.msra.mxu0 0.0
        %1275 = vmatprep.subr.mxu0 0.0
        %1276 = vmatpush1.msra.mxu0 0.0
        %1277 = vmatprep.mubr.f32.mxu0 0.0
        %1278 = vmatmul.mubr.f32.gmra.mrb[0].mxu0 %v1211
        %v1279 = vpop.f32.mrb[0].mxu0
        %v1280 = vadd.f32 %v1208, %v1279
        %v1281 = vpop.f32.mrb[0].mxu0
        %1282 = vdwg.mxu0
        %v1283 = vadd.f32 %v940, %v1280
        %v1284 = vld [vmem:[#allocation16] sm:$0x1]
        %v1285 = vld [vmem:[#allocation17] sm:$0x1]
        %v1286 = vsel %vm912, %v1283, 0.0
        %1287 = vadd.xlane.f32.xlu0 %v1286
        %v1288 = vpop.xlane.xlu0 %1287
        %v1289 = vmul.f32 %v1288, %v916
        %v1290 = vsub.f32 %v1283, %v1289
        %v1291 = vmul.f32 %v1290, %v1290
        %v1292 = vsel %vm912, %v1291, 0.0
        %1293 = vadd.xlane.f32.xlu0 %v1292
        %v1294 = vpop.xlane.xlu0 %1293
        %v1295 = vmul.f32 %v1294, %v916
        %v1296 = vadd.f32 %v1295, 1e-12
        %v1297 = vrsqrt.pop %v1296
        %v1298 = vmul.f32 %v1290, %v1297
        %v1300 = vlaneseq
        %v1301 = vshrl.u32 %v1300, 7
        %v1302 = vsub.s32 0, %v1301
        %v1303 = vrot.slane %v1284, %v1302
        %v1305 = vmul.f32 %v1298, %v1303
        %v1307 = vlaneseq
        %v1308 = vshrl.u32 %v1307, 7
        %v1309 = vsub.s32 0, %v1308
        %v1310 = vrot.slane %v1285, %v1309
        %v1312 = vadd.f32 %v1305, %v1310
        %v1313 = vld [vmem:[#allocation19] sm:$0xff]
        %v1314 = vld [vmem:[#allocation19 + $0x8] sm:$0xff]
        %v1315 = vld [vmem:[#allocation19 + $0x10] sm:$0xff]
        %v1316 = vld [vmem:[#allocation19 + $0x18] sm:$0xff]
        %v1317 = vld [vmem:[%s12] sm:$0x1]
        %v1319 = vlaneseq
        %v1320 = vshrl.u32 %v1319, 7
        %v1321 = vsub.s32 0, %v1320
        %v1322 = vrot.slane %v1317, %v1321
        %v1325 = vsel %vm912, %v1312, 0
        %1327 = vmatprep.subr.mxu0 0.0
        %1328 = vmatpush1.msra.mxu0 %v1313
        %1329 = vmatprep.subr.mxu0 0.0
        %1330 = vmatpush1.msra.mxu0 %v1314
        %1331 = vmatprep.subr.mxu0 0.0
        %1332 = vmatpush1.msra.mxu0 %v1315
        %1333 = vmatprep.subr.mxu0 0.0
        %1334 = vmatpush1.msra.mxu0 %v1316
        %1335 = vmatprep.subr.mxu0 0.0
        %1336 = vmatpush1.msra.mxu0 0.0
        %1337 = vmatprep.subr.mxu0 0.0
        %1338 = vmatpush1.msra.mxu0 0.0
        %1339 = vmatprep.subr.mxu0 0.0
        %1340 = vmatpush1.msra.mxu0 0.0
        %1341 = vmatprep.subr.mxu0 0.0
        %1342 = vmatpush1.msra.mxu0 0.0
        %1343 = vmatprep.subr.mxu0 0.0
        %1344 = vmatpush1.msra.mxu0 0.0
        %1345 = vmatprep.subr.mxu0 0.0
        %1346 = vmatpush1.msra.mxu0 0.0
        %1347 = vmatprep.subr.mxu0 0.0
        %1348 = vmatpush1.msra.mxu0 0.0
        %1349 = vmatprep.subr.mxu0 0.0
        %1350 = vmatpush1.msra.mxu0 0.0
        %1351 = vmatprep.subr.mxu0 0.0
        %1352 = vmatpush1.msra.mxu0 0.0
        %1353 = vmatprep.subr.mxu0 0.0
        %1354 = vmatpush1.msra.mxu0 0.0
        %1355 = vmatprep.subr.mxu0 0.0
        %1356 = vmatpush1.msra.mxu0 0.0
        %1357 = vmatprep.subr.mxu0 0.0
        %1358 = vmatpush1.msra.mxu0 0.0
        %1359 = vmatprep.subr.mxu0 0.0
        %1360 = vmatpush1.msra.mxu0 0.0
        %1361 = vmatprep.subr.mxu0 0.0
        %1362 = vmatpush1.msra.mxu0 0.0
        %1363 = vmatprep.subr.mxu0 0.0
        %1364 = vmatpush1.msra.mxu0 0.0
        %1365 = vmatprep.subr.mxu0 0.0
        %1366 = vmatpush1.msra.mxu0 0.0
        %1367 = vmatprep.subr.mxu0 0.0
        %1368 = vmatpush1.msra.mxu0 0.0
        %1369 = vmatprep.subr.mxu0 0.0
        %1370 = vmatpush1.msra.mxu0 0.0
        %1371 = vmatprep.subr.mxu0 0.0
        %1372 = vmatpush1.msra.mxu0 0.0
        %1373 = vmatprep.subr.mxu0 0.0
        %1374 = vmatpush1.msra.mxu0 0.0
        %1375 = vmatprep.subr.mxu0 0.0
        %1376 = vmatpush1.msra.mxu0 0.0
        %1377 = vmatprep.subr.mxu0 0.0
        %1378 = vmatpush1.msra.mxu0 0.0
        %1379 = vmatprep.subr.mxu0 0.0
        %1380 = vmatpush1.msra.mxu0 0.0
        %1381 = vmatprep.subr.mxu0 0.0
        %1382 = vmatpush1.msra.mxu0 0.0
        %1383 = vmatprep.subr.mxu0 0.0
        %1384 = vmatpush1.msra.mxu0 0.0
        %1385 = vmatprep.subr.mxu0 0.0
        %1386 = vmatpush1.msra.mxu0 0.0
        %1387 = vmatprep.subr.mxu0 0.0
        %1388 = vmatpush1.msra.mxu0 0.0
        %1389 = vmatprep.subr.mxu0 0.0
        %1390 = vmatpush1.msra.mxu0 0.0
        %1391 = vmatprep.mubr.f32.mxu0 0.0
        %1392 = vmatmul.mubr.f32.gmra.mrb[0].mxu0 %v1325
        %v1393 = vpop.f32.mrb[0].mxu0
        %v1394 = vadd.f32 %v1322, %v1393
        %v1395 = vpop.f32.mrb[0].mxu0
        %1396 = vdwg.mxu0
        %v1397 = vmul.f32 %v1394, %v1394
        %v1398 = vmul.f32 %v1394, %v1397
        %v1399 = vmul.f32 %v1398, 0.044715
        %v1400 = vadd.f32 %v1394, %v1399
        %v1401 = vmul.f32 %v1400, 0.7978846
        %v1402 = vtanh.pop %v1401
        %v1403 = vadd.f32 %v1402, 1.0
        %v1404 = vmul.f32 %v1403, 0.5
        %v1405 = vmul.f32 %v1394, %v1404
        %v1406 = vld [vmem:[%s13] sm:$0xff]
        %v1407 = vld [vmem:[%s13 + $0x8] sm:$0xff]
        %v1408 = vld [vmem:[%s13 + $0x10] sm:$0xff]
        %v1409 = vld [vmem:[%s13 + $0x18] sm:$0xff]
        %v1410 = vld [vmem:[%s13 + $0x20] sm:$0xff]
        %v1411 = vld [vmem:[%s13 + $0x28] sm:$0xff]
        %v1412 = vld [vmem:[%s13 + $0x30] sm:$0xff]
        %v1413 = vld [vmem:[%s13 + $0x38] sm:$0xff]
        %v1414 = vld [vmem:[%s13 + $0x40] sm:$0xff]
        %v1415 = vld [vmem:[%s13 + $0x48] sm:$0xff]
        %v1416 = vld [vmem:[%s13 + $0x50] sm:$0xff]
        %v1417 = vld [vmem:[%s13 + $0x58] sm:$0xff]
        %v1418 = vld [vmem:[%s13 + $0x60] sm:$0xff]
        %v1419 = vld [vmem:[%s13 + $0x68] sm:$0xff]
        %v1420 = vld [vmem:[%s13 + $0x70] sm:$0xff]
        %v1421 = vld [vmem:[%s13 + $0x78] sm:$0xff]
        %v1422 = vld [vmem:[%s14] sm:$0x1]
        %v1424 = vlaneseq
        %v1425 = vshrl.u32 %v1424, 7
        %v1426 = vsub.s32 0, %v1425
        %v1427 = vrot.slane %v1422, %v1426
        %1429 = vmatprep.subr.mxu0 0.0
        %1430 = vmatpush1.msra.mxu0 %v1406
        %1431 = vmatprep.subr.mxu0 0.0
        %1432 = vmatpush1.msra.mxu0 %v1407
        %1433 = vmatprep.subr.mxu0 0.0
        %1434 = vmatpush1.msra.mxu0 %v1408
        %1435 = vmatprep.subr.mxu0 0.0
        %1436 = vmatpush1.msra.mxu0 %v1409
        %1437 = vmatprep.subr.mxu0 0.0
        %1438 = vmatpush1.msra.mxu0 %v1410
        %1439 = vmatprep.subr.mxu0 0.0
        %1440 = vmatpush1.msra.mxu0 %v1411
        %1441 = vmatprep.subr.mxu0 0.0
        %1442 = vmatpush1.msra.mxu0 %v1412
        %1443 = vmatprep.subr.mxu0 0.0
        %1444 = vmatpush1.msra.mxu0 %v1413
        %1445 = vmatprep.subr.mxu0 0.0
        %1446 = vmatpush1.msra.mxu0 %v1414
        %1447 = vmatprep.subr.mxu0 0.0
        %1448 = vmatpush1.msra.mxu0 %v1415
        %1449 = vmatprep.subr.mxu0 0.0
        %1450 = vmatpush1.msra.mxu0 %v1416
        %1451 = vmatprep.subr.mxu0 0.0
        %1452 = vmatpush1.msra.mxu0 %v1417
        %1453 = vmatprep.subr.mxu0 0.0
        %1454 = vmatpush1.msra.mxu0 %v1418
        %1455 = vmatprep.subr.mxu0 0.0
        %1456 = vmatpush1.msra.mxu0 %v1419
        %1457 = vmatprep.subr.mxu0 0.0
        %1458 = vmatpush1.msra.mxu0 %v1420
        %1459 = vmatprep.subr.mxu0 0.0
        %1460 = vmatpush1.msra.mxu0 %v1421
        %1461 = vmatprep.subr.mxu0 0.0
        %1462 = vmatpush1.msra.mxu0 0.0
        %1463 = vmatprep.subr.mxu0 0.0
        %1464 = vmatpush1.msra.mxu0 0.0
        %1465 = vmatprep.subr.mxu0 0.0
        %1466 = vmatpush1.msra.mxu0 0.0
        %1467 = vmatprep.subr.mxu0 0.0
        %1468 = vmatpush1.msra.mxu0 0.0
        %1469 = vmatprep.subr.mxu0 0.0
        %1470 = vmatpush1.msra.mxu0 0.0
        %1471 = vmatprep.subr.mxu0 0.0
        %1472 = vmatpush1.msra.mxu0 0.0
        %1473 = vmatprep.subr.mxu0 0.0
        %1474 = vmatpush1.msra.mxu0 0.0
        %1475 = vmatprep.subr.mxu0 0.0
        %1476 = vmatpush1.msra.mxu0 0.0
        %1477 = vmatprep.subr.mxu0 0.0
        %1478 = vmatpush1.msra.mxu0 0.0
        %1479 = vmatprep.subr.mxu0 0.0
        %1480 = vmatpush1.msra.mxu0 0.0
        %1481 = vmatprep.subr.mxu0 0.0
        %1482 = vmatpush1.msra.mxu0 0.0
        %1483 = vmatprep.subr.mxu0 0.0
        %1484 = vmatpush1.msra.mxu0 0.0
        %1485 = vmatprep.subr.mxu0 0.0
        %1486 = vmatpush1.msra.mxu0 0.0
        %1487 = vmatprep.subr.mxu0 0.0
        %1488 = vmatpush1.msra.mxu0 0.0
        %1489 = vmatprep.subr.mxu0 0.0
        %1490 = vmatpush1.msra.mxu0 0.0
        %1491 = vmatprep.subr.mxu0 0.0
        %1492 = vmatpush1.msra.mxu0 0.0
        %1493 = vmatprep.mubr.f32.mxu0 0.0
        %1494 = vmatmul.mubr.f32.gmra.mrb[0].mxu0 %v1405
        %v1495 = vpop.f32.mrb[0].mxu0
        %v1496 = vadd.f32 %v1427, %v1495
        %v1497 = vpop.f32.mrb[0].mxu0
        %1498 = vdwg.mxu0
        %v1499 = vadd.f32 %v1312, %v1496
        %v1500 = vld [vmem:[%s15] sm:$0x1]
        %v1501 = vld [vmem:[%s16] sm:$0x1]
        %v1502 = vsel %vm912, %v1499, 0.0
        %1503 = vadd.xlane.f32.xlu0 %v1502
        %v1504 = vpop.xlane.xlu0 %1503
        %v1505 = vmul.f32 %v1504, %v916
        %v1506 = vsub.f32 %v1499, %v1505
        %v1507 = vmul.f32 %v1506, %v1506
        %v1508 = vsel %vm912, %v1507, 0.0
        %1509 = vadd.xlane.f32.xlu0 %v1508
        %v1510 = vpop.xlane.xlu0 %1509
        %v1511 = vmul.f32 %v1510, %v916
        %v1512 = vadd.f32 %v1511, 1e-12
        %v1513 = vrsqrt.pop %v1512
        %v1514 = vmul.f32 %v1506, %v1513
        %v1516 = vlaneseq
        %v1517 = vshrl.u32 %v1516, 7
        %v1518 = vsub.s32 0, %v1517
        %v1519 = vrot.slane %v1500, %v1518
        %v1521 = vmul.f32 %v1514, %v1519
        %v1523 = vlaneseq
        %v1524 = vshrl.u32 %v1523, 7
        %v1525 = vsub.s32 0, %v1524
        %v1526 = vrot.slane %v1501, %v1525
        %v1528 = vadd.f32 %v1521, %v1526
        %v1529 = vld [vmem:[%s17] sm:$0xff]
        %v1530 = vld [vmem:[%s17 + $0x8] sm:$0xff]
        %v1531 = vld [vmem:[%s17 + $0x10] sm:$0xff]
        %v1532 = vld [vmem:[%s17 + $0x18] sm:$0xff]
        %v1533 = vld [vmem:[%s17 + $0x20] sm:$0xff]
        %v1534 = vld [vmem:[%s17 + $0x28] sm:$0xff]
        %v1535 = vld [vmem:[%s17 + $0x30] sm:$0xff]
        %v1536 = vld [vmem:[%s17 + $0x38] sm:$0xff]
        %v1537 = vld [vmem:[%s19] sm:$0x3]
        %v1539 = vlaneseq
        %v1540 = vshrl.u32 %v1539, 7
        %v1541 = vsub.s32 0, %v1540
        %v1542 = vrot.slane %v1537, %v1541
        %v1543 = vlaneseq
        %v1544 = vshrl.u32 %v1543, 7
        %v1545 = vsub.s32 1, %v1544
        %v1546 = vrot.slane %v1537, %v1545
        %v1550 = vsel %vm912, %v1528, 0
        %1552 = vmatprep.subr.mxu0 %v1530
        %1553 = vmatpush1.msra.mxu0 %v1529
        %1554 = vmatprep.subr.mxu0 %v1532
        %1555 = vmatpush1.msra.mxu0 %v1531
        %1556 = vmatprep.subr.mxu0 %v1534
        %1557 = vmatpush1.msra.mxu0 %v1533
        %1558 = vmatprep.subr.mxu0 %v1536
        %1559 = vmatpush1.msra.mxu0 %v1535
        %1560 = vmatprep.subr.mxu0 0.0
        %1561 = vmatpush1.msra.mxu0 0.0
        %1562 = vmatprep.subr.mxu0 0.0
        %1563 = vmatpush1.msra.mxu0 0.0
        %1564 = vmatprep.subr.mxu0 0.0
        %1565 = vmatpush1.msra.mxu0 0.0
        %1566 = vmatprep.subr.mxu0 0.0
        %1567 = vmatpush1.msra.mxu0 0.0
        %1568 = vmatprep.subr.mxu0 0.0
        %1569 = vmatpush1.msra.mxu0 0.0
        %1570 = vmatprep.subr.mxu0 0.0
        %1571 = vmatpush1.msra.mxu0 0.0
        %1572 = vmatprep.subr.mxu0 0.0
        %1573 = vmatpush1.msra.mxu0 0.0
        %1574 = vmatprep.subr.mxu0 0.0
        %1575 = vmatpush1.msra.mxu0 0.0
        %1576 = vmatprep.subr.mxu0 0.0
        %1577 = vmatpush1.msra.mxu0 0.0
        %1578 = vmatprep.subr.mxu0 0.0
        %1579 = vmatpush1.msra.mxu0 0.0
        %1580 = vmatprep.subr.mxu0 0.0
        %1581 = vmatpush1.msra.mxu0 0.0
        %1582 = vmatprep.subr.mxu0 0.0
        %1583 = vmatpush1.msra.mxu0 0.0
        %1584 = vmatprep.subr.mxu0 0.0
        %1585 = vmatpush1.msra.mxu0 0.0
        %1586 = vmatprep.subr.mxu0 0.0
        %1587 = vmatpush1.msra.mxu0 0.0
        %1588 = vmatprep.subr.mxu0 0.0
        %1589 = vmatpush1.msra.mxu0 0.0
        %1590 = vmatprep.subr.mxu0 0.0
        %1591 = vmatpush1.msra.mxu0 0.0
        %1592 = vmatprep.subr.mxu0 0.0
        %1593 = vmatpush1.msra.mxu0 0.0
        %1594 = vmatprep.subr.mxu0 0.0
        %1595 = vmatpush1.msra.mxu0 0.0
        %1596 = vmatprep.subr.mxu0 0.0
        %1597 = vmatpush1.msra.mxu0 0.0
        %1598 = vmatprep.subr.mxu0 0.0
        %1599 = vmatpush1.msra.mxu0 0.0
        %1600 = vmatprep.subr.mxu0 0.0
        %1601 = vmatpush1.msra.mxu0 0.0
        %1602 = vmatprep.subr.mxu0 0.0
        %1603 = vmatpush1.msra.mxu0 0.0
        %1604 = vmatprep.subr.mxu0 0.0
        %1605 = vmatpush1.msra.mxu0 0.0
        %1606 = vmatprep.subr.mxu0 0.0
        %1607 = vmatpush1.msra.mxu0 0.0
        %1608 = vmatprep.subr.mxu0 0.0
        %1609 = vmatpush1.msra.mxu0 0.0
        %1610 = vmatprep.subr.mxu0 0.0
        %1611 = vmatpush1.msra.mxu0 0.0
        %1612 = vmatprep.subr.mxu0 0.0
        %1613 = vmatpush1.msra.mxu0 0.0
        %1614 = vmatprep.subr.mxu0 0.0
        %1615 = vmatpush1.msra.mxu0 0.0
        %1616 = vmatprep.mubr.f32.mxu0 0.0
        %1617 = vmatmul.mubr.f32.gmra.mrb[0].mxu0 %v1550
        %v1618 = vpop.f32.mrb[0].mxu0
        %v1619 = vadd.f32 %v1542, %v1618
        %v1620 = vpop.f32.mrb[0].mxu0
        %v1621 = vadd.f32 %v1546, %v1620
        %1622 = vdwg.mxu0
        %v1623 = vld [vmem:[%s18] sm:$0xff]
        %v1624 = vld [vmem:[%s18 + $0x8] sm:$0xff]
        %v1625 = vld [vmem:[%s18 + $0x10] sm:$0xff]
        %v1626 = vld [vmem:[%s18 + $0x18] sm:$0xff]
        %v1627 = vld [vmem:[%s18 + $0x20] sm:$0xff]
        %v1628 = vld [vmem:[%s18 + $0x28] sm:$0xff]
        %v1629 = vld [vmem:[%s18 + $0x30] sm:$0xff]
        %v1630 = vld [vmem:[%s18 + $0x38] sm:$0xff]
        %v1631 = vld [vmem:[%s18 + $0x40] sm:$0xff]
        %v1632 = vld [vmem:[%s18 + $0x48] sm:$0xff]
        %v1633 = vld [vmem:[%s18 + $0x50] sm:$0xff]
        %v1634 = vld [vmem:[%s18 + $0x58] sm:$0xff]
        %v1635 = vld [vmem:[%s18 + $0x60] sm:$0xff]
        %v1636 = vld [vmem:[%s18 + $0x68] sm:$0xff]
        %v1637 = vld [vmem:[%s18 + $0x70] sm:$0xff]
        %v1638 = vld [vmem:[%s18 + $0x78] sm:$0xff]
        %v1639 = vlaneseq
        %v1640 = vand.u32 %v1639, 127
        %v1641 = vadd.s32 %v1640, 128
        %v1642 = vand.u32 %v1640, 32
        %v1643 = vand.u32 %v1641, 32
        %vm1644 = vcmp.eq.s32.totalorder %v1642, 0
        %vm1645 = vcmp.eq.s32.totalorder %v1643, 0
        %v1648 = vrot.slane %v1619, 7
        %v1649 = vrot.slane %v1621, 7
        %v1652 = vsel %vm1644, %v1619, %v1648
        %v1653 = vsel %vm1645, %v1621, %v1649
        %vm1654 = vcmask 523264
        %v1656 = vsel %vm1654, 0.0, 0
        %1658 = vmatprep.subr.mxu0 %v1624
        %1659 = vmatpush1.msra.mxu0 %v1623
        %1660 = vmatprep.subr.mxu0 %v1626
        %1661 = vmatpush1.msra.mxu0 %v1625
        %1662 = vmatprep.subr.mxu0 %v1628
        %1663 = vmatpush1.msra.mxu0 %v1627
        %1664 = vmatprep.subr.mxu0 %v1630
        %1665 = vmatpush1.msra.mxu0 %v1629
        %1666 = vmatprep.subr.mxu0 %v1632
        %1667 = vmatpush1.msra.mxu0 %v1631
        %1668 = vmatprep.subr.mxu0 %v1634
        %1669 = vmatpush1.msra.mxu0 %v1633
        %1670 = vmatprep.subr.mxu0 %v1636
        %1671 = vmatpush1.msra.mxu0 %v1635
        %1672 = vmatprep.subr.mxu0 %v1638
        %1673 = vmatpush1.msra.mxu0 %v1637
        %1674 = vmatprep.subr.mxu0 0.0
        %1675 = vmatpush1.msra.mxu0 0.0
        %1676 = vmatprep.subr.mxu0 0.0
        %1677 = vmatpush1.msra.mxu0 0.0
        %1678 = vmatprep.subr.mxu0 0.0
        %1679 = vmatpush1.msra.mxu0 0.0
        %1680 = vmatprep.subr.mxu0 0.0
        %1681 = vmatpush1.msra.mxu0 0.0
        %1682 = vmatprep.subr.mxu0 0.0
        %1683 = vmatpush1.msra.mxu0 0.0
        %1684 = vmatprep.subr.mxu0 0.0
        %1685 = vmatpush1.msra.mxu0 0.0
        %1686 = vmatprep.subr.mxu0 0.0
        %1687 = vmatpush1.msra.mxu0 0.0
        %1688 = vmatprep.subr.mxu0 0.0
        %1689 = vmatpush1.msra.mxu0 0.0
        %1690 = vmatprep.subr.mxu0 0.0
        %1691 = vmatpush1.msra.mxu0 0.0
        %1692 = vmatprep.subr.mxu0 0.0
        %1693 = vmatpush1.msra.mxu0 0.0
        %1694 = vmatprep.subr.mxu0 0.0
        %1695 = vmatpush1.msra.mxu0 0.0
        %1696 = vmatprep.subr.mxu0 0.0
        %1697 = vmatpush1.msra.mxu0 0.0
        %1698 = vmatprep.subr.mxu0 0.0
        %1699 = vmatpush1.msra.mxu0 0.0
        %1700 = vmatprep.subr.mxu0 0.0
        %1701 = vmatpush1.msra.mxu0 0.0
        %1702 = vmatprep.subr.mxu0 0.0
        %1703 = vmatpush1.msra.mxu0 0.0
        %1704 = vmatprep.subr.mxu0 0.0
        %1705 = vmatpush1.msra.mxu0 0.0
        %1706 = vmatprep.subr.mxu0 0.0
        %1707 = vmatpush1.msra.mxu0 0.0
        %1708 = vmatprep.subr.mxu0 0.0
        %1709 = vmatpush1.msra.mxu0 0.0
        %1710 = vmatprep.subr.mxu0 0.0
        %1711 = vmatpush1.msra.mxu0 0.0
        %1712 = vmatprep.subr.mxu0 0.0
        %1713 = vmatpush1.msra.mxu0 0.0
        %1714 = vmatprep.subr.mxu0 0.0
        %1715 = vmatpush1.msra.mxu0 0.0
        %1716 = vmatprep.subr.mxu0 0.0
        %1717 = vmatpush1.msra.mxu0 0.0
        %1718 = vmatprep.subr.mxu0 0.0
        %1719 = vmatpush1.msra.mxu0 0.0
        %1720 = vmatprep.subr.mxu0 0.0
        %1721 = vmatpush1.msra.mxu0 0.0
        %1722 = vmatprep.mubr.f32.mxu0 0.0
        %1723 = vmatmul.mubr.f32.gmra.mrb[0].mxu0 %v1656
        %v1724 = vpop.f32.mrb[0].mxu0
        %v1725 = vadd.f32 0.0, %v1724
        %v1726 = vpop.f32.mrb[0].mxu0
        %v1727 = vadd.f32 0.0, %v1726
        %1728 = vdwg.mxu0
        %v1729 = vadd.f32 %v1652, %v1725
        %v1730 = vadd.f32 %v1653, %v1727
        %v1731 = vxor.u32 %v1729, 2147483648
        %v1732 = vmul.f32 %v1731, 1.442695
        %v1733 = vpow.pop %v1732
        %v1734 = vadd.f32 %v1733, 1.0
        %v1735 = vrcp.pop %v1734
        %v1736 = vmul.f32 1.0, %v1735
        %v1737 = vtanh.pop %v1730
        %v1738 = vxor.u32 %v1730, 2147483648
        %v1739 = vmul.f32 %v1738, 1.442695
        %v1740 = vpow.pop %v1739
        %v1741 = vadd.f32 %v1740, 1.0
        %v1742 = vrcp.pop %v1741
        %v1743 = vmul.f32 1.0, %v1742
        %v1744 = vmul.f32 %v1736, 0.0
        %v1745 = vmul.f32 %v1736, %v1737
        %1747 = vrot.lane.b32.xlu0 %v1745, 64
        %v1748 = vpop.permute.xlu0 %1747
        %v1750 = vadd.f32 %v1744, %v1748
        %v1751 = vtanh.pop %v1750
        %v1752 = vmul.f32 %v1743, %v1751
        %1754 = vrot.lane.b32.xlu0 %v1752, 64
        %v1755 = vpop.permute.xlu0 %1754
        %vm1757 = vcmask 253952
        %1758 = vst.msk [vmem:[#allocation2] sm:$0x1] %vm1757, %v1755
        %1759 = vrot.lane.b32.xlu0 %v1752, 32
        %v1760 = vpop.permute.xlu0 %1759
        %s1762 = scalar_lea.vmem [#allocation2], 8
        %1763 = vst.msk [vmem:[%s1762 + $0x7] sm:$0x1] %vm1757, %v1760
        %v1764 = vrot.slane %v1619, 5
        %v1765 = vrot.slane %v1621, 5
        %v1768 = vsel %vm1644, %v1619, %v1764
        %v1769 = vsel %vm1645, %v1621, %v1765
        %v1770 = vsel %vm1654, %v1755, 0
        %1772 = vmatprep.subr.mxu0 %v1624
        %1773 = vmatpush1.msra.mxu0 %v1623
        %1774 = vmatprep.subr.mxu0 %v1626
        %1775 = vmatpush1.msra.mxu0 %v1625
        %1776 = vmatprep.subr.mxu0 %v1628
        %1777 = vmatpush1.msra.mxu0 %v1627
        %1778 = vmatprep.subr.mxu0 %v1630
        %1779 = vmatpush1.msra.mxu0 %v1629
        %1780 = vmatprep.subr.mxu0 %v1632
        %1781 = vmatpush1.msra.mxu0 %v1631
        %1782 = vmatprep.subr.mxu0 %v1634
        %1783 = vmatpush1.msra.mxu0 %v1633
        %1784 = vmatprep.subr.mxu0 %v1636
        %1785 = vmatpush1.msra.mxu0 %v1635
        %1786 = vmatprep.subr.mxu0 %v1638
        %1787 = vmatpush1.msra.mxu0 %v1637
        %1788 = vmatprep.subr.mxu0 0.0
        %1789 = vmatpush1.msra.mxu0 0.0
        %1790 = vmatprep.subr.mxu0 0.0
        %1791 = vmatpush1.msra.mxu0 0.0
        %1792 = vmatprep.subr.mxu0 0.0
        %1793 = vmatpush1.msra.mxu0 0.0
        %1794 = vmatprep.subr.mxu0 0.0
        %1795 = vmatpush1.msra.mxu0 0.0
        %1796 = vmatprep.subr.mxu0 0.0
        %1797 = vmatpush1.msra.mxu0 0.0
        %1798 = vmatprep.subr.mxu0 0.0
        %1799 = vmatpush1.msra.mxu0 0.0
        %1800 = vmatprep.subr.mxu0 0.0
        %1801 = vmatpush1.msra.mxu0 0.0
        %1802 = vmatprep.subr.mxu0 0.0
        %1803 = vmatpush1.msra.mxu0 0.0
        %1804 = vmatprep.subr.mxu0 0.0
        %1805 = vmatpush1.msra.mxu0 0.0
        %1806 = vmatprep.subr.mxu0 0.0
        %1807 = vmatpush1.msra.mxu0 0.0
        %1808 = vmatprep.subr.mxu0 0.0
        %1809 = vmatpush1.msra.mxu0 0.0
        %1810 = vmatprep.subr.mxu0 0.0
        %1811 = vmatpush1.msra.mxu0 0.0
        %1812 = vmatprep.subr.mxu0 0.0
        %1813 = vmatpush1.msra.mxu0 0.0
        %1814 = vmatprep.subr.mxu0 0.0
        %1815 = vmatpush1.msra.mxu0 0.0
        %1816 = vmatprep.subr.mxu0 0.0
        %1817 = vmatpush1.msra.mxu0 0.0
        %1818 = vmatprep.subr.mxu0 0.0
        %1819 = vmatpush1.msra.mxu0 0.0
        %1820 = vmatprep.subr.mxu0 0.0
        %1821 = vmatpush1.msra.mxu0 0.0
        %1822 = vmatprep.subr.mxu0 0.0
        %1823 = vmatpush1.msra.mxu0 0.0
        %1824 = vmatprep.subr.mxu0 0.0
        %1825 = vmatpush1.msra.mxu0 0.0
        %1826 = vmatprep.subr.mxu0 0.0
        %1827 = vmatpush1.msra.mxu0 0.0
        %1828 = vmatprep.subr.mxu0 0.0
        %1829 = vmatpush1.msra.mxu0 0.0
        %1830 = vmatprep.subr.mxu0 0.0
        %1831 = vmatpush1.msra.mxu0 0.0
        %1832 = vmatprep.subr.mxu0 0.0
        %1833 = vmatpush1.msra.mxu0 0.0
        %1834 = vmatprep.subr.mxu0 0.0
        %1835 = vmatpush1.msra.mxu0 0.0
        %1836 = vmatprep.mubr.f32.mxu0 0.0
        %1837 = vmatmul.mubr.f32.gmra.mrb[0].mxu0 %v1770
        %v1838 = vpop.f32.mrb[0].mxu0
        %v1839 = vadd.f32 0.0, %v1838
        %v1840 = vpop.f32.mrb[0].mxu0
        %v1841 = vadd.f32 0.0, %v1840
        %1842 = vdwg.mxu0
        %v1845 = vrot.slane %v1839, 7
        %v1846 = vrot.slane %v1841, 7
        %v1849 = vadd.f32 %v1768, %v1845
        %v1850 = vadd.f32 %v1769, %v1846
        %v1851 = vxor.u32 %v1849, 2147483648
        %v1852 = vmul.f32 %v1851, 1.442695
        %v1853 = vpow.pop %v1852
        %v1854 = vadd.f32 %v1853, 1.0
        %v1855 = vrcp.pop %v1854
        %v1856 = vmul.f32 1.0, %v1855
        %v1857 = vtanh.pop %v1850
        %v1858 = vxor.u32 %v1850, 2147483648
        %v1859 = vmul.f32 %v1858, 1.442695
        %v1860 = vpow.pop %v1859
        %v1861 = vadd.f32 %v1860, 1.0
        %v1862 = vrcp.pop %v1861
        %v1863 = vmul.f32 1.0, %v1862
        %v1865 = vrot.slane %v1750, 7
        %v1867 = vmul.f32 %v1856, %v1865
        %v1868 = vmul.f32 %v1856, %v1857
        %1870 = vrot.lane.b32.xlu0 %v1868, 64
        %v1871 = vpop.permute.xlu0 %1870
        %v1873 = vadd.f32 %v1867, %v1871
        %v1874 = vtanh.pop %v1873
        %v1875 = vmul.f32 %v1863, %v1874
        %1877 = vrot.lane.b32.xlu0 %v1875, 64
        %v1878 = vpop.permute.xlu0 %1877
        %vm1880 = vcmask 254977
        %1881 = vst.msk [vmem:[#allocation2] sm:$0x2] %vm1880, %v1878
        %1882 = vrot.lane.b32.xlu0 %v1875, 32
        %v1883 = vpop.permute.xlu0 %1882
        %1885 = vst.msk [vmem:[%s1762 + $0x5] sm:$0x2] %vm1880, %v1883
        %v1886 = vrot.slane %v1619, 3
        %v1887 = vrot.slane %v1621, 3
        %v1890 = vsel %vm1644, %v1619, %v1886
        %v1891 = vsel %vm1645, %v1621, %v1887
        %v1892 = vrot.slane %v1875, 1
        %1893 = vrot.lane.b32.xlu0 %v1892, 64
        %v1894 = vpop.permute.xlu0 %1893
        %v1895 = vsel %vm1654, %v1894, 0
        %1897 = vmatprep.subr.mxu0 %v1624
        %1898 = vmatpush1.msra.mxu0 %v1623
        %1899 = vmatprep.subr.mxu0 %v1626
        %1900 = vmatpush1.msra.mxu0 %v1625
        %1901 = vmatprep.subr.mxu0 %v1628
        %1902 = vmatpush1.msra.mxu0 %v1627
        %1903 = vmatprep.subr.mxu0 %v1630
        %1904 = vmatpush1.msra.mxu0 %v1629
        %1905 = vmatprep.subr.mxu0 %v1632
        %1906 = vmatpush1.msra.mxu0 %v1631
        %1907 = vmatprep.subr.mxu0 %v1634
        %1908 = vmatpush1.msra.mxu0 %v1633
        %1909 = vmatprep.subr.mxu0 %v1636
        %1910 = vmatpush1.msra.mxu0 %v1635
        %1911 = vmatprep.subr.mxu0 %v1638
        %1912 = vmatpush1.msra.mxu0 %v1637
        %1913 = vmatprep.subr.mxu0 0.0
        %1914 = vmatpush1.msra.mxu0 0.0
        %1915 = vmatprep.subr.mxu0 0.0
        %1916 = vmatpush1.msra.mxu0 0.0
        %1917 = vmatprep.subr.mxu0 0.0
        %1918 = vmatpush1.msra.mxu0 0.0
        %1919 = vmatprep.subr.mxu0 0.0
        %1920 = vmatpush1.msra.mxu0 0.0
        %1921 = vmatprep.subr.mxu0 0.0
        %1922 = vmatpush1.msra.mxu0 0.0
        %1923 = vmatprep.subr.mxu0 0.0
        %1924 = vmatpush1.msra.mxu0 0.0
        %1925 = vmatprep.subr.mxu0 0.0
        %1926 = vmatpush1.msra.mxu0 0.0
        %1927 = vmatprep.subr.mxu0 0.0
        %1928 = vmatpush1.msra.mxu0 0.0
        %1929 = vmatprep.subr.mxu0 0.0
        %1930 = vmatpush1.msra.mxu0 0.0
        %1931 = vmatprep.subr.mxu0 0.0
        %1932 = vmatpush1.msra.mxu0 0.0
        %1933 = vmatprep.subr.mxu0 0.0
        %1934 = vmatpush1.msra.mxu0 0.0
        %1935 = vmatprep.subr.mxu0 0.0
        %1936 = vmatpush1.msra.mxu0 0.0
        %1937 = vmatprep.subr.mxu0 0.0
        %1938 = vmatpush1.msra.mxu0 0.0
        %1939 = vmatprep.subr.mxu0 0.0
        %1940 = vmatpush1.msra.mxu0 0.0
        %1941 = vmatprep.subr.mxu0 0.0
        %1942 = vmatpush1.msra.mxu0 0.0
        %1943 = vmatprep.subr.mxu0 0.0
        %1944 = vmatpush1.msra.mxu0 0.0
        %1945 = vmatprep.subr.mxu0 0.0
        %1946 = vmatpush1.msra.mxu0 0.0
        %1947 = vmatprep.subr.mxu0 0.0
        %1948 = vmatpush1.msra.mxu0 0.0
        %1949 = vmatprep.subr.mxu0 0.0
        %1950 = vmatpush1.msra.mxu0 0.0
        %1951 = vmatprep.subr.mxu0 0.0
        %1952 = vmatpush1.msra.mxu0 0.0
        %1953 = vmatprep.subr.mxu0 0.0
        %1954 = vmatpush1.msra.mxu0 0.0
        %1955 = vmatprep.subr.mxu0 0.0
        %1956 = vmatpush1.msra.mxu0 0.0
        %1957 = vmatprep.subr.mxu0 0.0
        %1958 = vmatpush1.msra.mxu0 0.0
        %1959 = vmatprep.subr.mxu0 0.0
        %1960 = vmatpush1.msra.mxu0 0.0
        %1961 = vmatprep.mubr.f32.mxu0 0.0
        %1962 = vmatmul.mubr.f32.gmra.mrb[0].mxu0 %v1895
        %v1963 = vpop.f32.mrb[0].mxu0
        %v1964 = vadd.f32 0.0, %v1963
        %v1965 = vpop.f32.mrb[0].mxu0
        %v1966 = vadd.f32 0.0, %v1965
        %1967 = vdwg.mxu0
        %v1970 = vrot.slane %v1964, 6
        %v1971 = vrot.slane %v1966, 6
        %v1974 = vadd.f32 %v1890, %v1970
        %v1975 = vadd.f32 %v1891, %v1971
        %v1976 = vxor.u32 %v1974, 2147483648
        %v1977 = vmul.f32 %v1976, 1.442695
        %v1978 = vpow.pop %v1977
        %v1979 = vadd.f32 %v1978, 1.0
        %v1980 = vrcp.pop %v1979
        %v1981 = vmul.f32 1.0, %v1980
        %v1982 = vtanh.pop %v1975
        %v1983 = vxor.u32 %v1975, 2147483648
        %v1984 = vmul.f32 %v1983, 1.442695
        %v1985 = vpow.pop %v1984
        %v1986 = vadd.f32 %v1985, 1.0
        %v1987 = vrcp.pop %v1986
        %v1988 = vmul.f32 1.0, %v1987
        %v1990 = vrot.slane %v1873, 7
        %v1992 = vmul.f32 %v1981, %v1990
        %v1993 = vmul.f32 %v1981, %v1982
        %1995 = vrot.lane.b32.xlu0 %v1993, 64
        %v1996 = vpop.permute.xlu0 %1995
        %v1998 = vadd.f32 %v1992, %v1996
        %v1999 = vtanh.pop %v1998
        %v2000 = vmul.f32 %v1988, %v1999
        %2002 = vrot.lane.b32.xlu0 %v2000, 64
        %v2003 = vpop.permute.xlu0 %2002
        %vm2005 = vcmask 256002
        %2006 = vst.msk [vmem:[#allocation2] sm:$0x4] %vm2005, %v2003
        %2007 = vrot.lane.b32.xlu0 %v2000, 32
        %v2008 = vpop.permute.xlu0 %2007
        %2010 = vst.msk [vmem:[%s1762 + $0x3] sm:$0x4] %vm2005, %v2008
        %v2011 = vrot.slane %v1619, 1
        %v2012 = vrot.slane %v1621, 1
        %v2015 = vsel %vm1644, %v1619, %v2011
        %v2016 = vsel %vm1645, %v1621, %v2012
        %v2017 = vrot.slane %v2000, 2
        %2018 = vrot.lane.b32.xlu0 %v2017, 64
        %v2019 = vpop.permute.xlu0 %2018
        %v2020 = vsel %vm1654, %v2019, 0
        %2022 = vmatprep.subr.mxu0 %v1624
        %2023 = vmatpush1.msra.mxu0 %v1623
        %2024 = vmatprep.subr.mxu0 %v1626
        %2025 = vmatpush1.msra.mxu0 %v1625
        %2026 = vmatprep.subr.mxu0 %v1628
        %2027 = vmatpush1.msra.mxu0 %v1627
        %2028 = vmatprep.subr.mxu0 %v1630
        %2029 = vmatpush1.msra.mxu0 %v1629
        %2030 = vmatprep.subr.mxu0 %v1632
        %2031 = vmatpush1.msra.mxu0 %v1631
        %2032 = vmatprep.subr.mxu0 %v1634
        %2033 = vmatpush1.msra.mxu0 %v1633
        %2034 = vmatprep.subr.mxu0 %v1636
        %2035 = vmatpush1.msra.mxu0 %v1635
        %2036 = vmatprep.subr.mxu0 %v1638
        %2037 = vmatpush1.msra.mxu0 %v1637
        %2038 = vmatprep.subr.mxu0 0.0
        %2039 = vmatpush1.msra.mxu0 0.0
        %2040 = vmatprep.subr.mxu0 0.0
        %2041 = vmatpush1.msra.mxu0 0.0
        %2042 = vmatprep.subr.mxu0 0.0
        %2043 = vmatpush1.msra.mxu0 0.0
        %2044 = vmatprep.subr.mxu0 0.0
        %2045 = vmatpush1.msra.mxu0 0.0
        %2046 = vmatprep.subr.mxu0 0.0
        %2047 = vmatpush1.msra.mxu0 0.0
        %2048 = vmatprep.subr.mxu0 0.0
        %2049 = vmatpush1.msra.mxu0 0.0
        %2050 = vmatprep.subr.mxu0 0.0
        %2051 = vmatpush1.msra.mxu0 0.0
        %2052 = vmatprep.subr.mxu0 0.0
        %2053 = vmatpush1.msra.mxu0 0.0
        %2054 = vmatprep.subr.mxu0 0.0
        %2055 = vmatpush1.msra.mxu0 0.0
        %2056 = vmatprep.subr.mxu0 0.0
        %2057 = vmatpush1.msra.mxu0 0.0
        %2058 = vmatprep.subr.mxu0 0.0
        %2059 = vmatpush1.msra.mxu0 0.0
        %2060 = vmatprep.subr.mxu0 0.0
        %2061 = vmatpush1.msra.mxu0 0.0
        %2062 = vmatprep.subr.mxu0 0.0
        %2063 = vmatpush1.msra.mxu0 0.0
        %2064 = vmatprep.subr.mxu0 0.0
        %2065 = vmatpush1.msra.mxu0 0.0
        %2066 = vmatprep.subr.mxu0 0.0
        %2067 = vmatpush1.msra.mxu0 0.0
        %2068 = vmatprep.subr.mxu0 0.0
        %2069 = vmatpush1.msra.mxu0 0.0
        %2070 = vmatprep.subr.mxu0 0.0
        %2071 = vmatpush1.msra.mxu0 0.0
        %2072 = vmatprep.subr.mxu0 0.0
        %2073 = vmatpush1.msra.mxu0 0.0
        %2074 = vmatprep.subr.mxu0 0.0
        %2075 = vmatpush1.msra.mxu0 0.0
        %2076 = vmatprep.subr.mxu0 0.0
        %2077 = vmatpush1.msra.mxu0 0.0
        %2078 = vmatprep.subr.mxu0 0.0
        %2079 = vmatpush1.msra.mxu0 0.0
        %2080 = vmatprep.subr.mxu0 0.0
        %2081 = vmatpush1.msra.mxu0 0.0
        %2082 = vmatprep.subr.mxu0 0.0
        %2083 = vmatpush1.msra.mxu0 0.0
        %2084 = vmatprep.subr.mxu0 0.0
        %2085 = vmatpush1.msra.mxu0 0.0
        %2086 = vmatprep.mubr.f32.mxu0 0.0
        %2087 = vmatmul.mubr.f32.gmra.mrb[0].mxu0 %v2020
        %v2088 = vpop.f32.mrb[0].mxu0
        %v2089 = vadd.f32 0.0, %v2088
        %v2090 = vpop.f32.mrb[0].mxu0
        %v2091 = vadd.f32 0.0, %v2090
        %2092 = vdwg.mxu0
        %v2095 = vrot.slane %v2089, 5
        %v2096 = vrot.slane %v2091, 5
        %v2099 = vadd.f32 %v2015, %v2095
        %v2100 = vadd.f32 %v2016, %v2096
        %v2101 = vxor.u32 %v2099, 2147483648
        %v2102 = vmul.f32 %v2101, 1.442695
        %v2103 = vpow.pop %v2102
        %v2104 = vadd.f32 %v2103, 1.0
        %v2105 = vrcp.pop %v2104
        %v2106 = vmul.f32 1.0, %v2105
        %v2107 = vtanh.pop %v2100
        %v2108 = vxor.u32 %v2100, 2147483648
        %v2109 = vmul.f32 %v2108, 1.442695
        %v2110 = vpow.pop %v2109
        %v2111 = vadd.f32 %v2110, 1.0
        %v2112 = vrcp.pop %v2111
        %v2113 = vmul.f32 1.0, %v2112
        %v2115 = vrot.slane %v1998, 7
        %v2117 = vmul.f32 %v2106, %v2115
        %v2118 = vmul.f32 %v2106, %v2107
        %2120 = vrot.lane.b32.xlu0 %v2118, 64
        %v2121 = vpop.permute.xlu0 %2120
        %v2123 = vadd.f32 %v2117, %v2121
        %v2124 = vtanh.pop %v2123
        %v2125 = vmul.f32 %v2113, %v2124
        %2127 = vrot.lane.b32.xlu0 %v2125, 64
        %v2128 = vpop.permute.xlu0 %2127
        %vm2130 = vcmask 257027
        %2131 = vst.msk [vmem:[#allocation2] sm:$0x8] %vm2130, %v2128
        %2132 = vrot.lane.b32.xlu0 %v2125, 32
        %v2133 = vpop.permute.xlu0 %2132
        %2135 = vst.msk [vmem:[%s1762 + $0x1] sm:$0x8] %vm2130, %v2133
        %v2136 = vrot.slane %v2125, 3
        %2137 = vrot.lane.b32.xlu0 %v2136, 64
        %v2138 = vpop.permute.xlu0 %2137
        %v2139 = vsel %vm1654, %v2138, 0
        %2141 = vmatprep.subr.mxu0 %v1624
        %2142 = vmatpush1.msra.mxu0 %v1623
        %2143 = vmatprep.subr.mxu0 %v1626
        %2144 = vmatpush1.msra.mxu0 %v1625
        %2145 = vmatprep.subr.mxu0 %v1628
        %2146 = vmatpush1.msra.mxu0 %v1627
        %2147 = vmatprep.subr.mxu0 %v1630
        %2148 = vmatpush1.msra.mxu0 %v1629
        %2149 = vmatprep.subr.mxu0 %v1632
        %2150 = vmatpush1.msra.mxu0 %v1631
        %2151 = vmatprep.subr.mxu0 %v1634
        %2152 = vmatpush1.msra.mxu0 %v1633
        %2153 = vmatprep.subr.mxu0 %v1636
        %2154 = vmatpush1.msra.mxu0 %v1635
        %2155 = vmatprep.subr.mxu0 %v1638
        %2156 = vmatpush1.msra.mxu0 %v1637
        %2157 = vmatprep.subr.mxu0 0.0
        %2158 = vmatpush1.msra.mxu0 0.0
        %2159 = vmatprep.subr.mxu0 0.0
        %2160 = vmatpush1.msra.mxu0 0.0
        %2161 = vmatprep.subr.mxu0 0.0
        %2162 = vmatpush1.msra.mxu0 0.0
        %2163 = vmatprep.subr.mxu0 0.0
        %2164 = vmatpush1.msra.mxu0 0.0
        %2165 = vmatprep.subr.mxu0 0.0
        %2166 = vmatpush1.msra.mxu0 0.0
        %2167 = vmatprep.subr.mxu0 0.0
        %2168 = vmatpush1.msra.mxu0 0.0
        %2169 = vmatprep.subr.mxu0 0.0
        %2170 = vmatpush1.msra.mxu0 0.0
        %2171 = vmatprep.subr.mxu0 0.0
        %2172 = vmatpush1.msra.mxu0 0.0
        %2173 = vmatprep.subr.mxu0 0.0
        %2174 = vmatpush1.msra.mxu0 0.0
        %2175 = vmatprep.subr.mxu0 0.0
        %2176 = vmatpush1.msra.mxu0 0.0
        %2177 = vmatprep.subr.mxu0 0.0
        %2178 = vmatpush1.msra.mxu0 0.0
        %2179 = vmatprep.subr.mxu0 0.0
        %2180 = vmatpush1.msra.mxu0 0.0
        %2181 = vmatprep.subr.mxu0 0.0
        %2182 = vmatpush1.msra.mxu0 0.0
        %2183 = vmatprep.subr.mxu0 0.0
        %2184 = vmatpush1.msra.mxu0 0.0
        %2185 = vmatprep.subr.mxu0 0.0
        %2186 = vmatpush1.msra.mxu0 0.0
        %2187 = vmatprep.subr.mxu0 0.0
        %2188 = vmatpush1.msra.mxu0 0.0
        %2189 = vmatprep.subr.mxu0 0.0
        %2190 = vmatpush1.msra.mxu0 0.0
        %2191 = vmatprep.subr.mxu0 0.0
        %2192 = vmatpush1.msra.mxu0 0.0
        %2193 = vmatprep.subr.mxu0 0.0
        %2194 = vmatpush1.msra.mxu0 0.0
        %2195 = vmatprep.subr.mxu0 0.0
        %2196 = vmatpush1.msra.mxu0 0.0
        %2197 = vmatprep.subr.mxu0 0.0
        %2198 = vmatpush1.msra.mxu0 0.0
        %2199 = vmatprep.subr.mxu0 0.0
        %2200 = vmatpush1.msra.mxu0 0.0
        %2201 = vmatprep.subr.mxu0 0.0
        %2202 = vmatpush1.msra.mxu0 0.0
        %2203 = vmatprep.subr.mxu0 0.0
        %2204 = vmatpush1.msra.mxu0 0.0
        %2205 = vmatprep.mubr.f32.mxu0 0.0
        %2206 = vmatmul.mubr.f32.gmra.mrb[0].mxu0 %v2139
        %v2207 = vpop.f32.mrb[0].mxu0
        %v2208 = vadd.f32 0.0, %v2207
        %v2209 = vpop.f32.mrb[0].mxu0
        %v2210 = vadd.f32 0.0, %v2209
        %2211 = vdwg.mxu0
        %v2214 = vrot.slane %v2208, 4
        %v2215 = vrot.slane %v2210, 4
        %v2218 = vadd.f32 %v1652, %v2214
        %v2219 = vadd.f32 %v1653, %v2215
        %v2220 = vxor.u32 %v2218, 2147483648
        %v2221 = vmul.f32 %v2220, 1.442695
        %v2222 = vpow.pop %v2221
        %v2223 = vadd.f32 %v2222, 1.0
        %v2224 = vrcp.pop %v2223
        %v2225 = vmul.f32 1.0, %v2224
        %v2226 = vtanh.pop %v2219
        %v2227 = vxor.u32 %v2219, 2147483648
        %v2228 = vmul.f32 %v2227, 1.442695
        %v2229 = vpow.pop %v2228
        %v2230 = vadd.f32 %v2229, 1.0
        %v2231 = vrcp.pop %v2230
        %v2232 = vmul.f32 1.0, %v2231
        %v2234 = vrot.slane %v2123, 7
        %v2236 = vmul.f32 %v2225, %v2234
        %v2237 = vmul.f32 %v2225, %v2226
        %2239 = vrot.lane.b32.xlu0 %v2237, 64
        %v2240 = vpop.permute.xlu0 %2239
        %v2242 = vadd.f32 %v2236, %v2240
        %v2243 = vtanh.pop %v2242
        %v2244 = vmul.f32 %v2232, %v2243
        %2246 = vrot.lane.b32.xlu0 %v2244, 64
        %v2247 = vpop.permute.xlu0 %2246
        %vm2249 = vcmask 258052
        %2250 = vst.msk [vmem:[#allocation2] sm:$0x10] %vm2249, %v2247
        %2251 = vrot.lane.b32.xlu0 %v2244, 32
        %v2252 = vpop.permute.xlu0 %2251
        %2254 = vst.msk [vmem:[%s1762 - $0x1] sm:$0x10] %vm2249, %v2252
        %v2255 = vrot.slane %v2244, 4
        %2256 = vrot.lane.b32.xlu0 %v2255, 64
        %v2257 = vpop.permute.xlu0 %2256
        %v2258 = vsel %vm1654, %v2257, 0
        %2260 = vmatprep.subr.mxu0 %v1624
        %2261 = vmatpush1.msra.mxu0 %v1623
        %2262 = vmatprep.subr.mxu0 %v1626
        %2263 = vmatpush1.msra.mxu0 %v1625
        %2264 = vmatprep.subr.mxu0 %v1628
        %2265 = vmatpush1.msra.mxu0 %v1627
        %2266 = vmatprep.subr.mxu0 %v1630
        %2267 = vmatpush1.msra.mxu0 %v1629
        %2268 = vmatprep.subr.mxu0 %v1632
        %2269 = vmatpush1.msra.mxu0 %v1631
        %2270 = vmatprep.subr.mxu0 %v1634
        %2271 = vmatpush1.msra.mxu0 %v1633
        %2272 = vmatprep.subr.mxu0 %v1636
        %2273 = vmatpush1.msra.mxu0 %v1635
        %2274 = vmatprep.subr.mxu0 %v1638
        %2275 = vmatpush1.msra.mxu0 %v1637
        %2276 = vmatprep.subr.mxu0 0.0
        %2277 = vmatpush1.msra.mxu0 0.0
        %2278 = vmatprep.subr.mxu0 0.0
        %2279 = vmatpush1.msra.mxu0 0.0
        %2280 = vmatprep.subr.mxu0 0.0
        %2281 = vmatpush1.msra.mxu0 0.0
        %2282 = vmatprep.subr.mxu0 0.0
        %2283 = vmatpush1.msra.mxu0 0.0
        %2284 = vmatprep.subr.mxu0 0.0
        %2285 = vmatpush1.msra.mxu0 0.0
        %2286 = vmatprep.subr.mxu0 0.0
        %2287 = vmatpush1.msra.mxu0 0.0
        %2288 = vmatprep.subr.mxu0 0.0
        %2289 = vmatpush1.msra.mxu0 0.0
        %2290 = vmatprep.subr.mxu0 0.0
        %2291 = vmatpush1.msra.mxu0 0.0
        %2292 = vmatprep.subr.mxu0 0.0
        %2293 = vmatpush1.msra.mxu0 0.0
        %2294 = vmatprep.subr.mxu0 0.0
        %2295 = vmatpush1.msra.mxu0 0.0
        %2296 = vmatprep.subr.mxu0 0.0
        %2297 = vmatpush1.msra.mxu0 0.0
        %2298 = vmatprep.subr.mxu0 0.0
        %2299 = vmatpush1.msra.mxu0 0.0
        %2300 = vmatprep.subr.mxu0 0.0
        %2301 = vmatpush1.msra.mxu0 0.0
        %2302 = vmatprep.subr.mxu0 0.0
        %2303 = vmatpush1.msra.mxu0 0.0
        %2304 = vmatprep.subr.mxu0 0.0
        %2305 = vmatpush1.msra.mxu0 0.0
        %2306 = vmatprep.subr.mxu0 0.0
        %2307 = vmatpush1.msra.mxu0 0.0
        %2308 = vmatprep.subr.mxu0 0.0
        %2309 = vmatpush1.msra.mxu0 0.0
        %2310 = vmatprep.subr.mxu0 0.0
        %2311 = vmatpush1.msra.mxu0 0.0
        %2312 = vmatprep.subr.mxu0 0.0
        %2313 = vmatpush1.msra.mxu0 0.0
        %2314 = vmatprep.subr.mxu0 0.0
        %2315 = vmatpush1.msra.mxu0 0.0
        %2316 = vmatprep.subr.mxu0 0.0
        %2317 = vmatpush1.msra.mxu0 0.0
        %2318 = vmatprep.subr.mxu0 0.0
        %2319 = vmatpush1.msra.mxu0 0.0
        %2320 = vmatprep.subr.mxu0 0.0
        %2321 = vmatpush1.msra.mxu0 0.0
        %2322 = vmatprep.subr.mxu0 0.0
        %2323 = vmatpush1.msra.mxu0 0.0
        %2324 = vmatprep.mubr.f32.mxu0 0.0
        %2325 = vmatmul.mubr.f32.gmra.mrb[0].mxu0 %v2258
        %v2326 = vpop.f32.mrb[0].mxu0
        %v2327 = vadd.f32 0.0, %v2326
        %v2328 = vpop.f32.mrb[0].mxu0
        %v2329 = vadd.f32 0.0, %v2328
        %2330 = vdwg.mxu0
        %v2333 = vrot.slane %v2327, 3
        %v2334 = vrot.slane %v2329, 3
        %v2337 = vadd.f32 %v1768, %v2333
        %v2338 = vadd.f32 %v1769, %v2334
        %v2339 = vxor.u32 %v2337, 2147483648
        %v2340 = vmul.f32 %v2339, 1.442695
        %v2341 = vpow.pop %v2340
        %v2342 = vadd.f32 %v2341, 1.0
        %v2343 = vrcp.pop %v2342
        %v2344 = vmul.f32 1.0, %v2343
        %v2345 = vtanh.pop %v2338
        %v2346 = vxor.u32 %v2338, 2147483648
        %v2347 = vmul.f32 %v2346, 1.442695
        %v2348 = vpow.pop %v2347
        %v2349 = vadd.f32 %v2348, 1.0
        %v2350 = vrcp.pop %v2349
        %v2351 = vmul.f32 1.0, %v2350
        %v2353 = vrot.slane %v2242, 7
        %v2355 = vmul.f32 %v2344, %v2353
        %v2356 = vmul.f32 %v2344, %v2345
        %2358 = vrot.lane.b32.xlu0 %v2356, 64
        %v2359 = vpop.permute.xlu0 %2358
        %v2361 = vadd.f32 %v2355, %v2359
        %v2362 = vtanh.pop %v2361
        %v2363 = vmul.f32 %v2351, %v2362
        %2365 = vrot.lane.b32.xlu0 %v2363, 64
        %v2366 = vpop.permute.xlu0 %2365
        %vm2368 = vcmask 259077
        %2369 = vst.msk [vmem:[#allocation2] sm:$0x20] %vm2368, %v2366
        %2370 = vrot.lane.b32.xlu0 %v2363, 32
        %v2371 = vpop.permute.xlu0 %2370
        %2373 = vst.msk [vmem:[%s1762 - $0x3] sm:$0x20] %vm2368, %v2371
        %v2374 = vrot.slane %v2363, 5
        %2375 = vrot.lane.b32.xlu0 %v2374, 64
        %v2376 = vpop.permute.xlu0 %2375
        %v2377 = vsel %vm1654, %v2376, 0
        %2379 = vmatprep.subr.mxu0 %v1624
        %2380 = vmatpush1.msra.mxu0 %v1623
        %2381 = vmatprep.subr.mxu0 %v1626
        %2382 = vmatpush1.msra.mxu0 %v1625
        %2383 = vmatprep.subr.mxu0 %v1628
        %2384 = vmatpush1.msra.mxu0 %v1627
        %2385 = vmatprep.subr.mxu0 %v1630
        %2386 = vmatpush1.msra.mxu0 %v1629
        %2387 = vmatprep.subr.mxu0 %v1632
        %2388 = vmatpush1.msra.mxu0 %v1631
        %2389 = vmatprep.subr.mxu0 %v1634
        %2390 = vmatpush1.msra.mxu0 %v1633
        %2391 = vmatprep.subr.mxu0 %v1636
        %2392 = vmatpush1.msra.mxu0 %v1635
        %2393 = vmatprep.subr.mxu0 %v1638
        %2394 = vmatpush1.msra.mxu0 %v1637
        %2395 = vmatprep.subr.mxu0 0.0
        %2396 = vmatpush1.msra.mxu0 0.0
        %2397 = vmatprep.subr.mxu0 0.0
        %2398 = vmatpush1.msra.mxu0 0.0
        %2399 = vmatprep.subr.mxu0 0.0
        %2400 = vmatpush1.msra.mxu0 0.0
        %2401 = vmatprep.subr.mxu0 0.0
        %2402 = vmatpush1.msra.mxu0 0.0
        %2403 = vmatprep.subr.mxu0 0.0
        %2404 = vmatpush1.msra.mxu0 0.0
        %2405 = vmatprep.subr.mxu0 0.0
        %2406 = vmatpush1.msra.mxu0 0.0
        %2407 = vmatprep.subr.mxu0 0.0
        %2408 = vmatpush1.msra.mxu0 0.0
        %2409 = vmatprep.subr.mxu0 0.0
        %2410 = vmatpush1.msra.mxu0 0.0
        %2411 = vmatprep.subr.mxu0 0.0
        %2412 = vmatpush1.msra.mxu0 0.0
        %2413 = vmatprep.subr.mxu0 0.0
        %2414 = vmatpush1.msra.mxu0 0.0
        %2415 = vmatprep.subr.mxu0 0.0
        %2416 = vmatpush1.msra.mxu0 0.0
        %2417 = vmatprep.subr.mxu0 0.0
        %2418 = vmatpush1.msra.mxu0 0.0
        %2419 = vmatprep.subr.mxu0 0.0
        %2420 = vmatpush1.msra.mxu0 0.0
        %2421 = vmatprep.subr.mxu0 0.0
        %2422 = vmatpush1.msra.mxu0 0.0
        %2423 = vmatprep.subr.mxu0 0.0
        %2424 = vmatpush1.msra.mxu0 0.0
        %2425 = vmatprep.subr.mxu0 0.0
        %2426 = vmatpush1.msra.mxu0 0.0
        %2427 = vmatprep.subr.mxu0 0.0
        %2428 = vmatpush1.msra.mxu0 0.0
        %2429 = vmatprep.subr.mxu0 0.0
        %2430 = vmatpush1.msra.mxu0 0.0
        %2431 = vmatprep.subr.mxu0 0.0
        %2432 = vmatpush1.msra.mxu0 0.0
        %2433 = vmatprep.subr.mxu0 0.0
        %2434 = vmatpush1.msra.mxu0 0.0
        %2435 = vmatprep.subr.mxu0 0.0
        %2436 = vmatpush1.msra.mxu0 0.0
        %2437 = vmatprep.subr.mxu0 0.0
        %2438 = vmatpush1.msra.mxu0 0.0
        %2439 = vmatprep.subr.mxu0 0.0
        %2440 = vmatpush1.msra.mxu0 0.0
        %2441 = vmatprep.subr.mxu0 0.0
        %2442 = vmatpush1.msra.mxu0 0.0
        %2443 = vmatprep.mubr.f32.mxu0 0.0
        %2444 = vmatmul.mubr.f32.gmra.mrb[0].mxu0 %v2377
        %v2445 = vpop.f32.mrb[0].mxu0
        %v2446 = vadd.f32 0.0, %v2445
        %v2447 = vpop.f32.mrb[0].mxu0
        %v2448 = vadd.f32 0.0, %v2447
        %2449 = vdwg.mxu0
        %v2452 = vrot.slane %v2446, 2
        %v2453 = vrot.slane %v2448, 2
        %v2456 = vadd.f32 %v1890, %v2452
        %v2457 = vadd.f32 %v1891, %v2453
        %v2458 = vxor.u32 %v2456, 2147483648
        %v2459 = vmul.f32 %v2458, 1.442695
        %v2460 = vpow.pop %v2459
        %v2461 = vadd.f32 %v2460, 1.0
        %v2462 = vrcp.pop %v2461
        %v2463 = vmul.f32 1.0, %v2462
        %v2464 = vtanh.pop %v2457
        %v2465 = vxor.u32 %v2457, 2147483648
        %v2466 = vmul.f32 %v2465, 1.442695
        %v2467 = vpow.pop %v2466
        %v2468 = vadd.f32 %v2467, 1.0
        %v2469 = vrcp.pop %v2468
        %v2470 = vmul.f32 1.0, %v2469
        %v2472 = vrot.slane %v2361, 7
        %v2474 = vmul.f32 %v2463, %v2472
        %v2475 = vmul.f32 %v2463, %v2464
        %2477 = vrot.lane.b32.xlu0 %v2475, 64
        %v2478 = vpop.permute.xlu0 %2477
        %v2480 = vadd.f32 %v2474, %v2478
        %v2481 = vtanh.pop %v2480
        %v2482 = vmul.f32 %v2470, %v2481
        %2484 = vrot.lane.b32.xlu0 %v2482, 64
        %v2485 = vpop.permute.xlu0 %2484
        %vm2487 = vcmask 260102
        %2488 = vst.msk [vmem:[#allocation2] sm:$0x40] %vm2487, %v2485
        %2489 = vrot.lane.b32.xlu0 %v2482, 32
        %v2490 = vpop.permute.xlu0 %2489
        %2492 = vst.msk [vmem:[%s1762 - $0x5] sm:$0x40] %vm2487, %v2490
        %v2493 = vrot.slane %v2482, 6
        %2494 = vrot.lane.b32.xlu0 %v2493, 64
        %v2495 = vpop.permute.xlu0 %2494
        %v2496 = vsel %vm1654, %v2495, 0
        %2498 = vmatprep.subr.mxu0 %v1624
        %2499 = vmatpush1.msra.mxu0 %v1623
        %2500 = vmatprep.subr.mxu0 %v1626
        %2501 = vmatpush1.msra.mxu0 %v1625
        %2502 = vmatprep.subr.mxu0 %v1628
        %2503 = vmatpush1.msra.mxu0 %v1627
        %2504 = vmatprep.subr.mxu0 %v1630
        %2505 = vmatpush1.msra.mxu0 %v1629
        %2506 = vmatprep.subr.mxu0 %v1632
        %2507 = vmatpush1.msra.mxu0 %v1631
        %2508 = vmatprep.subr.mxu0 %v1634
        %2509 = vmatpush1.msra.mxu0 %v1633
        %2510 = vmatprep.subr.mxu0 %v1636
        %2511 = vmatpush1.msra.mxu0 %v1635
        %2512 = vmatprep.subr.mxu0 %v1638
        %2513 = vmatpush1.msra.mxu0 %v1637
        %2514 = vmatprep.subr.mxu0 0.0
        %2515 = vmatpush1.msra.mxu0 0.0
        %2516 = vmatprep.subr.mxu0 0.0
        %2517 = vmatpush1.msra.mxu0 0.0
        %2518 = vmatprep.subr.mxu0 0.0
        %2519 = vmatpush1.msra.mxu0 0.0
        %2520 = vmatprep.subr.mxu0 0.0
        %2521 = vmatpush1.msra.mxu0 0.0
        %2522 = vmatprep.subr.mxu0 0.0
        %2523 = vmatpush1.msra.mxu0 0.0
        %2524 = vmatprep.subr.mxu0 0.0
        %2525 = vmatpush1.msra.mxu0 0.0
        %2526 = vmatprep.subr.mxu0 0.0
        %2527 = vmatpush1.msra.mxu0 0.0
        %2528 = vmatprep.subr.mxu0 0.0
        %2529 = vmatpush1.msra.mxu0 0.0
        %2530 = vmatprep.subr.mxu0 0.0
        %2531 = vmatpush1.msra.mxu0 0.0
        %2532 = vmatprep.subr.mxu0 0.0
        %2533 = vmatpush1.msra.mxu0 0.0
        %2534 = vmatprep.subr.mxu0 0.0
        %2535 = vmatpush1.msra.mxu0 0.0
        %2536 = vmatprep.subr.mxu0 0.0
        %2537 = vmatpush1.msra.mxu0 0.0
        %2538 = vmatprep.subr.mxu0 0.0
        %2539 = vmatpush1.msra.mxu0 0.0
        %2540 = vmatprep.subr.mxu0 0.0
        %2541 = vmatpush1.msra.mxu0 0.0
        %2542 = vmatprep.subr.mxu0 0.0
        %2543 = vmatpush1.msra.mxu0 0.0
        %2544 = vmatprep.subr.mxu0 0.0
        %2545 = vmatpush1.msra.mxu0 0.0
        %2546 = vmatprep.subr.mxu0 0.0
        %2547 = vmatpush1.msra.mxu0 0.0
        %2548 = vmatprep.subr.mxu0 0.0
        %2549 = vmatpush1.msra.mxu0 0.0
        %2550 = vmatprep.subr.mxu0 0.0
        %2551 = vmatpush1.msra.mxu0 0.0
        %2552 = vmatprep.subr.mxu0 0.0
        %2553 = vmatpush1.msra.mxu0 0.0
        %2554 = vmatprep.subr.mxu0 0.0
        %2555 = vmatpush1.msra.mxu0 0.0
        %2556 = vmatprep.subr.mxu0 0.0
        %2557 = vmatpush1.msra.mxu0 0.0
        %2558 = vmatprep.subr.mxu0 0.0
        %2559 = vmatpush1.msra.mxu0 0.0
        %2560 = vmatprep.subr.mxu0 0.0
        %2561 = vmatpush1.msra.mxu0 0.0
        %2562 = vmatprep.mubr.f32.mxu0 0.0
        %2563 = vmatmul.mubr.f32.gmra.mrb[0].mxu0 %v2496
        %v2564 = vpop.f32.mrb[0].mxu0
        %v2565 = vadd.f32 0.0, %v2564
        %v2566 = vpop.f32.mrb[0].mxu0
        %v2567 = vadd.f32 0.0, %v2566
        %2568 = vdwg.mxu0
        %v2571 = vrot.slane %v2565, 1
        %v2572 = vrot.slane %v2567, 1
        %v2575 = vadd.f32 %v2015, %v2571
        %v2576 = vadd.f32 %v2016, %v2572
        %v2577 = vxor.u32 %v2575, 2147483648
        %v2578 = vmul.f32 %v2577, 1.442695
        %v2579 = vpow.pop %v2578
        %v2580 = vadd.f32 %v2579, 1.0
        %v2581 = vrcp.pop %v2580
        %v2582 = vmul.f32 1.0, %v2581
        %v2583 = vtanh.pop %v2576
        %v2584 = vxor.u32 %v2576, 2147483648
        %v2585 = vmul.f32 %v2584, 1.442695
        %v2586 = vpow.pop %v2585
        %v2587 = vadd.f32 %v2586, 1.0
        %v2588 = vrcp.pop %v2587
        %v2589 = vmul.f32 1.0, %v2588
        %v2591 = vrot.slane %v2480, 7
        %v2593 = vmul.f32 %v2582, %v2591
        %v2594 = vmul.f32 %v2582, %v2583
        %2596 = vrot.lane.b32.xlu0 %v2594, 64
        %v2597 = vpop.permute.xlu0 %2596
        %v2599 = vadd.f32 %v2593, %v2597
        %v2600 = vtanh.pop %v2599
        %v2601 = vmul.f32 %v2589, %v2600
        %2603 = vrot.lane.b32.xlu0 %v2601, 64
        %v2604 = vpop.permute.xlu0 %2603
        %vm2606 = vcmask 261127
        %2607 = vst.msk [vmem:[#allocation2] sm:$0x80] %vm2606, %v2604
        %2608 = vrot.lane.b32.xlu0 %v2601, 32
        %v2609 = vpop.permute.xlu0 %2608
        %2611 = vst.msk [vmem:[%s1762 - $0x7] sm:$0x80] %vm2606, %v2609
        %v2612 = vld [vmem:[#allocation2] sm:$0xff]
        %v2613 = vld [vmem:[%s20] sm:$0xff]
        %v2614 = vld [vmem:[%s20 + $0x8] sm:$0xff]
        %v2615 = vld [vmem:[%s20 + $0x10] sm:$0xff]
        %v2616 = vld [vmem:[%s20 + $0x18] sm:$0xff]
        %v2617 = vld [vmem:[%s1762] sm:$0xff]
        %v2618 = vld [vmem:[%s21] sm:$0xff]
        %v2619 = vld [vmem:[%s21 + $0x8] sm:$0xff]
        %v2620 = vld [vmem:[%s21 + $0x10] sm:$0xff]
        %v2621 = vld [vmem:[%s21 + $0x18] sm:$0xff]
        %v2623 = vsel %vm912, %v2617, 0
        %2625 = vmatprep.subr.mxu0 0.0
        %2626 = vmatpush1.msra.mxu0 %v2618
        %2627 = vmatprep.subr.mxu0 0.0
        %2628 = vmatpush1.msra.mxu0 %v2619
        %2629 = vmatprep.subr.mxu0 0.0
        %2630 = vmatpush1.msra.mxu0 %v2620
        %2631 = vmatprep.subr.mxu0 0.0
        %2632 = vmatpush1.msra.mxu0 %v2621
        %2633 = vmatprep.subr.mxu0 0.0
        %2634 = vmatpush1.msra.mxu0 0.0
        %2635 = vmatprep.subr.mxu0 0.0
        %2636 = vmatpush1.msra.mxu0 0.0
        %2637 = vmatprep.subr.mxu0 0.0
        %2638 = vmatpush1.msra.mxu0 0.0
        %2639 = vmatprep.subr.mxu0 0.0
        %2640 = vmatpush1.msra.mxu0 0.0
        %2641 = vmatprep.subr.mxu0 0.0
        %2642 = vmatpush1.msra.mxu0 0.0
        %2643 = vmatprep.subr.mxu0 0.0
        %2644 = vmatpush1.msra.mxu0 0.0
        %2645 = vmatprep.subr.mxu0 0.0
        %2646 = vmatpush1.msra.mxu0 0.0
        %2647 = vmatprep.subr.mxu0 0.0
        %2648 = vmatpush1.msra.mxu0 0.0
        %2649 = vmatprep.subr.mxu0 0.0
        %2650 = vmatpush1.msra.mxu0 0.0
        %2651 = vmatprep.subr.mxu0 0.0
        %2652 = vmatpush1.msra.mxu0 0.0
        %2653 = vmatprep.subr.mxu0 0.0
        %2654 = vmatpush1.msra.mxu0 0.0
        %2655 = vmatprep.subr.mxu0 0.0
        %2656 = vmatpush1.msra.mxu0 0.0
        %2657 = vmatprep.subr.mxu0 0.0
        %2658 = vmatpush1.msra.mxu0 0.0
        %2659 = vmatprep.subr.mxu0 0.0
        %2660 = vmatpush1.msra.mxu0 0.0
        %2661 = vmatprep.subr.mxu0 0.0
        %2662 = vmatpush1.msra.mxu0 0.0
        %2663 = vmatprep.subr.mxu0 0.0
        %2664 = vmatpush1.msra.mxu0 0.0
        %2665 = vmatprep.subr.mxu0 0.0
        %2666 = vmatpush1.msra.mxu0 0.0
        %2667 = vmatprep.subr.mxu0 0.0
        %2668 = vmatpush1.msra.mxu0 0.0
        %2669 = vmatprep.subr.mxu0 0.0
        %2670 = vmatpush1.msra.mxu0 0.0
        %2671 = vmatprep.subr.mxu0 0.0
        %2672 = vmatpush1.msra.mxu0 0.0
        %2673 = vmatprep.subr.mxu0 0.0
        %2674 = vmatpush1.msra.mxu0 0.0
        %2675 = vmatprep.subr.mxu0 0.0
        %2676 = vmatpush1.msra.mxu0 0.0
        %2677 = vmatprep.subr.mxu0 0.0
        %2678 = vmatpush1.msra.mxu0 0.0
        %2679 = vmatprep.subr.mxu0 0.0
        %2680 = vmatpush1.msra.mxu0 0.0
        %2681 = vmatprep.subr.mxu0 0.0
        %2682 = vmatpush1.msra.mxu0 0.0
        %2683 = vmatprep.subr.mxu0 0.0
        %2684 = vmatpush1.msra.mxu0 0.0
        %2685 = vmatprep.subr.mxu0 0.0
        %2686 = vmatpush1.msra.mxu0 0.0
        %2687 = vmatprep.subr.mxu0 0.0
        %2688 = vmatpush1.msra.mxu0 0.0
        %2689 = vmatprep.mubr.f32.mxu0 0.0
        %2690 = vmatmul.mubr.f32.gmra.mrb[0].mxu0 %v2623
        %v2691 = vpop.f32.mrb[0].mxu0
        %v2692 = vadd.f32 0.0, %v2691
        %v2693 = vpop.f32.mrb[0].mxu0
        %2694 = vdwg.mxu0
        %v2696 = vsel %vm912, %v2612, 0
        %2698 = vmatprep.subr.mxu0 0.0
        %2699 = vmatpush1.msra.mxu0 %v2613
        %2700 = vmatprep.subr.mxu0 0.0
        %2701 = vmatpush1.msra.mxu0 %v2614
        %2702 = vmatprep.subr.mxu0 0.0
        %2703 = vmatpush1.msra.mxu0 %v2615
        %2704 = vmatprep.subr.mxu0 0.0
        %2705 = vmatpush1.msra.mxu0 %v2616
        %2706 = vmatprep.subr.mxu0 0.0
        %2707 = vmatpush1.msra.mxu0 0.0
        %2708 = vmatprep.subr.mxu0 0.0
        %2709 = vmatpush1.msra.mxu0 0.0
        %2710 = vmatprep.subr.mxu0 0.0
        %2711 = vmatpush1.msra.mxu0 0.0
        %2712 = vmatprep.subr.mxu0 0.0
        %2713 = vmatpush1.msra.mxu0 0.0
        %2714 = vmatprep.subr.mxu0 0.0
        %2715 = vmatpush1.msra.mxu0 0.0
        %2716 = vmatprep.subr.mxu0 0.0
        %2717 = vmatpush1.msra.mxu0 0.0
        %2718 = vmatprep.subr.mxu0 0.0
        %2719 = vmatpush1.msra.mxu0 0.0
        %2720 = vmatprep.subr.mxu0 0.0
        %2721 = vmatpush1.msra.mxu0 0.0
        %2722 = vmatprep.subr.mxu0 0.0
        %2723 = vmatpush1.msra.mxu0 0.0
        %2724 = vmatprep.subr.mxu0 0.0
        %2725 = vmatpush1.msra.mxu0 0.0
        %2726 = vmatprep.subr.mxu0 0.0
        %2727 = vmatpush1.msra.mxu0 0.0
        %2728 = vmatprep.subr.mxu0 0.0
        %2729 = vmatpush1.msra.mxu0 0.0
        %2730 = vmatprep.subr.mxu0 0.0
        %2731 = vmatpush1.msra.mxu0 0.0
        %2732 = vmatprep.subr.mxu0 0.0
        %2733 = vmatpush1.msra.mxu0 0.0
        %2734 = vmatprep.subr.mxu0 0.0
        %2735 = vmatpush1.msra.mxu0 0.0
        %2736 = vmatprep.subr.mxu0 0.0
        %2737 = vmatpush1.msra.mxu0 0.0
        %2738 = vmatprep.subr.mxu0 0.0
        %2739 = vmatpush1.msra.mxu0 0.0
        %2740 = vmatprep.subr.mxu0 0.0
        %2741 = vmatpush1.msra.mxu0 0.0
        %2742 = vmatprep.subr.mxu0 0.0
        %2743 = vmatpush1.msra.mxu0 0.0
        %2744 = vmatprep.subr.mxu0 0.0
        %2745 = vmatpush1.msra.mxu0 0.0
        %2746 = vmatprep.subr.mxu0 0.0
        %2747 = vmatpush1.msra.mxu0 0.0
        %2748 = vmatprep.subr.mxu0 0.0
        %2749 = vmatpush1.msra.mxu0 0.0
        %2750 = vmatprep.subr.mxu0 0.0
        %2751 = vmatpush1.msra.mxu0 0.0
        %2752 = vmatprep.subr.mxu0 0.0
        %2753 = vmatpush1.msra.mxu0 0.0
        %2754 = vmatprep.subr.mxu0 0.0
        %2755 = vmatpush1.msra.mxu0 0.0
        %2756 = vmatprep.subr.mxu0 0.0
        %2757 = vmatpush1.msra.mxu0 0.0
        %2758 = vmatprep.subr.mxu0 0.0
        %2759 = vmatpush1.msra.mxu0 0.0
        %2760 = vmatprep.subr.mxu0 0.0
        %2761 = vmatpush1.msra.mxu0 0.0
        %2762 = vmatprep.mubr.f32.mxu0 0.0
        %2763 = vmatmul.mubr.f32.gmra.mrb[0].mxu0 %v2696
        %v2764 = vpop.f32.mrb[0].mxu0
        %v2765 = vadd.f32 %v2692, %v2764
        %v2766 = vpop.f32.mrb[0].mxu0
        %2767 = vdwg.mxu0
        %v2768 = vld [vmem:[%s22] sm:$0x1]
        %v2770 = vlaneseq
        %v2771 = vshrl.u32 %v2770, 7
        %v2772 = vsub.s32 0, %v2771
        %v2773 = vrot.slane %v2768, %v2772
        %v2775 = vadd.f32 %v2765, %v2773
        %v2776 = vld [vmem:[%s23] sm:$0xff]
        %v2777 = vlaneseq
        %v2778 = vshrl.u32 %v2777, 7
        %vm2779 = vcmp.eq.s32.totalorder %v2778, %v1640
        %v2780 = vld [vmem:[%s24] sm:$0x1]
        %v2781 = vadd.f32 %v2780, %v2775
        %v2783 = vlaneseq
        %v2784 = vshrl.u32 %v2783, 7
        %v2785 = vsub.s32 0, %v2784
        %v2786 = vrot.slane %v2781, %v2785
        %v2788 = vsel %vm2779, %v2786, 0.0
        %v2789 = vsel %vm1111, %v2788, 0.0
        %2790 = vadd.xlane.f32.xlu0 %v2789
        %v2791 = vpop.xlane.xlu0 %2790
        %v2792 = vadd.f32 %v2791, %v2776
        %v2793 = vsel %vm1111, %v2792, -inf
        %v2794 = vrot.slane %v2793, 4
        %v2795 = vmax.f32 %v2793, %v2794
        %v2796 = vrot.slane %v2795, 2
        %v2797 = vmax.f32 %v2795, %v2796
        %v2798 = vrot.slane %v2797, 1
        %v2799 = vmax.f32 %v2797, %v2798
        %vm2800 = vcmp.ge.f32.partialorder %v2792, %v2799
        %v2801 = vsel %vm2800, %v2778, 8
        %v2802 = vsel %vm1111, %v2801, 2147483647
        %v2803 = vrot.slane %v2802, 4
        %vm2804 = vcmp.lt.s32.totalorder %v2802, %v2803
        %v2805 = vsel %vm2804, %v2802, %v2803
        %v2806 = vrot.slane %v2805, 2
        %vm2807 = vcmp.lt.s32.totalorder %v2805, %v2806
        %v2808 = vsel %vm2807, %v2805, %v2806
        %v2809 = vrot.slane %v2808, 1
        %vm2810 = vcmp.lt.s32.totalorder %v2808, %v2809
        %v2811 = vsel %vm2810, %v2808, %v2809
        %s2812 = smul.u32 %s53, 128
        %s2813 = sadd.s32 %s2812, 1
        %s2814 = sld [smem:[#allocation4 + %s2813]]
        %p2815 = scmp.gt.s32.totalorder %s2814, 0
        %v2816 = vadd.f32 %v2799, %v2775
        %s2817 = scalar_select %p2815, 1, 0
        %v2818 = vstv %s2817
        %vm2819 = vcmp.eq.s32.totalorder %v2818, 1
        %v2820 = vsel %vm2819, %v2816, %v2786
        %v2821 = vlaneseq
        %v2822 = vshrl.u32 %v2821, 7
        %v2823 = vsub.s32 1, %v2822
        %v2824 = vrot.slane %v2820, %v2823
        %v2825 = vsel %vm2779, %v2824, 0.0
        %v2826 = vsel %vm1111, %v2825, 0.0
        %2827 = vadd.xlane.f32.xlu0 %v2826
        %v2828 = vpop.xlane.xlu0 %2827
        %v2829 = vadd.f32 %v2828, %v2776
        %v2830 = vsel %vm1111, %v2829, -inf
        %v2831 = vrot.slane %v2830, 4
        %v2832 = vmax.f32 %v2830, %v2831
        %v2833 = vrot.slane %v2832, 2
        %v2834 = vmax.f32 %v2832, %v2833
        %v2835 = vrot.slane %v2834, 1
        %v2836 = vmax.f32 %v2834, %v2835
        %vm2837 = vcmp.ge.f32.partialorder %v2829, %v2836
        %v2838 = vsel %vm2837, %v2778, 8
        %v2839 = vsel %vm1111, %v2838, 2147483647
        %v2840 = vrot.slane %v2839, 4
        %vm2841 = vcmp.lt.s32.totalorder %v2839, %v2840
        %v2842 = vsel %vm2841, %v2839, %v2840
        %v2843 = vrot.slane %v2842, 2
        %vm2844 = vcmp.lt.s32.totalorder %v2842, %v2843
        %v2845 = vsel %vm2844, %v2842, %v2843
        %v2846 = vrot.slane %v2845, 1
        %vm2847 = vcmp.lt.s32.totalorder %v2845, %v2846
        %v2848 = vsel %vm2847, %v2845, %v2846
        %s2849 = sadd.s32 %s2812, 2
        %s2850 = sld [smem:[#allocation4 + %s2849]]
        %p2851 = scmp.gt.s32.totalorder %s2850, 0
        %v2852 = vadd.f32 %v2836, %v2775
        %s2853 = scalar_select %p2851, 1, 0
        %v2854 = vstv %s2853
        %vm2855 = vcmp.eq.s32.totalorder %v2854, 1
        %v2857 = vrot.slane %v2820, 7
        %v2859 = vsel %vm2855, %v2852, %v2857
        %v2860 = vlaneseq
        %v2861 = vshrl.u32 %v2860, 7
        %v2862 = vsub.s32 2, %v2861
        %v2863 = vrot.slane %v2859, %v2862
        %v2864 = vsel %vm2779, %v2863, 0.0
        %v2865 = vsel %vm1111, %v2864, 0.0
        %2866 = vadd.xlane.f32.xlu0 %v2865
        %v2867 = vpop.xlane.xlu0 %2866
        %v2868 = vadd.f32 %v2867, %v2776
        %v2869 = vsel %vm1111, %v2868, -inf
        %v2870 = vrot.slane %v2869, 4
        %v2871 = vmax.f32 %v2869, %v2870
        %v2872 = vrot.slane %v2871, 2
        %v2873 = vmax.f32 %v2871, %v2872
        %v2874 = vrot.slane %v2873, 1
        %v2875 = vmax.f32 %v2873, %v2874
        %vm2876 = vcmp.ge.f32.partialorder %v2868, %v2875
        %v2877 = vsel %vm2876, %v2778, 8
        %v2878 = vsel %vm1111, %v2877, 2147483647
        %v2879 = vrot.slane %v2878, 4
        %vm2880 = vcmp.lt.s32.totalorder %v2878, %v2879
        %v2881 = vsel %vm2880, %v2878, %v2879
        %v2882 = vrot.slane %v2881, 2
        %vm2883 = vcmp.lt.s32.totalorder %v2881, %v2882
        %v2884 = vsel %vm2883, %v2881, %v2882
        %v2885 = vrot.slane %v2884, 1
        %vm2886 = vcmp.lt.s32.totalorder %v2884, %v2885
        %v2887 = vsel %vm2886, %v2884, %v2885
        %s2888 = sadd.s32 %s2812, 3
        %s2889 = sld [smem:[#allocation4 + %s2888]]
        %p2890 = scmp.gt.s32.totalorder %s2889, 0
        %v2891 = vadd.f32 %v2875, %v2775
        %s2892 = scalar_select %p2890, 1, 0
        %v2893 = vstv %s2892
        %vm2894 = vcmp.eq.s32.totalorder %v2893, 1
        %v2896 = vrot.slane %v2859, 7
        %v2898 = vsel %vm2894, %v2891, %v2896
        %v2899 = vlaneseq
        %v2900 = vshrl.u32 %v2899, 7
        %v2901 = vsub.s32 3, %v2900
        %v2902 = vrot.slane %v2898, %v2901
        %v2903 = vsel %vm2779, %v2902, 0.0
        %v2904 = vsel %vm1111, %v2903, 0.0
        %2905 = vadd.xlane.f32.xlu0 %v2904
        %v2906 = vpop.xlane.xlu0 %2905
        %v2907 = vadd.f32 %v2906, %v2776
        %v2908 = vsel %vm1111, %v2907, -inf
        %v2909 = vrot.slane %v2908, 4
        %v2910 = vmax.f32 %v2908, %v2909
        %v2911 = vrot.slane %v2910, 2
        %v2912 = vmax.f32 %v2910, %v2911
        %v2913 = vrot.slane %v2912, 1
        %v2914 = vmax.f32 %v2912, %v2913
        %vm2915 = vcmp.ge.f32.partialorder %v2907, %v2914
        %v2916 = vsel %vm2915, %v2778, 8
        %v2917 = vsel %vm1111, %v2916, 2147483647
        %v2918 = vrot.slane %v2917, 4
        %vm2919 = vcmp.lt.s32.totalorder %v2917, %v2918
        %v2920 = vsel %vm2919, %v2917, %v2918
        %v2921 = vrot.slane %v2920, 2
        %vm2922 = vcmp.lt.s32.totalorder %v2920, %v2921
        %v2923 = vsel %vm2922, %v2920, %v2921
        %v2924 = vrot.slane %v2923, 1
        %vm2925 = vcmp.lt.s32.totalorder %v2923, %v2924
        %v2926 = vsel %vm2925, %v2923, %v2924
        %s2927 = sadd.s32 %s2812, 4
        %s2928 = sld [smem:[#allocation4 + %s2927]]
        %p2929 = scmp.gt.s32.totalorder %s2928, 0
        %v2930 = vadd.f32 %v2914, %v2775
        %s2931 = scalar_select %p2929, 1, 0
        %v2932 = vstv %s2931
        %vm2933 = vcmp.eq.s32.totalorder %v2932, 1
        %v2935 = vrot.slane %v2898, 7
        %v2937 = vsel %vm2933, %v2930, %v2935
        %v2938 = vlaneseq
        %v2939 = vshrl.u32 %v2938, 7
        %v2940 = vsub.s32 4, %v2939
        %v2941 = vrot.slane %v2937, %v2940
        %v2942 = vsel %vm2779, %v2941, 0.0
        %v2943 = vsel %vm1111, %v2942, 0.0
        %2944 = vadd.xlane.f32.xlu0 %v2943
        %v2945 = vpop.xlane.xlu0 %2944
        %v2946 = vadd.f32 %v2945, %v2776
        %v2947 = vsel %vm1111, %v2946, -inf
        %v2948 = vrot.slane %v2947, 4
        %v2949 = vmax.f32 %v2947, %v2948
        %v2950 = vrot.slane %v2949, 2
        %v2951 = vmax.f32 %v2949, %v2950
        %v2952 = vrot.slane %v2951, 1
        %v2953 = vmax.f32 %v2951, %v2952
        %vm2954 = vcmp.ge.f32.partialorder %v2946, %v2953
        %v2955 = vsel %vm2954, %v2778, 8
        %v2956 = vsel %vm1111, %v2955, 2147483647
        %v2957 = vrot.slane %v2956, 4
        %vm2958 = vcmp.lt.s32.totalorder %v2956, %v2957
        %v2959 = vsel %vm2958, %v2956, %v2957
        %v2960 = vrot.slane %v2959, 2
        %vm2961 = vcmp.lt.s32.totalorder %v2959, %v2960
        %v2962 = vsel %vm2961, %v2959, %v2960
        %v2963 = vrot.slane %v2962, 1
        %vm2964 = vcmp.lt.s32.totalorder %v2962, %v2963
        %v2965 = vsel %vm2964, %v2962, %v2963
        %s2966 = sadd.s32 %s2812, 5
        %s2967 = sld [smem:[#allocation4 + %s2966]]
        %p2968 = scmp.gt.s32.totalorder %s2967, 0
        %v2969 = vadd.f32 %v2953, %v2775
        %s2970 = scalar_select %p2968, 1, 0
        %v2971 = vstv %s2970
        %vm2972 = vcmp.eq.s32.totalorder %v2971, 1
        %v2974 = vrot.slane %v2937, 7
        %v2976 = vsel %vm2972, %v2969, %v2974
        %v2977 = vlaneseq
        %v2978 = vshrl.u32 %v2977, 7
        %v2979 = vsub.s32 5, %v2978
        %v2980 = vrot.slane %v2976, %v2979
        %v2981 = vsel %vm2779, %v2980, 0.0
        %v2982 = vsel %vm1111, %v2981, 0.0
        %2983 = vadd.xlane.f32.xlu0 %v2982
        %v2984 = vpop.xlane.xlu0 %2983
        %v2985 = vadd.f32 %v2984, %v2776
        %v2986 = vsel %vm1111, %v2985, -inf
        %v2987 = vrot.slane %v2986, 4
        %v2988 = vmax.f32 %v2986, %v2987
        %v2989 = vrot.slane %v2988, 2
        %v2990 = vmax.f32 %v2988, %v2989
        %v2991 = vrot.slane %v2990, 1
        %v2992 = vmax.f32 %v2990, %v2991
        %vm2993 = vcmp.ge.f32.partialorder %v2985, %v2992
        %v2994 = vsel %vm2993, %v2778, 8
        %v2995 = vsel %vm1111, %v2994, 2147483647
        %v2996 = vrot.slane %v2995, 4
        %vm2997 = vcmp.lt.s32.totalorder %v2995, %v2996
        %v2998 = vsel %vm2997, %v2995, %v2996
        %v2999 = vrot.slane %v2998, 2
        %vm3000 = vcmp.lt.s32.totalorder %v2998, %v2999
        %v3001 = vsel %vm3000, %v2998, %v2999
        %v3002 = vrot.slane %v3001, 1
        %vm3003 = vcmp.lt.s32.totalorder %v3001, %v3002
        %v3004 = vsel %vm3003, %v3001, %v3002
        %s3005 = sadd.s32 %s2812, 6
        %s3006 = sld [smem:[#allocation4 + %s3005]]
        %p3007 = scmp.gt.s32.totalorder %s3006, 0
        %v3008 = vadd.f32 %v2992, %v2775
        %s3009 = scalar_select %p3007, 1, 0
        %v3010 = vstv %s3009
        %vm3011 = vcmp.eq.s32.totalorder %v3010, 1
        %v3013 = vrot.slane %v2976, 7
        %v3015 = vsel %vm3011, %v3008, %v3013
        %v3016 = vlaneseq
        %v3017 = vshrl.u32 %v3016, 7
        %v3018 = vsub.s32 6, %v3017
        %v3019 = vrot.slane %v3015, %v3018
        %v3020 = vsel %vm2779, %v3019, 0.0
        %v3021 = vsel %vm1111, %v3020, 0.0
        %3022 = vadd.xlane.f32.xlu0 %v3021
        %v3023 = vpop.xlane.xlu0 %3022
        %v3024 = vadd.f32 %v3023, %v2776
        %v3025 = vsel %vm1111, %v3024, -inf
        %v3026 = vrot.slane %v3025, 4
        %v3027 = vmax.f32 %v3025, %v3026
        %v3028 = vrot.slane %v3027, 2
        %v3029 = vmax.f32 %v3027, %v3028
        %v3030 = vrot.slane %v3029, 1
        %v3031 = vmax.f32 %v3029, %v3030
        %vm3032 = vcmp.ge.f32.partialorder %v3024, %v3031
        %v3033 = vsel %vm3032, %v2778, 8
        %v3034 = vsel %vm1111, %v3033, 2147483647
        %v3035 = vrot.slane %v3034, 4
        %vm3036 = vcmp.lt.s32.totalorder %v3034, %v3035
        %v3037 = vsel %vm3036, %v3034, %v3035
        %v3038 = vrot.slane %v3037, 2
        %vm3039 = vcmp.lt.s32.totalorder %v3037, %v3038
        %v3040 = vsel %vm3039, %v3037, %v3038
        %v3041 = vrot.slane %v3040, 1
        %vm3042 = vcmp.lt.s32.totalorder %v3040, %v3041
        %v3043 = vsel %vm3042, %v3040, %v3041
        %s3044 = sadd.s32 %s2812, 7
        %s3045 = sld [smem:[#allocation4 + %s3044]]
        %p3046 = scmp.gt.s32.totalorder %s3045, 0
        %v3047 = vadd.f32 %v3031, %v2775
        %s3048 = scalar_select %p3046, 1, 0
        %v3049 = vstv %s3048
        %vm3050 = vcmp.eq.s32.totalorder %v3049, 1
        %v3052 = vrot.slane %v3015, 7
        %v3054 = vsel %vm3050, %v3047, %v3052
        %v3055 = vld [vmem:[%s25] sm:$0x1]
        %v3057 = vlaneseq
        %v3058 = vshrl.u32 %v3057, 7
        %v3059 = vsub.s32 0, %v3058
        %v3060 = vrot.slane %v3055, %v3059
        %v3062 = vadd.f32 %v3054, %v3060
        %s3063 = sld [smem:[#allocation4 + %s2812]]
        %s3064 = sadd.s32 %s3063, %s2814
        %s3065 = sadd.s32 %s3064, %s2850
        %s3066 = sadd.s32 %s3065, %s2889
        %s3067 = sadd.s32 %s3066, %s2928
        %s3068 = sadd.s32 %s3067, %s2967
        %s3069 = sadd.s32 %s3068, %s3006
        %s3070 = sadd.s32 %s3069, %s3045
        %s3071 = ssub.s32 %s3070, 1
        %vm3072 = vcmask 64519
        %v3073 = vsel %vm3072, %v3062, -inf
        %3074 = vmax.xlane.f32.xlu0 %v3073
        %v3075 = vpop.xlane.xlu0 %3074
        %v3076 = vrot.slane %v3075, 4
        %v3077 = vmax.f32 %v3075, %v3076
        %v3078 = vrot.slane %v3077, 2
        %v3079 = vmax.f32 %v3077, %v3078
        %v3080 = vrot.slane %v3079, 1
        %v3081 = vmax.f32 %v3079, %v3080
        %s3082 = vtos %v3081
        %v3083 = vstv %s3082
        %vm3084 = vcmp.ge.f32.partialorder %v3062, %v3083
        %v3085 = vsel %vm3084, %v1640, 8
        %v3086 = vsel %vm3072, %v3085, 2147483647
        %v3087 = vand.u32 %v3086, 65535
        %v3088 = vshra.s32 %v3086, 16
        %v3089 = vcvt.s32.f32 %v3087
        %v3090 = vcvt.s32.f32 %v3088
        %3091 = vmin.xlane.f32.xlu0 %v3090
        %v3092 = vpop.xlane.xlu0 %3091
        %vm3093 = vcmp.eq.f32.partialorder %v3090, %v3092
        %v3094 = vsel %vm3093, %v3089, inf
        %3095 = vmin.xlane.f32.xlu0 %v3094
        %v3096 = vpop.xlane.xlu0 %3095
        %v3097 = vcvt.f32.s32 %v3096
        %v3098 = vcvt.f32.s32 %v3092
        %v3099 = vshll.u32 %v3098, 16
        %v3100 = vadd.s32 %v3099, %v3097
        %v3101 = vrot.slane %v3100, 4
        %vm3102 = vcmp.lt.s32.totalorder %v3100, %v3101
        %v3103 = vsel %vm3102, %v3100, %v3101
        %v3104 = vrot.slane %v3103, 2
        %vm3105 = vcmp.lt.s32.totalorder %v3103, %v3104
        %v3106 = vsel %vm3105, %v3103, %v3104
        %v3107 = vrot.slane %v3106, 1
        %vm3108 = vcmp.lt.s32.totalorder %v3106, %v3107
        %v3109 = vsel %vm3108, %v3106, %v3107
        %s3110 = vtos %v3109
        %v3111 = vstv %s3071
        %vm3112 = vcmp.eq.s32.totalorder %v1640, %v3111
        %v3113 = vstv %s3110
        %v3114 = vsel %vm3112, %v3113, 0
        %p3115 = scmp.gt.s32.totalorder %s3071, 6
        %vm3116 = vcmp.eq.s32.totalorder %v1640, %v3113
        %v3117 = vsel %vm3116, %v3043, 0
        %v3118 = vsel %vm1111, %v3117, 0
        %v3119 = vand.u32 %v3118, 65535
        %v3120 = vshrl.u32 %v3118, 16
        %v3121 = vcvt.s32.f32 %v3119
        %v3122 = vcvt.s32.f32 %v3120
        %3123 = vadd.xlane.f32.xlu0 %v3121
        %v3124 = vpop.xlane.xlu0 %3123
        %3125 = vadd.xlane.f32.xlu0 %v3122
        %v3126 = vpop.xlane.xlu0 %3125
        %v3127 = vcvt.f32.s32 %v3124
        %v3128 = vcvt.f32.s32 %v3126
        %v3129 = vshll.u32 %v3128, 16
        %v3130 = vadd.s32 %v3129, %v3127
        %s3131 = vtos %v3130
        %s3132 = scalar_select %p3115, %s3131, %s3110
        %vm3133 = vcmp.eq.s32.totalorder %v1640, 6
        %s3134 = scalar_select %p3115, 1, 0
        %v3135 = vstv %s3134
        %vm3136 = vcmp.eq.s32.totalorder %v3135, 1
        %vm3137 = vmand %vm3133, %vm3136
        %v3138 = vstv %s3132
        %v3139 = vsel %vm3137, %v3138, %v3114
        %p3140 = scmp.gt.s32.totalorder %s3071, 5
        %vm3141 = vcmp.eq.s32.totalorder %v1640, %v3138
        %v3142 = vsel %vm3141, %v3004, 0
        %v3143 = vsel %vm1111, %v3142, 0
        %v3144 = vand.u32 %v3143, 65535
        %v3145 = vshrl.u32 %v3143, 16
        %v3146 = vcvt.s32.f32 %v3144
        %v3147 = vcvt.s32.f32 %v3145
        %3148 = vadd.xlane.f32.xlu0 %v3146
        %v3149 = vpop.xlane.xlu0 %3148
        %3150 = vadd.xlane.f32.xlu0 %v3147
        %v3151 = vpop.xlane.xlu0 %3150
        %v3152 = vcvt.f32.s32 %v3149
        %v3153 = vcvt.f32.s32 %v3151
        %v3154 = vshll.u32 %v3153, 16
        %v3155 = vadd.s32 %v3154, %v3152
        %s3156 = vtos %v3155
        %s3157 = scalar_select %p3140, %s3156, %s3132
        %vm3158 = vcmp.eq.s32.totalorder %v1640, 5
        %s3159 = scalar_select %p3140, 1, 0
        %v3160 = vstv %s3159
        %vm3161 = vcmp.eq.s32.totalorder %v3160, 1
        %vm3162 = vmand %vm3158, %vm3161
        %v3163 = vstv %s3157
        %v3164 = vsel %vm3162, %v3163, %v3139
        %p3165 = scmp.gt.s32.totalorder %s3071, 4
        %vm3166 = vcmp.eq.s32.totalorder %v1640, %v3163
        %v3167 = vsel %vm3166, %v2965, 0
        %v3168 = vsel %vm1111, %v3167, 0
        %v3169 = vand.u32 %v3168, 65535
        %v3170 = vshrl.u32 %v3168, 16
        %v3171 = vcvt.s32.f32 %v3169
        %v3172 = vcvt.s32.f32 %v3170
        %3173 = vadd.xlane.f32.xlu0 %v3171
        %v3174 = vpop.xlane.xlu0 %3173
        %3175 = vadd.xlane.f32.xlu0 %v3172
        %v3176 = vpop.xlane.xlu0 %3175
        %v3177 = vcvt.f32.s32 %v3174
        %v3178 = vcvt.f32.s32 %v3176
        %v3179 = vshll.u32 %v3178, 16
        %v3180 = vadd.s32 %v3179, %v3177
        %s3181 = vtos %v3180
        %s3182 = scalar_select %p3165, %s3181, %s3157
        %vm3183 = vcmp.eq.s32.totalorder %v1640, 4
        %s3184 = scalar_select %p3165, 1, 0
        %v3185 = vstv %s3184
        %vm3186 = vcmp.eq.s32.totalorder %v3185, 1
        %vm3187 = vmand %vm3183, %vm3186
        %v3188 = vstv %s3182
        %v3189 = vsel %vm3187, %v3188, %v3164
        %p3190 = scmp.gt.s32.totalorder %s3071, 3
        %vm3191 = vcmp.eq.s32.totalorder %v1640, %v3188
        %v3192 = vsel %vm3191, %v2926, 0
        %v3193 = vsel %vm1111, %v3192, 0
        %v3194 = vand.u32 %v3193, 65535
        %v3195 = vshrl.u32 %v3193, 16
        %v3196 = vcvt.s32.f32 %v3194
        %v3197 = vcvt.s32.f32 %v3195
        %3198 = vadd.xlane.f32.xlu0 %v3196
        %v3199 = vpop.xlane.xlu0 %3198
        %3200 = vadd.xlane.f32.xlu0 %v3197
        %v3201 = vpop.xlane.xlu0 %3200
        %v3202 = vcvt.f32.s32 %v3199
        %v3203 = vcvt.f32.s32 %v3201
        %v3204 = vshll.u32 %v3203, 16
        %v3205 = vadd.s32 %v3204, %v3202
        %s3206 = vtos %v3205
        %s3207 = scalar_select %p3190, %s3206, %s3182
        %vm3208 = vcmp.eq.s32.totalorder %v1640, 3
        %s3209 = scalar_select %p3190, 1, 0
        %v3210 = vstv %s3209
        %vm3211 = vcmp.eq.s32.totalorder %v3210, 1
        %vm3212 = vmand %vm3208, %vm3211
        %v3213 = vstv %s3207
        %v3214 = vsel %vm3212, %v3213, %v3189
        %p3215 = scmp.gt.s32.totalorder %s3071, 2
        %vm3216 = vcmp.eq.s32.totalorder %v1640, %v3213
        %v3217 = vsel %vm3216, %v2887, 0
        %v3218 = vsel %vm1111, %v3217, 0
        %v3219 = vand.u32 %v3218, 65535
        %v3220 = vshrl.u32 %v3218, 16
        %v3221 = vcvt.s32.f32 %v3219
        %v3222 = vcvt.s32.f32 %v3220
        %3223 = vadd.xlane.f32.xlu0 %v3221
        %v3224 = vpop.xlane.xlu0 %3223
        %3225 = vadd.xlane.f32.xlu0 %v3222
        %v3226 = vpop.xlane.xlu0 %3225
        %v3227 = vcvt.f32.s32 %v3224
        %v3228 = vcvt.f32.s32 %v3226
        %v3229 = vshll.u32 %v3228, 16
        %v3230 = vadd.s32 %v3229, %v3227
        %s3231 = vtos %v3230
        %s3232 = scalar_select %p3215, %s3231, %s3207
        %vm3233 = vcmp.eq.s32.totalorder %v1640, 2
        %s3234 = scalar_select %p3215, 1, 0
        %v3235 = vstv %s3234
        %vm3236 = vcmp.eq.s32.totalorder %v3235, 1
        %vm3237 = vmand %vm3233, %vm3236
        %v3238 = vstv %s3232
        %v3239 = vsel %vm3237, %v3238, %v3214
        %p3240 = scmp.gt.s32.totalorder %s3071, 1
        %vm3241 = vcmp.eq.s32.totalorder %v1640, %v3238
        %v3242 = vsel %vm3241, %v2848, 0
        %v3243 = vsel %vm1111, %v3242, 0
        %v3244 = vand.u32 %v3243, 65535
        %v3245 = vshrl.u32 %v3243, 16
        %v3246 = vcvt.s32.f32 %v3244
        %v3247 = vcvt.s32.f32 %v3245
        %3248 = vadd.xlane.f32.xlu0 %v3246
        %v3249 = vpop.xlane.xlu0 %3248
        %3250 = vadd.xlane.f32.xlu0 %v3247
        %v3251 = vpop.xlane.xlu0 %3250
        %v3252 = vcvt.f32.s32 %v3249
        %v3253 = vcvt.f32.s32 %v3251
        %v3254 = vshll.u32 %v3253, 16
        %v3255 = vadd.s32 %v3254, %v3252
        %s3256 = vtos %v3255
        %s3257 = scalar_select %p3240, %s3256, %s3232
        %vm3258 = vcmp.eq.s32.totalorder %v1640, 1
        %s3259 = scalar_select %p3240, 1, 0
        %v3260 = vstv %s3259
        %vm3261 = vcmp.eq.s32.totalorder %v3260, 1
        %vm3262 = vmand %vm3258, %vm3261
        %v3263 = vstv %s3257
        %v3264 = vsel %vm3262, %v3263, %v3239
        %p3265 = scmp.gt.s32.totalorder %s3071, 0
        %vm3266 = vcmp.eq.s32.totalorder %v1640, %v3263
        %v3267 = vsel %vm3266, %v2811, 0
        %v3268 = vsel %vm1111, %v3267, 0
        %v3269 = vand.u32 %v3268, 65535
        %v3270 = vshrl.u32 %v3268, 16
        %v3271 = vcvt.s32.f32 %v3269
        %v3272 = vcvt.s32.f32 %v3270
        %3273 = vadd.xlane.f32.xlu0 %v3271
        %v3274 = vpop.xlane.xlu0 %3273
        %3275 = vadd.xlane.f32.xlu0 %v3272
        %v3276 = vpop.xlane.xlu0 %3275
        %v3277 = vcvt.f32.s32 %v3274
        %v3278 = vcvt.f32.s32 %v3276
        %v3279 = vshll.u32 %v3278, 16
        %v3280 = vadd.s32 %v3279, %v3277
        %s3281 = vtos %v3280
        %s3282 = scalar_select %p3265, %s3281, %s3257
        %vm3283 = vcmp.eq.s32.totalorder %v1640, 0
        %s3284 = scalar_select %p3265, 1, 0
        %v3285 = vstv %s3284
        %vm3286 = vcmp.eq.s32.totalorder %v3285, 1
        %vm3287 = vmand %vm3283, %vm3286
        %v3288 = vstv %s3282
        %v3289 = vsel %vm3287, %v3288, %v3264
        %vm3290 = vcmask 57344
        %3291 = vst.msk [vmem:[%s908] sm:$0x1] %vm3290, %v3289
        %s3292 = sand.u32 %s596, 1
        %s3293 = scalar_lea.sflag [#allocation7], %s3292
        %s3294 = sand.u32 %s596, 1
        %s3295 = scalar_lea.vmem [#allocation20], %s3294
        // Predicated region
        $region157: #{tpu_custom_call.1} parent=119 // pred_check
          %p3296 = pneg %p606
        $region158: #{tpu_custom_call.1} parent=119 // pred_check_branch
          %3298 = sbr.rel (%p3296) target = $region160
        $region159: #{tpu_custom_call.1} parent=119 // pred_region
          %s3300 = ssub.s32 16, 16
          %3301 = vsyncadd %s3293, %s3300
          %s3302 = smul.addr %s53, 16
          %s3303 = scalar_lea.hbm %s26, %s3302
          %s3305 = sshll.u32 %s3295, 4
          %s3306 = int_to_ptr.vmem [resolvable:$true] %s3305
          %3308 = dma.vmem_to_hbm [thread:$0]  %s3306, 16, %s3303, %s3293
        $region160: #{tpu_custom_call.1} parent=119 // pred_fallthru
          _
      $region120: #{tpu_custom_call.1} parent=5 // pred_fallthru
        _
      %p3309 = scmp.le.s32.totalorder 2, %s48
      // Predicated region
      $region161: #{tpu_custom_call.1} parent=5 // pred_check
        %p3310 = pneg %p3309
      $region162: #{tpu_custom_call.1} parent=5 // pred_check_branch
        %3312 = sbr.rel (%p3310) target = $region164
      $region163: #{tpu_custom_call.1} parent=5 // pred_region
        %s3313 = ssub.s32 %s48, 2
        // Predicated region
        $region165: #{tpu_custom_call.1} parent=163 // pred_check
          %p3314 = pneg %p612
        $region166: #{tpu_custom_call.1} parent=163 // pred_check_branch
          %3316 = sbr.rel (%p3314) target = $region168
        $region167: #{tpu_custom_call.1} parent=163 // pred_region
          %s3317 = sand.u32 %s597, 1
          %s3318 = scalar_lea.sflag [#allocation7], %s3317
          %s3319 = sand.u32 %s597, 1
          %s3320 = scalar_lea.vmem [#allocation20], %s3319
          %3321 = dma.done %s3318, 16
        $region168: #{tpu_custom_call.1} parent=163 // pred_fallthru
          _
      $region164: #{tpu_custom_call.1} parent=5 // pred_fallthru
        _
    $region6: #{tpu_custom_call.1} parent=1 // loop_footer
      %s52 = sadd.s32 1, %s48
    $region7: #{tpu_custom_call.1} parent=1 // loop_footer_branch
      %47 = sbr.rel target = $region3
    $region8: #{tpu_custom_call.1} parent=1 // loop_exit
      _
    %3322 = vsyncpa [#allocation6], 1
    %s3323 = scalar_lea.sflag [#allocation6], 1
    %3324 = vsyncpa %s3323, 1
    %3325 = vsyncpa [#allocation9], 1
    %s3326 = scalar_lea.sflag [#allocation9], 1
    %3327 = vsyncpa %s3326, 1
    %3328 = vsyncpa [#allocation12], 1
    %3329 = vsyncpa [#allocation15], 1
    %3330 = vsyncpa [#allocation18], 1
    %3331 = vsyncpa [#allocation7], 1
    %s3332 = scalar_lea.sflag [#allocation7], 1
    %3333 = vsyncpa %s3332, 1

</llo_original>
